<compile_context>
chip_gen: v5e
topology: v5e:2x2
jax: 0.10.0
libtpu: 0.0.40
codegen_flags: <defaults>
</compile_context>

<pallas_src>
import functools

import jax
import jax.numpy as jnp
from jax import lax
from jax.experimental import pallas as pl
from jax.experimental.pallas import tpu as pltpu

EPS = 1e-5


# ------------------------------------------------------------------ kernel
def _resblock_kernel(x_ref, w1_ref, w2_ref, o_ref, *, C, H, W, NB, use_mxu):
    HW = H * W
    inv_hw = 1.0 / float(HW)

    # ---- reflection boundary masks, hoisted: built once, reused everywhere
    pos = lax.broadcasted_iota(jnp.int32, (1, HW), 1)
    colm = pos % W
    col0 = colm == 0                 # first image column
    colL = colm == W - 1             # last image column
    row0 = pos < W                   # first image row
    rowL = pos >= HW - W             # last image row

    def conv3x3(z, w_ref):
        """3x3 conv with ReflectionPad2d(1).  z: (C, HW) f32 -> (C, HW) f32."""
        # Row-shifted source slabs: flat roll by +-W (XLU), boundary rows
        # replaced by the reflected row via the hoisted masks.
        r_dn = pltpu.roll(z, W, axis=1)        # value at row i-1 (wrapped)
        r_up = pltpu.roll(z, HW - W, axis=1)   # value at row i+1 (wrapped)
        rows = (
            jnp.where(row0, r_up, r_dn),       # dy=0: row i-1, reflect -1 -> 1
            z,                                 # dy=1: row i
            jnp.where(rowL, r_dn, r_up),       # dy=2: row i+1, reflect H -> H-2
        )
        acc = jnp.zeros((C, HW), jnp.float32)
        for dy in range(3):
            zr = rows[dy]
            c_dn = pltpu.roll(zr, 1, axis=1)       # value at col j-1 (wrapped)
            c_up = pltpu.roll(zr, HW - 1, axis=1)  # value at col j+1 (wrapped)
            cols = (
                jnp.where(col0, c_up, c_dn),       # dx=0: col j-1, reflect -1 -> 1
                zr,                                # dx=1: col j
                jnp.where(colL, c_dn, c_up),       # dx=2: col j+1, reflect W -> W-2
            )
            for dx in range(3):
                k = dy * 3 + dx                    # matches weight repack order
                patch = cols[dx]
                wk = w_ref[k].astype(jnp.float32)  # (Cout, Cin)
                if use_mxu:
                    # accumulating MXU matmul; patch consumed immediately
                    acc = acc + jnp.dot(wk, patch,
                                        preferred_element_type=jnp.float32)
                else:
                    # tiny C (< 16): exact-f32 VPU multiply-add; the
                    # (C, C, HW) intermediate is bounded by the C<16 guard.
                    acc = acc + jnp.sum(wk[:, :, None] * patch[None, :, :],
                                        axis=1)
        return acc

    def inorm(z):
        # two-pass variance (avoids E[x^2]-E[x]^2 cancellation)
        mean = jnp.sum(z, axis=1, keepdims=True) * inv_hw
        zc = z - mean
        var = jnp.sum(zc * zc, axis=1, keepdims=True) * inv_hw
        return zc * lax.rsqrt(var + EPS)

    for n in range(NB):  # static unroll over the samples in this block
        x = x_ref[n].astype(jnp.float32)                    # (C, HW) lane-dense
        h = jnp.maximum(inorm(conv3x3(x, w1_ref)), 0.0)     # ReLU(IN(conv1))
        y = inorm(conv3x3(h, w2_ref))                       # IN(conv2)
        o_ref[n] = (x + y).astype(o_ref.dtype)


# ----------------------------------------------------------------- wrapper
def residual_block(x, w1, b1, w2, b2):
    """x: (N, C, H, W); w*: (C, C, 3, 3) PyTorch OIHW; b*: (C,).

    The biases are accepted for API parity with the PyTorch module but are
    not read: a per-channel constant is exactly cancelled by the following
    affine-less InstanceNorm.
    """
    del b1, b2
    N, C, H, W = x.shape
    HW = H * W
    dt = x.dtype
    use_mxu = C >= 16          # MXU matmul path for realistic channel counts

    # Samples per grid step: amortize the fixed per-step overhead for small
    # problems (each step also gets fuller DMA blocks).
    if use_mxu:
        NB = 1
    else:
        NB = 1
        per_sample = C * HW * 4
        for d in range(N, 0, -1):
            if N % d == 0 and d * per_sample <= (1 << 21):  # <= 2 MiB input/step
                NB = d
                break

    def repack(w):   # (O, I, 3, 3) -> (9, O, I), tap index k = dy*3 + dx
        return jnp.transpose(w, (2, 3, 0, 1)).reshape(9, C, C).astype(jnp.float32)

    sample_spec = pl.BlockSpec((NB, C, HW), lambda n: (n, 0, 0))  # lane-dense
    w_spec = pl.BlockSpec((9, C, C), lambda n: (0, 0, 0))

    # Scoped-VMEM budget from the per-step working set (never above the v7x
    # physical 64 MiB; never below the 32 MiB default so small cases are safe).
    itemsize = jnp.dtype(dt).itemsize
    slab_f32 = NB * C * HW * 4
    est = (2 * 2 * NB * C * HW * itemsize     # double-buffered in/out blocks
           + 2 * 2 * 9 * C * C * 4            # double-buffered packed weights
           + 12 * slab_f32                    # in-kernel f32 working slabs
           + (1 << 20))                       # headroom
    vmem_limit = int(min(64 * 2 ** 20, max(32 * 2 ** 20, est)))

    kernel = functools.partial(_resblock_kernel, C=C, H=H, W=W, NB=NB,
                               use_mxu=use_mxu)

    out_flat = pl.pallas_call(
        kernel,
        out_shape=jax.ShapeDtypeStruct((N, C, HW), dt),
        grid=(N // NB,),
        in_specs=[sample_spec, w_spec, w_spec],
        out_specs=sample_spec,
        compiler_params=pltpu.CompilerParams(
            dimension_semantics=("parallel",),
            vmem_limit_bytes=vmem_limit),
    )(
        x.reshape(N, C, HW),   # free XLA reshape -> lane-dense last dim
        repack(w1),
        repack(w2),
    )
    return out_flat.reshape(N, C, H, W)


# --------------------------------------------------------- pure-JAX reference
def _reflect_pad(x):
    return jnp.pad(x, ((0, 0), (0, 0), (1, 1), (1, 1)), mode="reflect")


def _reference(x, w1, b1, w2, b2):
    def conv(z, w, b):
        zp = _reflect_pad(z)
        out = lax.conv_general_dilated(
            zp, w, window_strides=(1, 1), padding="VALID",
            dimension_numbers=("NCHW", "OIHW", "NCHW"))
        return out + b[None, :, None, None]

    def inorm(z):
        m = jnp.mean(z, axis=(2, 3), keepdims=True)
        v = jnp.mean(jnp.square(z - m), axis=(2, 3), keepdims=True)
        return (z - m) / jnp.sqrt(v + EPS)

    h = jax.nn.relu(inorm(conv(x, w1, b1)))
    return x + inorm(conv(h, w2, b2))


if __name__ == "__main__":
    N, C, H, W = 2, 4, 16, 16
    key = jax.random.PRNGKey(0)
    kx, kw1, kb1, kw2, kb2 = jax.random.split(key, 5)
    bound = 1.0 / (C * 9) ** 0.5  # PyTorch Conv2d default uniform bound

    x = jax.random.normal(kx, (N, C, H, W), jnp.float32)
    w1 = jax.random.uniform(kw1, (C, C, 3, 3), jnp.float32, -bound, bound)
    b1 = jax.random.uniform(kb1, (C,), jnp.float32, -bound, bound)
    w2 = jax.random.uniform(kw2, (C, C, 3, 3), jnp.float32, -bound, bound)
    b2 = jax.random.uniform(kb2, (C,), jnp.float32, -bound, bound)

    out = jax.jit(residual_block)(x, w1, b1, w2, b2)
    out = jax.block_until_ready(out)

    ref = _reference(x, w1, b1, w2, b2)
    assert out.shape == x.shape and out.dtype == x.dtype
    err = float(jnp.max(jnp.abs(out - ref)))
    assert jnp.allclose(out, ref, atol=1e-4, rtol=1e-4), f"max abs err = {err}"
    print("KERNEL_OK")
</pallas_src>

<mosaic_0001>
module attributes {stable_mosaic.version = 11 : i64} {
  func.func @_resblock_kernel(%arg0: i32, %arg1: memref<2x4x256xf32, #tpu.memory_space<vmem>>, %arg2: memref<9x4x4xf32, #tpu.memory_space<vmem>>, %arg3: memref<9x4x4xf32, #tpu.memory_space<vmem>>, %arg4: memref<2x4x256xf32, #tpu.memory_space<vmem>>) attributes {dimension_semantics = [#tpu.dimension_semantics<parallel>], iteration_bounds = array<i64: 1>, scalar_prefetch = 0 : i64, scratch_operands = 0 : i64, tpu.core_type = #tpu.core_type<tc>, window_params = [{transform_indices = @transform_0, window_bounds = array<i64: 2, 4, 256>}, {pipeline_mode = #tpu.pipeline_mode<synchronous>, transform_indices = @transform_1, window_bounds = array<i64: 9, 4, 4>}, {pipeline_mode = #tpu.pipeline_mode<synchronous>, transform_indices = @transform_2, window_bounds = array<i64: 9, 4, 4>}, {transform_indices = @transform_3, window_bounds = array<i64: 2, 4, 256>}]} {
    %0 = tpu.iota {dimensions = array<i32: 1>} : vector<1x256xi32>
    %c16_i32 = arith.constant 16 : i32
    %c0_i32 = arith.constant 0 : i32
    %1 = arith.cmpi eq, %c16_i32, %c0_i32 : i32
    %c1_i32 = arith.constant 1 : i32
    %2 = arith.select %1, %c1_i32, %c16_i32 : i32
    %3 = vector.broadcast %2 : i32 to vector<1x256xi32>
    %4 = arith.remsi %0, %3 : vector<1x256xi32>
    %c0_i32_0 = arith.constant 0 : i32
    %5 = vector.broadcast %c0_i32_0 : i32 to vector<1x256xi32>
    %6 = arith.cmpi ne, %4, %5 : vector<1x256xi32>
    %c0_i32_1 = arith.constant 0 : i32
    %7 = vector.broadcast %c0_i32_1 : i32 to vector<1x256xi32>
    %8 = arith.cmpi slt, %4, %7 : vector<1x256xi32>
    %c0_i32_2 = arith.constant 0 : i32
    %9 = arith.cmpi slt, %2, %c0_i32_2 : i32
    %10 = vector.broadcast %9 : i1 to vector<1x256xi1>
    %11 = vector.broadcast %10 : vector<1x256xi1> to vector<1x256xi1>
    %12 = arith.xori %8, %11 : vector<1x256xi1>
    %13 = arith.andi %12, %6 : vector<1x256xi1>
    %14 = vector.broadcast %2 : i32 to vector<1x256xi32>
    %15 = arith.addi %4, %14 : vector<1x256xi32>
    %16 = arith.select %13, %15, %4 : vector<1x256xi1>, vector<1x256xi32>
    %c0_i32_3 = arith.constant 0 : i32
    %17 = vector.broadcast %c0_i32_3 : i32 to vector<1x256xi32>
    %18 = arith.cmpi eq, %16, %17 : vector<1x256xi32>
    %c15_i32 = arith.constant 15 : i32
    %19 = vector.broadcast %c15_i32 : i32 to vector<1x256xi32>
    %20 = arith.cmpi eq, %16, %19 : vector<1x256xi32>
    %c16_i32_4 = arith.constant 16 : i32
    %21 = vector.broadcast %c16_i32_4 : i32 to vector<1x256xi32>
    %22 = arith.cmpi slt, %0, %21 : vector<1x256xi32>
    %c240_i32 = arith.constant 240 : i32
    %23 = vector.broadcast %c240_i32 : i32 to vector<1x256xi32>
    %24 = arith.cmpi sge, %0, %23 : vector<1x256xi32>
    %c0 = arith.constant 0 : index
    %c0_5 = arith.constant 0 : index
    %c0_6 = arith.constant 0 : index
    %25 = vector.load %arg1[%c0, %c0_5, %c0_6] : memref<2x4x256xf32, #tpu.memory_space<vmem>>, vector<1x4x256xf32>
    %26 = vector.shape_cast %25 : vector<1x4x256xf32> to vector<4x256xf32>
    %c16_i32_7 = arith.constant 16 : i32
    %27 = tpu.dynamic_rotate %26 by %c16_i32_7 dim 1 : vector<4x256xf32>, i32 -> vector<4x256xf32>
    %c240_i32_8 = arith.constant 240 : i32
    %28 = tpu.dynamic_rotate %26 by %c240_i32_8 dim 1 : vector<4x256xf32>, i32 -> vector<4x256xf32>
    %29 = vector.shape_cast %22 : vector<1x256xi1> to vector<1x256xi1>
    %30 = vector.broadcast %29 : vector<1x256xi1> to vector<4x256xi1>
    %31 = arith.select %30, %28, %27 : vector<4x256xi1>, vector<4x256xf32>
    %32 = vector.shape_cast %24 : vector<1x256xi1> to vector<1x256xi1>
    %33 = vector.broadcast %32 : vector<1x256xi1> to vector<4x256xi1>
    %34 = arith.select %33, %27, %28 : vector<4x256xi1>, vector<4x256xf32>
    %cst = arith.constant 0.000000e+00 : f32
    %35 = vector.broadcast %cst : f32 to vector<4x256xf32>
    %c1_i32_9 = arith.constant 1 : i32
    %36 = tpu.dynamic_rotate %31 by %c1_i32_9 dim 1 : vector<4x256xf32>, i32 -> vector<4x256xf32>
    %c255_i32 = arith.constant 255 : i32
    %37 = tpu.dynamic_rotate %31 by %c255_i32 dim 1 : vector<4x256xf32>, i32 -> vector<4x256xf32>
    %38 = vector.shape_cast %18 : vector<1x256xi1> to vector<1x256xi1>
    %39 = vector.broadcast %38 : vector<1x256xi1> to vector<4x256xi1>
    %40 = arith.select %39, %37, %36 : vector<4x256xi1>, vector<4x256xf32>
    %41 = vector.shape_cast %20 : vector<1x256xi1> to vector<1x256xi1>
    %42 = vector.broadcast %41 : vector<1x256xi1> to vector<4x256xi1>
    %43 = arith.select %42, %36, %37 : vector<4x256xi1>, vector<4x256xf32>
    %c0_10 = arith.constant 0 : index
    %c0_11 = arith.constant 0 : index
    %c0_12 = arith.constant 0 : index
    %44 = vector.load %arg2[%c0_10, %c0_11, %c0_12] : memref<9x4x4xf32, #tpu.memory_space<vmem>>, vector<1x4x4xf32>
    %45 = vector.shape_cast %44 : vector<1x4x4xf32> to vector<4x4xf32>
    %46 = vector.shape_cast %45 : vector<4x4xf32> to vector<4x4x1xf32>
    %47 = vector.shape_cast %40 : vector<4x256xf32> to vector<1x4x256xf32>
    %48 = vector.broadcast %46 : vector<4x4x1xf32> to vector<4x4x256xf32>
    %49 = vector.broadcast %47 : vector<1x4x256xf32> to vector<4x4x256xf32>
    %50 = arith.mulf %48, %49 : vector<4x4x256xf32>
    %cst_13 = arith.constant dense<0.000000e+00> : vector<4x256xf32>
    %51 = vector.multi_reduction <add>, %50, %cst_13 [1] : vector<4x4x256xf32> to vector<4x256xf32>
    %52 = arith.addf %35, %51 : vector<4x256xf32>
    %c1 = arith.constant 1 : index
    %c0_14 = arith.constant 0 : index
    %c0_15 = arith.constant 0 : index
    %53 = vector.load %arg2[%c1, %c0_14, %c0_15] : memref<9x4x4xf32, #tpu.memory_space<vmem>>, vector<1x4x4xf32>
    %54 = vector.shape_cast %53 : vector<1x4x4xf32> to vector<4x4xf32>
    %55 = vector.shape_cast %54 : vector<4x4xf32> to vector<4x4x1xf32>
    %56 = vector.shape_cast %31 : vector<4x256xf32> to vector<1x4x256xf32>
    %57 = vector.broadcast %55 : vector<4x4x1xf32> to vector<4x4x256xf32>
    %58 = vector.broadcast %56 : vector<1x4x256xf32> to vector<4x4x256xf32>
    %59 = arith.mulf %57, %58 : vector<4x4x256xf32>
    %cst_16 = arith.constant dense<0.000000e+00> : vector<4x256xf32>
    %60 = vector.multi_reduction <add>, %59, %cst_16 [1] : vector<4x4x256xf32> to vector<4x256xf32>
    %61 = arith.addf %52, %60 : vector<4x256xf32>
    %c2 = arith.constant 2 : index
    %c0_17 = arith.constant 0 : index
    %c0_18 = arith.constant 0 : index
    %62 = vector.load %arg2[%c2, %c0_17, %c0_18] : memref<9x4x4xf32, #tpu.memory_space<vmem>>, vector<1x4x4xf32>
    %63 = vector.shape_cast %62 : vector<1x4x4xf32> to vector<4x4xf32>
    %64 = vector.shape_cast %63 : vector<4x4xf32> to vector<4x4x1xf32>
    %65 = vector.shape_cast %43 : vector<4x256xf32> to vector<1x4x256xf32>
    %66 = vector.broadcast %64 : vector<4x4x1xf32> to vector<4x4x256xf32>
    %67 = vector.broadcast %65 : vector<1x4x256xf32> to vector<4x4x256xf32>
    %68 = arith.mulf %66, %67 : vector<4x4x256xf32>
    %cst_19 = arith.constant dense<0.000000e+00> : vector<4x256xf32>
    %69 = vector.multi_reduction <add>, %68, %cst_19 [1] : vector<4x4x256xf32> to vector<4x256xf32>
    %70 = arith.addf %61, %69 : vector<4x256xf32>
    %c1_i32_20 = arith.constant 1 : i32
    %71 = tpu.dynamic_rotate %26 by %c1_i32_20 dim 1 : vector<4x256xf32>, i32 -> vector<4x256xf32>
    %c255_i32_21 = arith.constant 255 : i32
    %72 = tpu.dynamic_rotate %26 by %c255_i32_21 dim 1 : vector<4x256xf32>, i32 -> vector<4x256xf32>
    %73 = vector.shape_cast %18 : vector<1x256xi1> to vector<1x256xi1>
    %74 = vector.broadcast %73 : vector<1x256xi1> to vector<4x256xi1>
    %75 = arith.select %74, %72, %71 : vector<4x256xi1>, vector<4x256xf32>
    %76 = vector.shape_cast %20 : vector<1x256xi1> to vector<1x256xi1>
    %77 = vector.broadcast %76 : vector<1x256xi1> to vector<4x256xi1>
    %78 = arith.select %77, %71, %72 : vector<4x256xi1>, vector<4x256xf32>
    %c3 = arith.constant 3 : index
    %c0_22 = arith.constant 0 : index
    %c0_23 = arith.constant 0 : index
    %79 = vector.load %arg2[%c3, %c0_22, %c0_23] : memref<9x4x4xf32, #tpu.memory_space<vmem>>, vector<1x4x4xf32>
    %80 = vector.shape_cast %79 : vector<1x4x4xf32> to vector<4x4xf32>
    %81 = vector.shape_cast %80 : vector<4x4xf32> to vector<4x4x1xf32>
    %82 = vector.shape_cast %75 : vector<4x256xf32> to vector<1x4x256xf32>
    %83 = vector.broadcast %81 : vector<4x4x1xf32> to vector<4x4x256xf32>
    %84 = vector.broadcast %82 : vector<1x4x256xf32> to vector<4x4x256xf32>
    %85 = arith.mulf %83, %84 : vector<4x4x256xf32>
    %cst_24 = arith.constant dense<0.000000e+00> : vector<4x256xf32>
    %86 = vector.multi_reduction <add>, %85, %cst_24 [1] : vector<4x4x256xf32> to vector<4x256xf32>
    %87 = arith.addf %70, %86 : vector<4x256xf32>
    %c4 = arith.constant 4 : index
    %c0_25 = arith.constant 0 : index
    %c0_26 = arith.constant 0 : index
    %88 = vector.load %arg2[%c4, %c0_25, %c0_26] : memref<9x4x4xf32, #tpu.memory_space<vmem>>, vector<1x4x4xf32>
    %89 = vector.shape_cast %88 : vector<1x4x4xf32> to vector<4x4xf32>
    %90 = vector.shape_cast %89 : vector<4x4xf32> to vector<4x4x1xf32>
    %91 = vector.shape_cast %26 : vector<4x256xf32> to vector<1x4x256xf32>
    %92 = vector.broadcast %90 : vector<4x4x1xf32> to vector<4x4x256xf32>
    %93 = vector.broadcast %91 : vector<1x4x256xf32> to vector<4x4x256xf32>
    %94 = arith.mulf %92, %93 : vector<4x4x256xf32>
    %cst_27 = arith.constant dense<0.000000e+00> : vector<4x256xf32>
    %95 = vector.multi_reduction <add>, %94, %cst_27 [1] : vector<4x4x256xf32> to vector<4x256xf32>
    %96 = arith.addf %87, %95 : vector<4x256xf32>
    %c5 = arith.constant 5 : index
    %c0_28 = arith.constant 0 : index
    %c0_29 = arith.constant 0 : index
    %97 = vector.load %arg2[%c5, %c0_28, %c0_29] : memref<9x4x4xf32, #tpu.memory_space<vmem>>, vector<1x4x4xf32>
    %98 = vector.shape_cast %97 : vector<1x4x4xf32> to vector<4x4xf32>
    %99 = vector.shape_cast %98 : vector<4x4xf32> to vector<4x4x1xf32>
    %100 = vector.shape_cast %78 : vector<4x256xf32> to vector<1x4x256xf32>
    %101 = vector.broadcast %99 : vector<4x4x1xf32> to vector<4x4x256xf32>
    %102 = vector.broadcast %100 : vector<1x4x256xf32> to vector<4x4x256xf32>
    %103 = arith.mulf %101, %102 : vector<4x4x256xf32>
    %cst_30 = arith.constant dense<0.000000e+00> : vector<4x256xf32>
    %104 = vector.multi_reduction <add>, %103, %cst_30 [1] : vector<4x4x256xf32> to vector<4x256xf32>
    %105 = arith.addf %96, %104 : vector<4x256xf32>
    %c1_i32_31 = arith.constant 1 : i32
    %106 = tpu.dynamic_rotate %34 by %c1_i32_31 dim 1 : vector<4x256xf32>, i32 -> vector<4x256xf32>
    %c255_i32_32 = arith.constant 255 : i32
    %107 = tpu.dynamic_rotate %34 by %c255_i32_32 dim 1 : vector<4x256xf32>, i32 -> vector<4x256xf32>
    %108 = vector.shape_cast %18 : vector<1x256xi1> to vector<1x256xi1>
    %109 = vector.broadcast %108 : vector<1x256xi1> to vector<4x256xi1>
    %110 = arith.select %109, %107, %106 : vector<4x256xi1>, vector<4x256xf32>
    %111 = vector.shape_cast %20 : vector<1x256xi1> to vector<1x256xi1>
    %112 = vector.broadcast %111 : vector<1x256xi1> to vector<4x256xi1>
    %113 = arith.select %112, %106, %107 : vector<4x256xi1>, vector<4x256xf32>
    %c6 = arith.constant 6 : index
    %c0_33 = arith.constant 0 : index
    %c0_34 = arith.constant 0 : index
    %114 = vector.load %arg2[%c6, %c0_33, %c0_34] : memref<9x4x4xf32, #tpu.memory_space<vmem>>, vector<1x4x4xf32>
    %115 = vector.shape_cast %114 : vector<1x4x4xf32> to vector<4x4xf32>
    %116 = vector.shape_cast %115 : vector<4x4xf32> to vector<4x4x1xf32>
    %117 = vector.shape_cast %110 : vector<4x256xf32> to vector<1x4x256xf32>
    %118 = vector.broadcast %116 : vector<4x4x1xf32> to vector<4x4x256xf32>
    %119 = vector.broadcast %117 : vector<1x4x256xf32> to vector<4x4x256xf32>
    %120 = arith.mulf %118, %119 : vector<4x4x256xf32>
    %cst_35 = arith.constant dense<0.000000e+00> : vector<4x256xf32>
    %121 = vector.multi_reduction <add>, %120, %cst_35 [1] : vector<4x4x256xf32> to vector<4x256xf32>
    %122 = arith.addf %105, %121 : vector<4x256xf32>
    %c7 = arith.constant 7 : index
    %c0_36 = arith.constant 0 : index
    %c0_37 = arith.constant 0 : index
    %123 = vector.load %arg2[%c7, %c0_36, %c0_37] : memref<9x4x4xf32, #tpu.memory_space<vmem>>, vector<1x4x4xf32>
    %124 = vector.shape_cast %123 : vector<1x4x4xf32> to vector<4x4xf32>
    %125 = vector.shape_cast %124 : vector<4x4xf32> to vector<4x4x1xf32>
    %126 = vector.shape_cast %34 : vector<4x256xf32> to vector<1x4x256xf32>
    %127 = vector.broadcast %125 : vector<4x4x1xf32> to vector<4x4x256xf32>
    %128 = vector.broadcast %126 : vector<1x4x256xf32> to vector<4x4x256xf32>
    %129 = arith.mulf %127, %128 : vector<4x4x256xf32>
    %cst_38 = arith.constant dense<0.000000e+00> : vector<4x256xf32>
    %130 = vector.multi_reduction <add>, %129, %cst_38 [1] : vector<4x4x256xf32> to vector<4x256xf32>
    %131 = arith.addf %122, %130 : vector<4x256xf32>
    %c8 = arith.constant 8 : index
    %c0_39 = arith.constant 0 : index
    %c0_40 = arith.constant 0 : index
    %132 = vector.load %arg2[%c8, %c0_39, %c0_40] : memref<9x4x4xf32, #tpu.memory_space<vmem>>, vector<1x4x4xf32>
    %133 = vector.shape_cast %132 : vector<1x4x4xf32> to vector<4x4xf32>
    %134 = vector.shape_cast %133 : vector<4x4xf32> to vector<4x4x1xf32>
    %135 = vector.shape_cast %113 : vector<4x256xf32> to vector<1x4x256xf32>
    %136 = vector.broadcast %134 : vector<4x4x1xf32> to vector<4x4x256xf32>
    %137 = vector.broadcast %135 : vector<1x4x256xf32> to vector<4x4x256xf32>
    %138 = arith.mulf %136, %137 : vector<4x4x256xf32>
    %cst_41 = arith.constant dense<0.000000e+00> : vector<4x256xf32>
    %139 = vector.multi_reduction <add>, %138, %cst_41 [1] : vector<4x4x256xf32> to vector<4x256xf32>
    %140 = arith.addf %131, %139 : vector<4x256xf32>
    %cst_42 = arith.constant dense<0.000000e+00> : vector<4xf32>
    %141 = vector.multi_reduction <add>, %140, %cst_42 [1] : vector<4x256xf32> to vector<4xf32>
    %142 = vector.shape_cast %141 : vector<4xf32> to vector<4x1xf32>
    %cst_43 = arith.constant 3.906250e-03 : f32
    %143 = vector.broadcast %cst_43 : f32 to vector<4x1xf32>
    %144 = arith.mulf %142, %143 : vector<4x1xf32>
    %145 = vector.broadcast %144 : vector<4x1xf32> to vector<4x256xf32>
    %146 = arith.subf %140, %145 : vector<4x256xf32>
    %147 = arith.mulf %146, %146 : vector<4x256xf32>
    %cst_44 = arith.constant dense<0.000000e+00> : vector<4xf32>
    %148 = vector.multi_reduction <add>, %147, %cst_44 [1] : vector<4x256xf32> to vector<4xf32>
    %149 = vector.shape_cast %148 : vector<4xf32> to vector<4x1xf32>
    %cst_45 = arith.constant 3.906250e-03 : f32
    %150 = vector.broadcast %cst_45 : f32 to vector<4x1xf32>
    %151 = arith.mulf %149, %150 : vector<4x1xf32>
    %cst_46 = arith.constant 9.99999974E-6 : f32
    %152 = vector.broadcast %cst_46 : f32 to vector<4x1xf32>
    %153 = arith.addf %151, %152 : vector<4x1xf32>
    %154 = math.rsqrt %153 : vector<4x1xf32>
    %155 = vector.broadcast %154 : vector<4x1xf32> to vector<4x256xf32>
    %156 = arith.mulf %146, %155 : vector<4x256xf32>
    %cst_47 = arith.constant 0.000000e+00 : f32
    %157 = vector.broadcast %cst_47 : f32 to vector<4x256xf32>
    %158 = arith.maximumf %156, %157 : vector<4x256xf32>
    %c16_i32_48 = arith.constant 16 : i32
    %159 = tpu.dynamic_rotate %158 by %c16_i32_48 dim 1 : vector<4x256xf32>, i32 -> vector<4x256xf32>
    %c240_i32_49 = arith.constant 240 : i32
    %160 = tpu.dynamic_rotate %158 by %c240_i32_49 dim 1 : vector<4x256xf32>, i32 -> vector<4x256xf32>
    %161 = vector.shape_cast %22 : vector<1x256xi1> to vector<1x256xi1>
    %162 = vector.broadcast %161 : vector<1x256xi1> to vector<4x256xi1>
    %163 = arith.select %162, %160, %159 : vector<4x256xi1>, vector<4x256xf32>
    %164 = vector.shape_cast %24 : vector<1x256xi1> to vector<1x256xi1>
    %165 = vector.broadcast %164 : vector<1x256xi1> to vector<4x256xi1>
    %166 = arith.select %165, %159, %160 : vector<4x256xi1>, vector<4x256xf32>
    %cst_50 = arith.constant 0.000000e+00 : f32
    %167 = vector.broadcast %cst_50 : f32 to vector<4x256xf32>
    %c1_i32_51 = arith.constant 1 : i32
    %168 = tpu.dynamic_rotate %163 by %c1_i32_51 dim 1 : vector<4x256xf32>, i32 -> vector<4x256xf32>
    %c255_i32_52 = arith.constant 255 : i32
    %169 = tpu.dynamic_rotate %163 by %c255_i32_52 dim 1 : vector<4x256xf32>, i32 -> vector<4x256xf32>
    %170 = vector.shape_cast %18 : vector<1x256xi1> to vector<1x256xi1>
    %171 = vector.broadcast %170 : vector<1x256xi1> to vector<4x256xi1>
    %172 = arith.select %171, %169, %168 : vector<4x256xi1>, vector<4x256xf32>
    %173 = vector.shape_cast %20 : vector<1x256xi1> to vector<1x256xi1>
    %174 = vector.broadcast %173 : vector<1x256xi1> to vector<4x256xi1>
    %175 = arith.select %174, %168, %169 : vector<4x256xi1>, vector<4x256xf32>
    %c0_53 = arith.constant 0 : index
    %c0_54 = arith.constant 0 : index
    %c0_55 = arith.constant 0 : index
    %176 = vector.load %arg3[%c0_53, %c0_54, %c0_55] : memref<9x4x4xf32, #tpu.memory_space<vmem>>, vector<1x4x4xf32>
    %177 = vector.shape_cast %176 : vector<1x4x4xf32> to vector<4x4xf32>
    %178 = vector.shape_cast %177 : vector<4x4xf32> to vector<4x4x1xf32>
    %179 = vector.shape_cast %172 : vector<4x256xf32> to vector<1x4x256xf32>
    %180 = vector.broadcast %178 : vector<4x4x1xf32> to vector<4x4x256xf32>
    %181 = vector.broadcast %179 : vector<1x4x256xf32> to vector<4x4x256xf32>
    %182 = arith.mulf %180, %181 : vector<4x4x256xf32>
    %cst_56 = arith.constant dense<0.000000e+00> : vector<4x256xf32>
    %183 = vector.multi_reduction <add>, %182, %cst_56 [1] : vector<4x4x256xf32> to vector<4x256xf32>
    %184 = arith.addf %167, %183 : vector<4x256xf32>
    %c1_57 = arith.constant 1 : index
    %c0_58 = arith.constant 0 : index
    %c0_59 = arith.constant 0 : index
    %185 = vector.load %arg3[%c1_57, %c0_58, %c0_59] : memref<9x4x4xf32, #tpu.memory_space<vmem>>, vector<1x4x4xf32>
    %186 = vector.shape_cast %185 : vector<1x4x4xf32> to vector<4x4xf32>
    %187 = vector.shape_cast %186 : vector<4x4xf32> to vector<4x4x1xf32>
    %188 = vector.shape_cast %163 : vector<4x256xf32> to vector<1x4x256xf32>
    %189 = vector.broadcast %187 : vector<4x4x1xf32> to vector<4x4x256xf32>
    %190 = vector.broadcast %188 : vector<1x4x256xf32> to vector<4x4x256xf32>
    %191 = arith.mulf %189, %190 : vector<4x4x256xf32>
    %cst_60 = arith.constant dense<0.000000e+00> : vector<4x256xf32>
    %192 = vector.multi_reduction <add>, %191, %cst_60 [1] : vector<4x4x256xf32> to vector<4x256xf32>
    %193 = arith.addf %184, %192 : vector<4x256xf32>
    %c2_61 = arith.constant 2 : index
    %c0_62 = arith.constant 0 : index
    %c0_63 = arith.constant 0 : index
    %194 = vector.load %arg3[%c2_61, %c0_62, %c0_63] : memref<9x4x4xf32, #tpu.memory_space<vmem>>, vector<1x4x4xf32>
    %195 = vector.shape_cast %194 : vector<1x4x4xf32> to vector<4x4xf32>
    %196 = vector.shape_cast %195 : vector<4x4xf32> to vector<4x4x1xf32>
    %197 = vector.shape_cast %175 : vector<4x256xf32> to vector<1x4x256xf32>
    %198 = vector.broadcast %196 : vector<4x4x1xf32> to vector<4x4x256xf32>
    %199 = vector.broadcast %197 : vector<1x4x256xf32> to vector<4x4x256xf32>
    %200 = arith.mulf %198, %199 : vector<4x4x256xf32>
    %cst_64 = arith.constant dense<0.000000e+00> : vector<4x256xf32>
    %201 = vector.multi_reduction <add>, %200, %cst_64 [1] : vector<4x4x256xf32> to vector<4x256xf32>
    %202 = arith.addf %193, %201 : vector<4x256xf32>
    %c1_i32_65 = arith.constant 1 : i32
    %203 = tpu.dynamic_rotate %158 by %c1_i32_65 dim 1 : vector<4x256xf32>, i32 -> vector<4x256xf32>
    %c255_i32_66 = arith.constant 255 : i32
    %204 = tpu.dynamic_rotate %158 by %c255_i32_66 dim 1 : vector<4x256xf32>, i32 -> vector<4x256xf32>
    %205 = vector.shape_cast %18 : vector<1x256xi1> to vector<1x256xi1>
    %206 = vector.broadcast %205 : vector<1x256xi1> to vector<4x256xi1>
    %207 = arith.select %206, %204, %203 : vector<4x256xi1>, vector<4x256xf32>
    %208 = vector.shape_cast %20 : vector<1x256xi1> to vector<1x256xi1>
    %209 = vector.broadcast %208 : vector<1x256xi1> to vector<4x256xi1>
    %210 = arith.select %209, %203, %204 : vector<4x256xi1>, vector<4x256xf32>
    %c3_67 = arith.constant 3 : index
    %c0_68 = arith.constant 0 : index
    %c0_69 = arith.constant 0 : index
    %211 = vector.load %arg3[%c3_67, %c0_68, %c0_69] : memref<9x4x4xf32, #tpu.memory_space<vmem>>, vector<1x4x4xf32>
    %212 = vector.shape_cast %211 : vector<1x4x4xf32> to vector<4x4xf32>
    %213 = vector.shape_cast %212 : vector<4x4xf32> to vector<4x4x1xf32>
    %214 = vector.shape_cast %207 : vector<4x256xf32> to vector<1x4x256xf32>
    %215 = vector.broadcast %213 : vector<4x4x1xf32> to vector<4x4x256xf32>
    %216 = vector.broadcast %214 : vector<1x4x256xf32> to vector<4x4x256xf32>
    %217 = arith.mulf %215, %216 : vector<4x4x256xf32>
    %cst_70 = arith.constant dense<0.000000e+00> : vector<4x256xf32>
    %218 = vector.multi_reduction <add>, %217, %cst_70 [1] : vector<4x4x256xf32> to vector<4x256xf32>
    %219 = arith.addf %202, %218 : vector<4x256xf32>
    %c4_71 = arith.constant 4 : index
    %c0_72 = arith.constant 0 : index
    %c0_73 = arith.constant 0 : index
    %220 = vector.load %arg3[%c4_71, %c0_72, %c0_73] : memref<9x4x4xf32, #tpu.memory_space<vmem>>, vector<1x4x4xf32>
    %221 = vector.shape_cast %220 : vector<1x4x4xf32> to vector<4x4xf32>
    %222 = vector.shape_cast %221 : vector<4x4xf32> to vector<4x4x1xf32>
    %223 = vector.shape_cast %158 : vector<4x256xf32> to vector<1x4x256xf32>
    %224 = vector.broadcast %222 : vector<4x4x1xf32> to vector<4x4x256xf32>
    %225 = vector.broadcast %223 : vector<1x4x256xf32> to vector<4x4x256xf32>
    %226 = arith.mulf %224, %225 : vector<4x4x256xf32>
    %cst_74 = arith.constant dense<0.000000e+00> : vector<4x256xf32>
    %227 = vector.multi_reduction <add>, %226, %cst_74 [1] : vector<4x4x256xf32> to vector<4x256xf32>
    %228 = arith.addf %219, %227 : vector<4x256xf32>
    %c5_75 = arith.constant 5 : index
    %c0_76 = arith.constant 0 : index
    %c0_77 = arith.constant 0 : index
    %229 = vector.load %arg3[%c5_75, %c0_76, %c0_77] : memref<9x4x4xf32, #tpu.memory_space<vmem>>, vector<1x4x4xf32>
    %230 = vector.shape_cast %229 : vector<1x4x4xf32> to vector<4x4xf32>
    %231 = vector.shape_cast %230 : vector<4x4xf32> to vector<4x4x1xf32>
    %232 = vector.shape_cast %210 : vector<4x256xf32> to vector<1x4x256xf32>
    %233 = vector.broadcast %231 : vector<4x4x1xf32> to vector<4x4x256xf32>
    %234 = vector.broadcast %232 : vector<1x4x256xf32> to vector<4x4x256xf32>
    %235 = arith.mulf %233, %234 : vector<4x4x256xf32>
    %cst_78 = arith.constant dense<0.000000e+00> : vector<4x256xf32>
    %236 = vector.multi_reduction <add>, %235, %cst_78 [1] : vector<4x4x256xf32> to vector<4x256xf32>
    %237 = arith.addf %228, %236 : vector<4x256xf32>
    %c1_i32_79 = arith.constant 1 : i32
    %238 = tpu.dynamic_rotate %166 by %c1_i32_79 dim 1 : vector<4x256xf32>, i32 -> vector<4x256xf32>
    %c255_i32_80 = arith.constant 255 : i32
    %239 = tpu.dynamic_rotate %166 by %c255_i32_80 dim 1 : vector<4x256xf32>, i32 -> vector<4x256xf32>
    %240 = vector.shape_cast %18 : vector<1x256xi1> to vector<1x256xi1>
    %241 = vector.broadcast %240 : vector<1x256xi1> to vector<4x256xi1>
    %242 = arith.select %241, %239, %238 : vector<4x256xi1>, vector<4x256xf32>
    %243 = vector.shape_cast %20 : vector<1x256xi1> to vector<1x256xi1>
    %244 = vector.broadcast %243 : vector<1x256xi1> to vector<4x256xi1>
    %245 = arith.select %244, %238, %239 : vector<4x256xi1>, vector<4x256xf32>
    %c6_81 = arith.constant 6 : index
    %c0_82 = arith.constant 0 : index
    %c0_83 = arith.constant 0 : index
    %246 = vector.load %arg3[%c6_81, %c0_82, %c0_83] : memref<9x4x4xf32, #tpu.memory_space<vmem>>, vector<1x4x4xf32>
    %247 = vector.shape_cast %246 : vector<1x4x4xf32> to vector<4x4xf32>
    %248 = vector.shape_cast %247 : vector<4x4xf32> to vector<4x4x1xf32>
    %249 = vector.shape_cast %242 : vector<4x256xf32> to vector<1x4x256xf32>
    %250 = vector.broadcast %248 : vector<4x4x1xf32> to vector<4x4x256xf32>
    %251 = vector.broadcast %249 : vector<1x4x256xf32> to vector<4x4x256xf32>
    %252 = arith.mulf %250, %251 : vector<4x4x256xf32>
    %cst_84 = arith.constant dense<0.000000e+00> : vector<4x256xf32>
    %253 = vector.multi_reduction <add>, %252, %cst_84 [1] : vector<4x4x256xf32> to vector<4x256xf32>
    %254 = arith.addf %237, %253 : vector<4x256xf32>
    %c7_85 = arith.constant 7 : index
    %c0_86 = arith.constant 0 : index
    %c0_87 = arith.constant 0 : index
    %255 = vector.load %arg3[%c7_85, %c0_86, %c0_87] : memref<9x4x4xf32, #tpu.memory_space<vmem>>, vector<1x4x4xf32>
    %256 = vector.shape_cast %255 : vector<1x4x4xf32> to vector<4x4xf32>
    %257 = vector.shape_cast %256 : vector<4x4xf32> to vector<4x4x1xf32>
    %258 = vector.shape_cast %166 : vector<4x256xf32> to vector<1x4x256xf32>
    %259 = vector.broadcast %257 : vector<4x4x1xf32> to vector<4x4x256xf32>
    %260 = vector.broadcast %258 : vector<1x4x256xf32> to vector<4x4x256xf32>
    %261 = arith.mulf %259, %260 : vector<4x4x256xf32>
    %cst_88 = arith.constant dense<0.000000e+00> : vector<4x256xf32>
    %262 = vector.multi_reduction <add>, %261, %cst_88 [1] : vector<4x4x256xf32> to vector<4x256xf32>
    %263 = arith.addf %254, %262 : vector<4x256xf32>
    %c8_89 = arith.constant 8 : index
    %c0_90 = arith.constant 0 : index
    %c0_91 = arith.constant 0 : index
    %264 = vector.load %arg3[%c8_89, %c0_90, %c0_91] : memref<9x4x4xf32, #tpu.memory_space<vmem>>, vector<1x4x4xf32>
    %265 = vector.shape_cast %264 : vector<1x4x4xf32> to vector<4x4xf32>
    %266 = vector.shape_cast %265 : vector<4x4xf32> to vector<4x4x1xf32>
    %267 = vector.shape_cast %245 : vector<4x256xf32> to vector<1x4x256xf32>
    %268 = vector.broadcast %266 : vector<4x4x1xf32> to vector<4x4x256xf32>
    %269 = vector.broadcast %267 : vector<1x4x256xf32> to vector<4x4x256xf32>
    %270 = arith.mulf %268, %269 : vector<4x4x256xf32>
    %cst_92 = arith.constant dense<0.000000e+00> : vector<4x256xf32>
    %271 = vector.multi_reduction <add>, %270, %cst_92 [1] : vector<4x4x256xf32> to vector<4x256xf32>
    %272 = arith.addf %263, %271 : vector<4x256xf32>
    %cst_93 = arith.constant dense<0.000000e+00> : vector<4xf32>
    %273 = vector.multi_reduction <add>, %272, %cst_93 [1] : vector<4x256xf32> to vector<4xf32>
    %274 = vector.shape_cast %273 : vector<4xf32> to vector<4x1xf32>
    %cst_94 = arith.constant 3.906250e-03 : f32
    %275 = vector.broadcast %cst_94 : f32 to vector<4x1xf32>
    %276 = arith.mulf %274, %275 : vector<4x1xf32>
    %277 = vector.broadcast %276 : vector<4x1xf32> to vector<4x256xf32>
    %278 = arith.subf %272, %277 : vector<4x256xf32>
    %279 = arith.mulf %278, %278 : vector<4x256xf32>
    %cst_95 = arith.constant dense<0.000000e+00> : vector<4xf32>
    %280 = vector.multi_reduction <add>, %279, %cst_95 [1] : vector<4x256xf32> to vector<4xf32>
    %281 = vector.shape_cast %280 : vector<4xf32> to vector<4x1xf32>
    %cst_96 = arith.constant 3.906250e-03 : f32
    %282 = vector.broadcast %cst_96 : f32 to vector<4x1xf32>
    %283 = arith.mulf %281, %282 : vector<4x1xf32>
    %cst_97 = arith.constant 9.99999974E-6 : f32
    %284 = vector.broadcast %cst_97 : f32 to vector<4x1xf32>
    %285 = arith.addf %283, %284 : vector<4x1xf32>
    %286 = math.rsqrt %285 : vector<4x1xf32>
    %287 = vector.broadcast %286 : vector<4x1xf32> to vector<4x256xf32>
    %288 = arith.mulf %278, %287 : vector<4x256xf32>
    %289 = arith.addf %26, %288 : vector<4x256xf32>
    %c0_98 = arith.constant 0 : index
    %c0_99 = arith.constant 0 : index
    %c0_100 = arith.constant 0 : index
    %290 = vector.load %arg4[%c0_98, %c0_99, %c0_100] : memref<2x4x256xf32, #tpu.memory_space<vmem>>, vector<1x4x256xf32>
    %291 = vector.shape_cast %290 : vector<1x4x256xf32> to vector<4x256xf32>
    %292 = vector.shape_cast %289 : vector<4x256xf32> to vector<1x4x256xf32>
    tpu.vector_store %arg4[%c0_98, %c0_99, %c0_100], %292 {strides = array<i32>} : memref<2x4x256xf32, #tpu.memory_space<vmem>>, vector<1x4x256xf32>,
    %c1_101 = arith.constant 1 : index
    %c0_102 = arith.constant 0 : index
    %c0_103 = arith.constant 0 : index
    %293 = vector.load %arg1[%c1_101, %c0_102, %c0_103] : memref<2x4x256xf32, #tpu.memory_space<vmem>>, vector<1x4x256xf32>
    %294 = vector.shape_cast %293 : vector<1x4x256xf32> to vector<4x256xf32>
    %c16_i32_104 = arith.constant 16 : i32
    %295 = tpu.dynamic_rotate %294 by %c16_i32_104 dim 1 : vector<4x256xf32>, i32 -> vector<4x256xf32>
    %c240_i32_105 = arith.constant 240 : i32
    %296 = tpu.dynamic_rotate %294 by %c240_i32_105 dim 1 : vector<4x256xf32>, i32 -> vector<4x256xf32>
    %297 = vector.shape_cast %22 : vector<1x256xi1> to vector<1x256xi1>
    %298 = vector.broadcast %297 : vector<1x256xi1> to vector<4x256xi1>
    %299 = arith.select %298, %296, %295 : vector<4x256xi1>, vector<4x256xf32>
    %300 = vector.shape_cast %24 : vector<1x256xi1> to vector<1x256xi1>
    %301 = vector.broadcast %300 : vector<1x256xi1> to vector<4x256xi1>
    %302 = arith.select %301, %295, %296 : vector<4x256xi1>, vector<4x256xf32>
    %cst_106 = arith.constant 0.000000e+00 : f32
    %303 = vector.broadcast %cst_106 : f32 to vector<4x256xf32>
    %c1_i32_107 = arith.constant 1 : i32
    %304 = tpu.dynamic_rotate %299 by %c1_i32_107 dim 1 : vector<4x256xf32>, i32 -> vector<4x256xf32>
    %c255_i32_108 = arith.constant 255 : i32
    %305 = tpu.dynamic_rotate %299 by %c255_i32_108 dim 1 : vector<4x256xf32>, i32 -> vector<4x256xf32>
    %306 = vector.shape_cast %18 : vector<1x256xi1> to vector<1x256xi1>
    %307 = vector.broadcast %306 : vector<1x256xi1> to vector<4x256xi1>
    %308 = arith.select %307, %305, %304 : vector<4x256xi1>, vector<4x256xf32>
    %309 = vector.shape_cast %20 : vector<1x256xi1> to vector<1x256xi1>
    %310 = vector.broadcast %309 : vector<1x256xi1> to vector<4x256xi1>
    %311 = arith.select %310, %304, %305 : vector<4x256xi1>, vector<4x256xf32>
    %c0_109 = arith.constant 0 : index
    %c0_110 = arith.constant 0 : index
    %c0_111 = arith.constant 0 : index
    %312 = vector.load %arg2[%c0_109, %c0_110, %c0_111] : memref<9x4x4xf32, #tpu.memory_space<vmem>>, vector<1x4x4xf32>
    %313 = vector.shape_cast %312 : vector<1x4x4xf32> to vector<4x4xf32>
    %314 = vector.shape_cast %313 : vector<4x4xf32> to vector<4x4x1xf32>
    %315 = vector.shape_cast %308 : vector<4x256xf32> to vector<1x4x256xf32>
    %316 = vector.broadcast %314 : vector<4x4x1xf32> to vector<4x4x256xf32>
    %317 = vector.broadcast %315 : vector<1x4x256xf32> to vector<4x4x256xf32>
    %318 = arith.mulf %316, %317 : vector<4x4x256xf32>
    %cst_112 = arith.constant dense<0.000000e+00> : vector<4x256xf32>
    %319 = vector.multi_reduction <add>, %318, %cst_112 [1] : vector<4x4x256xf32> to vector<4x256xf32>
    %320 = arith.addf %303, %319 : vector<4x256xf32>
    %c1_113 = arith.constant 1 : index
    %c0_114 = arith.constant 0 : index
    %c0_115 = arith.constant 0 : index
    %321 = vector.load %arg2[%c1_113, %c0_114, %c0_115] : memref<9x4x4xf32, #tpu.memory_space<vmem>>, vector<1x4x4xf32>
    %322 = vector.shape_cast %321 : vector<1x4x4xf32> to vector<4x4xf32>
    %323 = vector.shape_cast %322 : vector<4x4xf32> to vector<4x4x1xf32>
    %324 = vector.shape_cast %299 : vector<4x256xf32> to vector<1x4x256xf32>
    %325 = vector.broadcast %323 : vector<4x4x1xf32> to vector<4x4x256xf32>
    %326 = vector.broadcast %324 : vector<1x4x256xf32> to vector<4x4x256xf32>
    %327 = arith.mulf %325, %326 : vector<4x4x256xf32>
    %cst_116 = arith.constant dense<0.000000e+00> : vector<4x256xf32>
    %328 = vector.multi_reduction <add>, %327, %cst_116 [1] : vector<4x4x256xf32> to vector<4x256xf32>
    %329 = arith.addf %320, %328 : vector<4x256xf32>
    %c2_117 = arith.constant 2 : index
    %c0_118 = arith.constant 0 : index
    %c0_119 = arith.constant 0 : index
    %330 = vector.load %arg2[%c2_117, %c0_118, %c0_119] : memref<9x4x4xf32, #tpu.memory_space<vmem>>, vector<1x4x4xf32>
    %331 = vector.shape_cast %330 : vector<1x4x4xf32> to vector<4x4xf32>
    %332 = vector.shape_cast %331 : vector<4x4xf32> to vector<4x4x1xf32>
    %333 = vector.shape_cast %311 : vector<4x256xf32> to vector<1x4x256xf32>
    %334 = vector.broadcast %332 : vector<4x4x1xf32> to vector<4x4x256xf32>
    %335 = vector.broadcast %333 : vector<1x4x256xf32> to vector<4x4x256xf32>
    %336 = arith.mulf %334, %335 : vector<4x4x256xf32>
    %cst_120 = arith.constant dense<0.000000e+00> : vector<4x256xf32>
    %337 = vector.multi_reduction <add>, %336, %cst_120 [1] : vector<4x4x256xf32> to vector<4x256xf32>
    %338 = arith.addf %329, %337 : vector<4x256xf32>
    %c1_i32_121 = arith.constant 1 : i32
    %339 = tpu.dynamic_rotate %294 by %c1_i32_121 dim 1 : vector<4x256xf32>, i32 -> vector<4x256xf32>
    %c255_i32_122 = arith.constant 255 : i32
    %340 = tpu.dynamic_rotate %294 by %c255_i32_122 dim 1 : vector<4x256xf32>, i32 -> vector<4x256xf32>
    %341 = vector.shape_cast %18 : vector<1x256xi1> to vector<1x256xi1>
    %342 = vector.broadcast %341 : vector<1x256xi1> to vector<4x256xi1>
    %343 = arith.select %342, %340, %339 : vector<4x256xi1>, vector<4x256xf32>
    %344 = vector.shape_cast %20 : vector<1x256xi1> to vector<1x256xi1>
    %345 = vector.broadcast %344 : vector<1x256xi1> to vector<4x256xi1>
    %346 = arith.select %345, %339, %340 : vector<4x256xi1>, vector<4x256xf32>
    %c3_123 = arith.constant 3 : index
    %c0_124 = arith.constant 0 : index
    %c0_125 = arith.constant 0 : index
    %347 = vector.load %arg2[%c3_123, %c0_124, %c0_125] : memref<9x4x4xf32, #tpu.memory_space<vmem>>, vector<1x4x4xf32>
    %348 = vector.shape_cast %347 : vector<1x4x4xf32> to vector<4x4xf32>
    %349 = vector.shape_cast %348 : vector<4x4xf32> to vector<4x4x1xf32>
    %350 = vector.shape_cast %343 : vector<4x256xf32> to vector<1x4x256xf32>
    %351 = vector.broadcast %349 : vector<4x4x1xf32> to vector<4x4x256xf32>
    %352 = vector.broadcast %350 : vector<1x4x256xf32> to vector<4x4x256xf32>
    %353 = arith.mulf %351, %352 : vector<4x4x256xf32>
    %cst_126 = arith.constant dense<0.000000e+00> : vector<4x256xf32>
    %354 = vector.multi_reduction <add>, %353, %cst_126 [1] : vector<4x4x256xf32> to vector<4x256xf32>
    %355 = arith.addf %338, %354 : vector<4x256xf32>
    %c4_127 = arith.constant 4 : index
    %c0_128 = arith.constant 0 : index
    %c0_129 = arith.constant 0 : index
    %356 = vector.load %arg2[%c4_127, %c0_128, %c0_129] : memref<9x4x4xf32, #tpu.memory_space<vmem>>, vector<1x4x4xf32>
    %357 = vector.shape_cast %356 : vector<1x4x4xf32> to vector<4x4xf32>
    %358 = vector.shape_cast %357 : vector<4x4xf32> to vector<4x4x1xf32>
    %359 = vector.shape_cast %294 : vector<4x256xf32> to vector<1x4x256xf32>
    %360 = vector.broadcast %358 : vector<4x4x1xf32> to vector<4x4x256xf32>
    %361 = vector.broadcast %359 : vector<1x4x256xf32> to vector<4x4x256xf32>
    %362 = arith.mulf %360, %361 : vector<4x4x256xf32>
    %cst_130 = arith.constant dense<0.000000e+00> : vector<4x256xf32>
    %363 = vector.multi_reduction <add>, %362, %cst_130 [1] : vector<4x4x256xf32> to vector<4x256xf32>
    %364 = arith.addf %355, %363 : vector<4x256xf32>
    %c5_131 = arith.constant 5 : index
    %c0_132 = arith.constant 0 : index
    %c0_133 = arith.constant 0 : index
    %365 = vector.load %arg2[%c5_131, %c0_132, %c0_133] : memref<9x4x4xf32, #tpu.memory_space<vmem>>, vector<1x4x4xf32>
    %366 = vector.shape_cast %365 : vector<1x4x4xf32> to vector<4x4xf32>
    %367 = vector.shape_cast %366 : vector<4x4xf32> to vector<4x4x1xf32>
    %368 = vector.shape_cast %346 : vector<4x256xf32> to vector<1x4x256xf32>
    %369 = vector.broadcast %367 : vector<4x4x1xf32> to vector<4x4x256xf32>
    %370 = vector.broadcast %368 : vector<1x4x256xf32> to vector<4x4x256xf32>
    %371 = arith.mulf %369, %370 : vector<4x4x256xf32>
    %cst_134 = arith.constant dense<0.000000e+00> : vector<4x256xf32>
    %372 = vector.multi_reduction <add>, %371, %cst_134 [1] : vector<4x4x256xf32> to vector<4x256xf32>
    %373 = arith.addf %364, %372 : vector<4x256xf32>
    %c1_i32_135 = arith.constant 1 : i32
    %374 = tpu.dynamic_rotate %302 by %c1_i32_135 dim 1 : vector<4x256xf32>, i32 -> vector<4x256xf32>
    %c255_i32_136 = arith.constant 255 : i32
    %375 = tpu.dynamic_rotate %302 by %c255_i32_136 dim 1 : vector<4x256xf32>, i32 -> vector<4x256xf32>
    %376 = vector.shape_cast %18 : vector<1x256xi1> to vector<1x256xi1>
    %377 = vector.broadcast %376 : vector<1x256xi1> to vector<4x256xi1>
    %378 = arith.select %377, %375, %374 : vector<4x256xi1>, vector<4x256xf32>
    %379 = vector.shape_cast %20 : vector<1x256xi1> to vector<1x256xi1>
    %380 = vector.broadcast %379 : vector<1x256xi1> to vector<4x256xi1>
    %381 = arith.select %380, %374, %375 : vector<4x256xi1>, vector<4x256xf32>
    %c6_137 = arith.constant 6 : index
    %c0_138 = arith.constant 0 : index
    %c0_139 = arith.constant 0 : index
    %382 = vector.load %arg2[%c6_137, %c0_138, %c0_139] : memref<9x4x4xf32, #tpu.memory_space<vmem>>, vector<1x4x4xf32>
    %383 = vector.shape_cast %382 : vector<1x4x4xf32> to vector<4x4xf32>
    %384 = vector.shape_cast %383 : vector<4x4xf32> to vector<4x4x1xf32>
    %385 = vector.shape_cast %378 : vector<4x256xf32> to vector<1x4x256xf32>
    %386 = vector.broadcast %384 : vector<4x4x1xf32> to vector<4x4x256xf32>
    %387 = vector.broadcast %385 : vector<1x4x256xf32> to vector<4x4x256xf32>
    %388 = arith.mulf %386, %387 : vector<4x4x256xf32>
    %cst_140 = arith.constant dense<0.000000e+00> : vector<4x256xf32>
    %389 = vector.multi_reduction <add>, %388, %cst_140 [1] : vector<4x4x256xf32> to vector<4x256xf32>
    %390 = arith.addf %373, %389 : vector<4x256xf32>
    %c7_141 = arith.constant 7 : index
    %c0_142 = arith.constant 0 : index
    %c0_143 = arith.constant 0 : index
    %391 = vector.load %arg2[%c7_141, %c0_142, %c0_143] : memref<9x4x4xf32, #tpu.memory_space<vmem>>, vector<1x4x4xf32>
    %392 = vector.shape_cast %391 : vector<1x4x4xf32> to vector<4x4xf32>
    %393 = vector.shape_cast %392 : vector<4x4xf32> to vector<4x4x1xf32>
    %394 = vector.shape_cast %302 : vector<4x256xf32> to vector<1x4x256xf32>
    %395 = vector.broadcast %393 : vector<4x4x1xf32> to vector<4x4x256xf32>
    %396 = vector.broadcast %394 : vector<1x4x256xf32> to vector<4x4x256xf32>
    %397 = arith.mulf %395, %396 : vector<4x4x256xf32>
    %cst_144 = arith.constant dense<0.000000e+00> : vector<4x256xf32>
    %398 = vector.multi_reduction <add>, %397, %cst_144 [1] : vector<4x4x256xf32> to vector<4x256xf32>
    %399 = arith.addf %390, %398 : vector<4x256xf32>
    %c8_145 = arith.constant 8 : index
    %c0_146 = arith.constant 0 : index
    %c0_147 = arith.constant 0 : index
    %400 = vector.load %arg2[%c8_145, %c0_146, %c0_147] : memref<9x4x4xf32, #tpu.memory_space<vmem>>, vector<1x4x4xf32>
    %401 = vector.shape_cast %400 : vector<1x4x4xf32> to vector<4x4xf32>
    %402 = vector.shape_cast %401 : vector<4x4xf32> to vector<4x4x1xf32>
    %403 = vector.shape_cast %381 : vector<4x256xf32> to vector<1x4x256xf32>
    %404 = vector.broadcast %402 : vector<4x4x1xf32> to vector<4x4x256xf32>
    %405 = vector.broadcast %403 : vector<1x4x256xf32> to vector<4x4x256xf32>
    %406 = arith.mulf %404, %405 : vector<4x4x256xf32>
    %cst_148 = arith.constant dense<0.000000e+00> : vector<4x256xf32>
    %407 = vector.multi_reduction <add>, %406, %cst_148 [1] : vector<4x4x256xf32> to vector<4x256xf32>
    %408 = arith.addf %399, %407 : vector<4x256xf32>
    %cst_149 = arith.constant dense<0.000000e+00> : vector<4xf32>
    %409 = vector.multi_reduction <add>, %408, %cst_149 [1] : vector<4x256xf32> to vector<4xf32>
    %410 = vector.shape_cast %409 : vector<4xf32> to vector<4x1xf32>
    %cst_150 = arith.constant 3.906250e-03 : f32
    %411 = vector.broadcast %cst_150 : f32 to vector<4x1xf32>
    %412 = arith.mulf %410, %411 : vector<4x1xf32>
    %413 = vector.broadcast %412 : vector<4x1xf32> to vector<4x256xf32>
    %414 = arith.subf %408, %413 : vector<4x256xf32>
    %415 = arith.mulf %414, %414 : vector<4x256xf32>
    %cst_151 = arith.constant dense<0.000000e+00> : vector<4xf32>
    %416 = vector.multi_reduction <add>, %415, %cst_151 [1] : vector<4x256xf32> to vector<4xf32>
    %417 = vector.shape_cast %416 : vector<4xf32> to vector<4x1xf32>
    %cst_152 = arith.constant 3.906250e-03 : f32
    %418 = vector.broadcast %cst_152 : f32 to vector<4x1xf32>
    %419 = arith.mulf %417, %418 : vector<4x1xf32>
    %cst_153 = arith.constant 9.99999974E-6 : f32
    %420 = vector.broadcast %cst_153 : f32 to vector<4x1xf32>
    %421 = arith.addf %419, %420 : vector<4x1xf32>
    %422 = math.rsqrt %421 : vector<4x1xf32>
    %423 = vector.broadcast %422 : vector<4x1xf32> to vector<4x256xf32>
    %424 = arith.mulf %414, %423 : vector<4x256xf32>
    %cst_154 = arith.constant 0.000000e+00 : f32
    %425 = vector.broadcast %cst_154 : f32 to vector<4x256xf32>
    %426 = arith.maximumf %424, %425 : vector<4x256xf32>
    %c16_i32_155 = arith.constant 16 : i32
    %427 = tpu.dynamic_rotate %426 by %c16_i32_155 dim 1 : vector<4x256xf32>, i32 -> vector<4x256xf32>
    %c240_i32_156 = arith.constant 240 : i32
    %428 = tpu.dynamic_rotate %426 by %c240_i32_156 dim 1 : vector<4x256xf32>, i32 -> vector<4x256xf32>
    %429 = vector.shape_cast %22 : vector<1x256xi1> to vector<1x256xi1>
    %430 = vector.broadcast %429 : vector<1x256xi1> to vector<4x256xi1>
    %431 = arith.select %430, %428, %427 : vector<4x256xi1>, vector<4x256xf32>
    %432 = vector.shape_cast %24 : vector<1x256xi1> to vector<1x256xi1>
    %433 = vector.broadcast %432 : vector<1x256xi1> to vector<4x256xi1>
    %434 = arith.select %433, %427, %428 : vector<4x256xi1>, vector<4x256xf32>
    %cst_157 = arith.constant 0.000000e+00 : f32
    %435 = vector.broadcast %cst_157 : f32 to vector<4x256xf32>
    %c1_i32_158 = arith.constant 1 : i32
    %436 = tpu.dynamic_rotate %431 by %c1_i32_158 dim 1 : vector<4x256xf32>, i32 -> vector<4x256xf32>
    %c255_i32_159 = arith.constant 255 : i32
    %437 = tpu.dynamic_rotate %431 by %c255_i32_159 dim 1 : vector<4x256xf32>, i32 -> vector<4x256xf32>
    %438 = vector.shape_cast %18 : vector<1x256xi1> to vector<1x256xi1>
    %439 = vector.broadcast %438 : vector<1x256xi1> to vector<4x256xi1>
    %440 = arith.select %439, %437, %436 : vector<4x256xi1>, vector<4x256xf32>
    %441 = vector.shape_cast %20 : vector<1x256xi1> to vector<1x256xi1>
    %442 = vector.broadcast %441 : vector<1x256xi1> to vector<4x256xi1>
    %443 = arith.select %442, %436, %437 : vector<4x256xi1>, vector<4x256xf32>
    %c0_160 = arith.constant 0 : index
    %c0_161 = arith.constant 0 : index
    %c0_162 = arith.constant 0 : index
    %444 = vector.load %arg3[%c0_160, %c0_161, %c0_162] : memref<9x4x4xf32, #tpu.memory_space<vmem>>, vector<1x4x4xf32>
    %445 = vector.shape_cast %444 : vector<1x4x4xf32> to vector<4x4xf32>
    %446 = vector.shape_cast %445 : vector<4x4xf32> to vector<4x4x1xf32>
    %447 = vector.shape_cast %440 : vector<4x256xf32> to vector<1x4x256xf32>
    %448 = vector.broadcast %446 : vector<4x4x1xf32> to vector<4x4x256xf32>
    %449 = vector.broadcast %447 : vector<1x4x256xf32> to vector<4x4x256xf32>
    %450 = arith.mulf %448, %449 : vector<4x4x256xf32>
    %cst_163 = arith.constant dense<0.000000e+00> : vector<4x256xf32>
    %451 = vector.multi_reduction <add>, %450, %cst_163 [1] : vector<4x4x256xf32> to vector<4x256xf32>
    %452 = arith.addf %435, %451 : vector<4x256xf32>
    %c1_164 = arith.constant 1 : index
    %c0_165 = arith.constant 0 : index
    %c0_166 = arith.constant 0 : index
    %453 = vector.load %arg3[%c1_164, %c0_165, %c0_166] : memref<9x4x4xf32, #tpu.memory_space<vmem>>, vector<1x4x4xf32>
    %454 = vector.shape_cast %453 : vector<1x4x4xf32> to vector<4x4xf32>
    %455 = vector.shape_cast %454 : vector<4x4xf32> to vector<4x4x1xf32>
    %456 = vector.shape_cast %431 : vector<4x256xf32> to vector<1x4x256xf32>
    %457 = vector.broadcast %455 : vector<4x4x1xf32> to vector<4x4x256xf32>
    %458 = vector.broadcast %456 : vector<1x4x256xf32> to vector<4x4x256xf32>
    %459 = arith.mulf %457, %458 : vector<4x4x256xf32>
    %cst_167 = arith.constant dense<0.000000e+00> : vector<4x256xf32>
    %460 = vector.multi_reduction <add>, %459, %cst_167 [1] : vector<4x4x256xf32> to vector<4x256xf32>
    %461 = arith.addf %452, %460 : vector<4x256xf32>
    %c2_168 = arith.constant 2 : index
    %c0_169 = arith.constant 0 : index
    %c0_170 = arith.constant 0 : index
    %462 = vector.load %arg3[%c2_168, %c0_169, %c0_170] : memref<9x4x4xf32, #tpu.memory_space<vmem>>, vector<1x4x4xf32>
    %463 = vector.shape_cast %462 : vector<1x4x4xf32> to vector<4x4xf32>
    %464 = vector.shape_cast %463 : vector<4x4xf32> to vector<4x4x1xf32>
    %465 = vector.shape_cast %443 : vector<4x256xf32> to vector<1x4x256xf32>
    %466 = vector.broadcast %464 : vector<4x4x1xf32> to vector<4x4x256xf32>
    %467 = vector.broadcast %465 : vector<1x4x256xf32> to vector<4x4x256xf32>
    %468 = arith.mulf %466, %467 : vector<4x4x256xf32>
    %cst_171 = arith.constant dense<0.000000e+00> : vector<4x256xf32>
    %469 = vector.multi_reduction <add>, %468, %cst_171 [1] : vector<4x4x256xf32> to vector<4x256xf32>
    %470 = arith.addf %461, %469 : vector<4x256xf32>
    %c1_i32_172 = arith.constant 1 : i32
    %471 = tpu.dynamic_rotate %426 by %c1_i32_172 dim 1 : vector<4x256xf32>, i32 -> vector<4x256xf32>
    %c255_i32_173 = arith.constant 255 : i32
    %472 = tpu.dynamic_rotate %426 by %c255_i32_173 dim 1 : vector<4x256xf32>, i32 -> vector<4x256xf32>
    %473 = vector.shape_cast %18 : vector<1x256xi1> to vector<1x256xi1>
    %474 = vector.broadcast %473 : vector<1x256xi1> to vector<4x256xi1>
    %475 = arith.select %474, %472, %471 : vector<4x256xi1>, vector<4x256xf32>
    %476 = vector.shape_cast %20 : vector<1x256xi1> to vector<1x256xi1>
    %477 = vector.broadcast %476 : vector<1x256xi1> to vector<4x256xi1>
    %478 = arith.select %477, %471, %472 : vector<4x256xi1>, vector<4x256xf32>
    %c3_174 = arith.constant 3 : index
    %c0_175 = arith.constant 0 : index
    %c0_176 = arith.constant 0 : index
    %479 = vector.load %arg3[%c3_174, %c0_175, %c0_176] : memref<9x4x4xf32, #tpu.memory_space<vmem>>, vector<1x4x4xf32>
    %480 = vector.shape_cast %479 : vector<1x4x4xf32> to vector<4x4xf32>
    %481 = vector.shape_cast %480 : vector<4x4xf32> to vector<4x4x1xf32>
    %482 = vector.shape_cast %475 : vector<4x256xf32> to vector<1x4x256xf32>
    %483 = vector.broadcast %481 : vector<4x4x1xf32> to vector<4x4x256xf32>
    %484 = vector.broadcast %482 : vector<1x4x256xf32> to vector<4x4x256xf32>
    %485 = arith.mulf %483, %484 : vector<4x4x256xf32>
    %cst_177 = arith.constant dense<0.000000e+00> : vector<4x256xf32>
    %486 = vector.multi_reduction <add>, %485, %cst_177 [1] : vector<4x4x256xf32> to vector<4x256xf32>
    %487 = arith.addf %470, %486 : vector<4x256xf32>
    %c4_178 = arith.constant 4 : index
    %c0_179 = arith.constant 0 : index
    %c0_180 = arith.constant 0 : index
    %488 = vector.load %arg3[%c4_178, %c0_179, %c0_180] : memref<9x4x4xf32, #tpu.memory_space<vmem>>, vector<1x4x4xf32>
    %489 = vector.shape_cast %488 : vector<1x4x4xf32> to vector<4x4xf32>
    %490 = vector.shape_cast %489 : vector<4x4xf32> to vector<4x4x1xf32>
    %491 = vector.shape_cast %426 : vector<4x256xf32> to vector<1x4x256xf32>
    %492 = vector.broadcast %490 : vector<4x4x1xf32> to vector<4x4x256xf32>
    %493 = vector.broadcast %491 : vector<1x4x256xf32> to vector<4x4x256xf32>
    %494 = arith.mulf %492, %493 : vector<4x4x256xf32>
    %cst_181 = arith.constant dense<0.000000e+00> : vector<4x256xf32>
    %495 = vector.multi_reduction <add>, %494, %cst_181 [1] : vector<4x4x256xf32> to vector<4x256xf32>
    %496 = arith.addf %487, %495 : vector<4x256xf32>
    %c5_182 = arith.constant 5 : index
    %c0_183 = arith.constant 0 : index
    %c0_184 = arith.constant 0 : index
    %497 = vector.load %arg3[%c5_182, %c0_183, %c0_184] : memref<9x4x4xf32, #tpu.memory_space<vmem>>, vector<1x4x4xf32>
    %498 = vector.shape_cast %497 : vector<1x4x4xf32> to vector<4x4xf32>
    %499 = vector.shape_cast %498 : vector<4x4xf32> to vector<4x4x1xf32>
    %500 = vector.shape_cast %478 : vector<4x256xf32> to vector<1x4x256xf32>
    %501 = vector.broadcast %499 : vector<4x4x1xf32> to vector<4x4x256xf32>
    %502 = vector.broadcast %500 : vector<1x4x256xf32> to vector<4x4x256xf32>
    %503 = arith.mulf %501, %502 : vector<4x4x256xf32>
    %cst_185 = arith.constant dense<0.000000e+00> : vector<4x256xf32>
    %504 = vector.multi_reduction <add>, %503, %cst_185 [1] : vector<4x4x256xf32> to vector<4x256xf32>
    %505 = arith.addf %496, %504 : vector<4x256xf32>
    %c1_i32_186 = arith.constant 1 : i32
    %506 = tpu.dynamic_rotate %434 by %c1_i32_186 dim 1 : vector<4x256xf32>, i32 -> vector<4x256xf32>
    %c255_i32_187 = arith.constant 255 : i32
    %507 = tpu.dynamic_rotate %434 by %c255_i32_187 dim 1 : vector<4x256xf32>, i32 -> vector<4x256xf32>
    %508 = vector.shape_cast %18 : vector<1x256xi1> to vector<1x256xi1>
    %509 = vector.broadcast %508 : vector<1x256xi1> to vector<4x256xi1>
    %510 = arith.select %509, %507, %506 : vector<4x256xi1>, vector<4x256xf32>
    %511 = vector.shape_cast %20 : vector<1x256xi1> to vector<1x256xi1>
    %512 = vector.broadcast %511 : vector<1x256xi1> to vector<4x256xi1>
    %513 = arith.select %512, %506, %507 : vector<4x256xi1>, vector<4x256xf32>
    %c6_188 = arith.constant 6 : index
    %c0_189 = arith.constant 0 : index
    %c0_190 = arith.constant 0 : index
    %514 = vector.load %arg3[%c6_188, %c0_189, %c0_190] : memref<9x4x4xf32, #tpu.memory_space<vmem>>, vector<1x4x4xf32>
    %515 = vector.shape_cast %514 : vector<1x4x4xf32> to vector<4x4xf32>
    %516 = vector.shape_cast %515 : vector<4x4xf32> to vector<4x4x1xf32>
    %517 = vector.shape_cast %510 : vector<4x256xf32> to vector<1x4x256xf32>
    %518 = vector.broadcast %516 : vector<4x4x1xf32> to vector<4x4x256xf32>
    %519 = vector.broadcast %517 : vector<1x4x256xf32> to vector<4x4x256xf32>
    %520 = arith.mulf %518, %519 : vector<4x4x256xf32>
    %cst_191 = arith.constant dense<0.000000e+00> : vector<4x256xf32>
    %521 = vector.multi_reduction <add>, %520, %cst_191 [1] : vector<4x4x256xf32> to vector<4x256xf32>
    %522 = arith.addf %505, %521 : vector<4x256xf32>
    %c7_192 = arith.constant 7 : index
    %c0_193 = arith.constant 0 : index
    %c0_194 = arith.constant 0 : index
    %523 = vector.load %arg3[%c7_192, %c0_193, %c0_194] : memref<9x4x4xf32, #tpu.memory_space<vmem>>, vector<1x4x4xf32>
    %524 = vector.shape_cast %523 : vector<1x4x4xf32> to vector<4x4xf32>
    %525 = vector.shape_cast %524 : vector<4x4xf32> to vector<4x4x1xf32>
    %526 = vector.shape_cast %434 : vector<4x256xf32> to vector<1x4x256xf32>
    %527 = vector.broadcast %525 : vector<4x4x1xf32> to vector<4x4x256xf32>
    %528 = vector.broadcast %526 : vector<1x4x256xf32> to vector<4x4x256xf32>
    %529 = arith.mulf %527, %528 : vector<4x4x256xf32>
    %cst_195 = arith.constant dense<0.000000e+00> : vector<4x256xf32>
    %530 = vector.multi_reduction <add>, %529, %cst_195 [1] : vector<4x4x256xf32> to vector<4x256xf32>
    %531 = arith.addf %522, %530 : vector<4x256xf32>
    %c8_196 = arith.constant 8 : index
    %c0_197 = arith.constant 0 : index
    %c0_198 = arith.constant 0 : index
    %532 = vector.load %arg3[%c8_196, %c0_197, %c0_198] : memref<9x4x4xf32, #tpu.memory_space<vmem>>, vector<1x4x4xf32>
    %533 = vector.shape_cast %532 : vector<1x4x4xf32> to vector<4x4xf32>
    %534 = vector.shape_cast %533 : vector<4x4xf32> to vector<4x4x1xf32>
    %535 = vector.shape_cast %513 : vector<4x256xf32> to vector<1x4x256xf32>
    %536 = vector.broadcast %534 : vector<4x4x1xf32> to vector<4x4x256xf32>
    %537 = vector.broadcast %535 : vector<1x4x256xf32> to vector<4x4x256xf32>
    %538 = arith.mulf %536, %537 : vector<4x4x256xf32>
    %cst_199 = arith.constant dense<0.000000e+00> : vector<4x256xf32>
    %539 = vector.multi_reduction <add>, %538, %cst_199 [1] : vector<4x4x256xf32> to vector<4x256xf32>
    %540 = arith.addf %531, %539 : vector<4x256xf32>
    %cst_200 = arith.constant dense<0.000000e+00> : vector<4xf32>
    %541 = vector.multi_reduction <add>, %540, %cst_200 [1] : vector<4x256xf32> to vector<4xf32>
    %542 = vector.shape_cast %541 : vector<4xf32> to vector<4x1xf32>
    %cst_201 = arith.constant 3.906250e-03 : f32
    %543 = vector.broadcast %cst_201 : f32 to vector<4x1xf32>
    %544 = arith.mulf %542, %543 : vector<4x1xf32>
    %545 = vector.broadcast %544 : vector<4x1xf32> to vector<4x256xf32>
    %546 = arith.subf %540, %545 : vector<4x256xf32>
    %547 = arith.mulf %546, %546 : vector<4x256xf32>
    %cst_202 = arith.constant dense<0.000000e+00> : vector<4xf32>
    %548 = vector.multi_reduction <add>, %547, %cst_202 [1] : vector<4x256xf32> to vector<4xf32>
    %549 = vector.shape_cast %548 : vector<4xf32> to vector<4x1xf32>
    %cst_203 = arith.constant 3.906250e-03 : f32
    %550 = vector.broadcast %cst_203 : f32 to vector<4x1xf32>
    %551 = arith.mulf %549, %550 : vector<4x1xf32>
    %cst_204 = arith.constant 9.99999974E-6 : f32
    %552 = vector.broadcast %cst_204 : f32 to vector<4x1xf32>
    %553 = arith.addf %551, %552 : vector<4x1xf32>
    %554 = math.rsqrt %553 : vector<4x1xf32>
    %555 = vector.broadcast %554 : vector<4x1xf32> to vector<4x256xf32>
    %556 = arith.mulf %546, %555 : vector<4x256xf32>
    %557 = arith.addf %294, %556 : vector<4x256xf32>
    %c1_205 = arith.constant 1 : index
    %c0_206 = arith.constant 0 : index
    %c0_207 = arith.constant 0 : index
    %558 = vector.load %arg4[%c1_205, %c0_206, %c0_207] : memref<2x4x256xf32, #tpu.memory_space<vmem>>, vector<1x4x256xf32>
    %559 = vector.shape_cast %558 : vector<1x4x256xf32> to vector<4x256xf32>
    %560 = vector.shape_cast %557 : vector<4x256xf32> to vector<1x4x256xf32>
    tpu.vector_store %arg4[%c1_205, %c0_206, %c0_207], %560 {strides = array<i32>} : memref<2x4x256xf32, #tpu.memory_space<vmem>>, vector<1x4x256xf32>,
    return
  }
  func.func @transform_0(%arg0: i32) -> (i32, i32, i32) {
    %c0_i32 = arith.constant 0 : i32
    %c0_i32_0 = arith.constant 0 : i32
    %c0_i32_1 = arith.constant 0 : i32
    return %arg0, %c0_i32, %c0_i32_0 : i32, i32, i32
  }
  func.func @transform_1(%arg0: i32) -> (i32, i32, i32) {
    %c0_i32 = arith.constant 0 : i32
    %c0_i32_0 = arith.constant 0 : i32
    %c0_i32_1 = arith.constant 0 : i32
    %c0_i32_2 = arith.constant 0 : i32
    return %c0_i32, %c0_i32_0, %c0_i32_1 : i32, i32, i32
  }
  func.func @transform_2(%arg0: i32) -> (i32, i32, i32) {
    %c0_i32 = arith.constant 0 : i32
    %c0_i32_0 = arith.constant 0 : i32
    %c0_i32_1 = arith.constant 0 : i32
    %c0_i32_2 = arith.constant 0 : i32
    return %c0_i32, %c0_i32_0, %c0_i32_1 : i32, i32, i32
  }
  func.func @transform_3(%arg0: i32) -> (i32, i32, i32) {
    %c0_i32 = arith.constant 0 : i32
    %c0_i32_0 = arith.constant 0 : i32
    %c0_i32_1 = arith.constant 0 : i32
    return %arg0, %c0_i32, %c0_i32_0 : i32, i32, i32
  }
}

</mosaic_0001>

<llo_original>
// kernel: residual_block.1
$region0: #{residual_block.1}
  #allocation0 [shape = 'u32[]', space=smem, size = 0x4, offset = 0x4, fixed_abs, tag = 'smem constant byte address 0x4 - core index']
  #allocation1 [shape = 'u32[72,128]{1,0:T(1,128)}', space=vmem, size = 0x9000, scoped, tag = 'internal scratch']
  %s0 = inlined_call_operand.vmem [shape: f32[2,4,256], index: 0, kind: input, shape index: {}]
  %s1 = inlined_call_operand.vmem [shape: f32[9,4,4], index: 1, kind: input, shape index: {}]
  %s2 = inlined_call_operand.vmem [shape: f32[9,4,4], index: 2, kind: input, shape index: {}]
  %s3 = inlined_call_operand.vmem [shape: f32[2,4,256], index: 3, kind: output, shape index: {}]
  %s4 = sld [smem:[#allocation0]]
  $region22: #{residual_block.1} parent=0
    _
  %s6 = ssub.s32 1, %s4
  %s7 = scalar_select 0, %s6, %s4
  // Predicated region
  $region2: #{residual_block.1} parent=0 // pred_check
    _
  $region3: #{residual_block.1} parent=0 // pred_check_branch
    %9 = sbr.rel (0) target = $region5
  $region4: #{residual_block.1} parent=0 // pred_region
    _
  $region5: #{residual_block.1} parent=0 // pred_fallthru
    _
  // Predicated region
  $region6: #{residual_block.1} parent=0 // pred_check
    _
  $region7: #{residual_block.1} parent=0 // pred_check_branch
    %11 = sbr.rel (0) target = $region9
  $region8: #{residual_block.1} parent=0 // pred_region
    _
  $region9: #{residual_block.1} parent=0 // pred_fallthru
    _
  // Predicated region
  $region10: #{residual_block.1} parent=0 // pred_check
    _
  $region11: #{residual_block.1} parent=0 // pred_check_branch
    %13 = sbr.rel (0) target = $region13
  $region12: #{residual_block.1} parent=0 // pred_region
    _
  $region13: #{residual_block.1} parent=0 // pred_fallthru
    _
  %v14 = vlaneseq
  %v15 = vand.u32 %v14, 127
  %v16 = vadd.s32 %v15, 128
  %vm17 = vcmp.lt.s32.totalorder %v15, 0
  %v18 = vsub.s32 0, %v15
  %v19 = vsel %vm17, %v18, %v15
  %v20 = vshrl.u32 %v19, 4
  %v21 = vand.u32 %v19, 15
  %v22 = vsub.s32 0, %v21
  %v23 = vsel %vm17, %v22, %v21
  %vm24 = vcmp.lt.s32.totalorder %v16, 0
  %v25 = vsub.s32 0, %v16
  %v26 = vsel %vm24, %v25, %v16
  %v27 = vshrl.u32 %v26, 4
  %v28 = vand.u32 %v26, 15
  %v29 = vsub.s32 0, %v28
  %v30 = vsel %vm24, %v29, %v28
  %vm31 = vcmp.ne.s32.totalorder %v23, 0
  %vm32 = vcmp.ne.s32.totalorder %v30, 0
  %vm33 = vcmp.lt.s32.totalorder %v23, 0
  %vm34 = vcmp.lt.s32.totalorder %v30, 0
  %vm35 = vmand %vm33, %vm31
  %vm36 = vmand %vm34, %vm32
  %v37 = vadd.s32 %v23, 16
  %v38 = vadd.s32 %v30, 16
  %v39 = vsel %vm35, %v37, %v23
  %v40 = vsel %vm36, %v38, %v30
  %vm41 = vcmp.eq.s32.totalorder %v39, 0
  %vm42 = vcmp.eq.s32.totalorder %v40, 0
  %vm43 = vcmp.eq.s32.totalorder %v39, 15
  %vm44 = vcmp.eq.s32.totalorder %v40, 15
  %vm45 = vcmp.lt.s32.totalorder %v15, 16
  %vm46 = vcmp.lt.s32.totalorder %v16, 16
  %vm47 = vcmp.ge.s32.totalorder %v15, 240
  %vm48 = vcmp.ge.s32.totalorder %v16, 240
  %v49 = vld [vmem:[%s0] sm:$0xff]
  %51 = vst [vmem:[#allocation1] ss:$2 sm:$0xff] %v49
  %v52 = vld.sshfl [vmem:[#allocation1] sm:$0xff pattern:$0x75316420]
  %v53 = vld.sshfl [vmem:[#allocation1 + $0x8] sm:$0xff pattern:$0x75316420]
  %56 = vrot.lane.b32.xlu0 %v52, 16
  %v57 = vpop.permute.xlu0 %56
  %58 = vrot.lane.b32.xlu0 %v53, 16
  %v59 = vpop.permute.xlu0 %58
  %v60 = vsel %vm45, %v57, %v59
  %v61 = vsel %vm45, %v59, %v57
  %62 = vst [vmem:[#allocation1] ss:$2 sm:$0xff] %v49
  %v63 = vld.sshfl [vmem:[#allocation1] sm:$0xff pattern:$0x75316420]
  %v64 = vld.sshfl [vmem:[#allocation1 + $0x8] sm:$0xff pattern:$0x75316420]
  %67 = vrot.lane.b32.xlu0 %v63, 112
  %v68 = vpop.permute.xlu0 %67
  %69 = vrot.lane.b32.xlu0 %v64, 112
  %v70 = vpop.permute.xlu0 %69
  %vm71 = vcmp.lt.s32.totalorder %v15, 112
  %v72 = vsel %vm71, %v68, %v70
  %v73 = vsel %vm71, %v70, %v68
  %v74 = vsel %vm45, 1, 0
  %v75 = vsel %vm46, 1, 0
  %vm76 = vcmp.eq.s32.totalorder %v74, 1
  %vm77 = vcmp.eq.s32.totalorder %v75, 1
  %v78 = vsel %vm76, %v72, %v61
  %v79 = vsel %vm77, %v73, %v60
  %v80 = vsel %vm47, 1, 0
  %v81 = vsel %vm48, 1, 0
  %vm82 = vcmp.eq.s32.totalorder %v80, 1
  %vm83 = vcmp.eq.s32.totalorder %v81, 1
  %v84 = vsel %vm82, %v61, %v72
  %v85 = vsel %vm83, %v60, %v73
  %86 = vrot.lane.b32.xlu0 %v78, 1
  %v87 = vpop.permute.xlu0 %86
  %88 = vrot.lane.b32.xlu0 %v79, 1
  %v89 = vpop.permute.xlu0 %88
  %vm90 = vcmp.lt.s32.totalorder %v15, 1
  %v91 = vsel %vm90, %v87, %v89
  %v92 = vsel %vm90, %v89, %v87
  %93 = vrot.lane.b32.xlu0 %v78, 127
  %v94 = vpop.permute.xlu0 %93
  %95 = vrot.lane.b32.xlu0 %v79, 127
  %v96 = vpop.permute.xlu0 %95
  %vm97 = vcmp.lt.s32.totalorder %v15, 127
  %v98 = vsel %vm97, %v94, %v96
  %v99 = vsel %vm97, %v96, %v94
  %v100 = vsel %vm41, 1, 0
  %v101 = vsel %vm42, 1, 0
  %vm102 = vcmp.eq.s32.totalorder %v100, 1
  %vm103 = vcmp.eq.s32.totalorder %v101, 1
  %v104 = vsel %vm102, %v98, %v92
  %v105 = vsel %vm103, %v99, %v91
  %v106 = vsel %vm43, 1, 0
  %v107 = vsel %vm44, 1, 0
  %vm108 = vcmp.eq.s32.totalorder %v106, 1
  %vm109 = vcmp.eq.s32.totalorder %v107, 1
  %v110 = vsel %vm108, %v92, %v98
  %v111 = vsel %vm109, %v91, %v99
  %v112 = vld [vmem:[%s1] sm:$0xf]
  %v113 = vperm.slane %v112, 0
  %v114 = vlaneseq
  %v115 = vshrl.u32 %v114, 7
  %117 = vset.pattern.permute.xlu0 %v115
  %118 = vperm.xlu0 %117, %v113
  %v119 = vpop.permute.xlu0 %118
  %v120 = vperm.slane %v112, 1
  %v121 = vlaneseq
  %v122 = vshrl.u32 %v121, 7
  %124 = vset.pattern.permute.xlu0 %v122
  %125 = vperm.xlu0 %124, %v120
  %v126 = vpop.permute.xlu0 %125
  %v127 = vperm.slane %v112, 2
  %v128 = vlaneseq
  %v129 = vshrl.u32 %v128, 7
  %131 = vset.pattern.permute.xlu0 %v129
  %132 = vperm.xlu0 %131, %v127
  %v133 = vpop.permute.xlu0 %132
  %v134 = vperm.slane %v112, 3
  %v135 = vlaneseq
  %v136 = vshrl.u32 %v135, 7
  %138 = vset.pattern.permute.xlu0 %v136
  %139 = vperm.xlu0 %138, %v134
  %v140 = vpop.permute.xlu0 %139
  %v141 = vmul.f32 %v119, %v104
  %v142 = vmul.f32 %v119, %v105
  %v143 = vmul.f32 %v126, %v104
  %v144 = vmul.f32 %v126, %v105
  %v145 = vmul.f32 %v133, %v104
  %v146 = vmul.f32 %v133, %v105
  %v147 = vmul.f32 %v140, %v104
  %v148 = vmul.f32 %v140, %v105
  %vm149 = vcmask 1043456
  %v150 = vsel %vm149, %v141, 0.0
  %v151 = vrot.slane %v150, 4
  %v152 = vadd.f32 %v150, %v151
  %v153 = vrot.slane %v152, 2
  %v154 = vadd.f32 %v152, %v153
  %v155 = vrot.slane %v154, 1
  %v156 = vadd.f32 %v154, %v155
  %v157 = vsel %vm149, %v142, 0.0
  %v158 = vrot.slane %v157, 4
  %v159 = vadd.f32 %v157, %v158
  %v160 = vrot.slane %v159, 2
  %v161 = vadd.f32 %v159, %v160
  %v162 = vrot.slane %v161, 1
  %v163 = vadd.f32 %v161, %v162
  %v164 = vsel %vm149, %v143, 0.0
  %v165 = vrot.slane %v164, 4
  %v166 = vadd.f32 %v164, %v165
  %v167 = vrot.slane %v166, 2
  %v168 = vadd.f32 %v166, %v167
  %v169 = vrot.slane %v168, 1
  %v170 = vadd.f32 %v168, %v169
  %v171 = vsel %vm149, %v144, 0.0
  %v172 = vrot.slane %v171, 4
  %v173 = vadd.f32 %v171, %v172
  %v174 = vrot.slane %v173, 2
  %v175 = vadd.f32 %v173, %v174
  %v176 = vrot.slane %v175, 1
  %v177 = vadd.f32 %v175, %v176
  %v178 = vsel %vm149, %v145, 0.0
  %v179 = vrot.slane %v178, 4
  %v180 = vadd.f32 %v178, %v179
  %v181 = vrot.slane %v180, 2
  %v182 = vadd.f32 %v180, %v181
  %v183 = vrot.slane %v182, 1
  %v184 = vadd.f32 %v182, %v183
  %v185 = vsel %vm149, %v146, 0.0
  %v186 = vrot.slane %v185, 4
  %v187 = vadd.f32 %v185, %v186
  %v188 = vrot.slane %v187, 2
  %v189 = vadd.f32 %v187, %v188
  %v190 = vrot.slane %v189, 1
  %v191 = vadd.f32 %v189, %v190
  %v192 = vsel %vm149, %v147, 0.0
  %v193 = vrot.slane %v192, 4
  %v194 = vadd.f32 %v192, %v193
  %v195 = vrot.slane %v194, 2
  %v196 = vadd.f32 %v194, %v195
  %v197 = vrot.slane %v196, 1
  %v198 = vadd.f32 %v196, %v197
  %v199 = vsel %vm149, %v148, 0.0
  %v200 = vrot.slane %v199, 4
  %v201 = vadd.f32 %v199, %v200
  %v202 = vrot.slane %v201, 2
  %v203 = vadd.f32 %v201, %v202
  %v204 = vrot.slane %v203, 1
  %v205 = vadd.f32 %v203, %v204
  %v206 = vadd.f32 %v156, 0.0
  %v207 = vadd.f32 %v163, 0.0
  %v208 = vadd.f32 %v170, 0.0
  %v209 = vadd.f32 %v177, 0.0
  %v210 = vadd.f32 %v184, 0.0
  %v211 = vadd.f32 %v191, 0.0
  %v212 = vadd.f32 %v198, 0.0
  %v213 = vadd.f32 %v205, 0.0
  %s214 = scalar_lea.vmem %s1, 4
  %v215 = vld [vmem:[%s214] sm:$0xf]
  %v216 = vperm.slane %v215, 0
  %v217 = vlaneseq
  %v218 = vshrl.u32 %v217, 7
  %220 = vset.pattern.permute.xlu0 %v218
  %221 = vperm.xlu0 %220, %v216
  %v222 = vpop.permute.xlu0 %221
  %v223 = vperm.slane %v215, 1
  %v224 = vlaneseq
  %v225 = vshrl.u32 %v224, 7
  %227 = vset.pattern.permute.xlu0 %v225
  %228 = vperm.xlu0 %227, %v223
  %v229 = vpop.permute.xlu0 %228
  %v230 = vperm.slane %v215, 2
  %v231 = vlaneseq
  %v232 = vshrl.u32 %v231, 7
  %234 = vset.pattern.permute.xlu0 %v232
  %235 = vperm.xlu0 %234, %v230
  %v236 = vpop.permute.xlu0 %235
  %v237 = vperm.slane %v215, 3
  %v238 = vlaneseq
  %v239 = vshrl.u32 %v238, 7
  %241 = vset.pattern.permute.xlu0 %v239
  %242 = vperm.xlu0 %241, %v237
  %v243 = vpop.permute.xlu0 %242
  %v244 = vmul.f32 %v222, %v78
  %v245 = vmul.f32 %v222, %v79
  %v246 = vmul.f32 %v229, %v78
  %v247 = vmul.f32 %v229, %v79
  %v248 = vmul.f32 %v236, %v78
  %v249 = vmul.f32 %v236, %v79
  %v250 = vmul.f32 %v243, %v78
  %v251 = vmul.f32 %v243, %v79
  %v252 = vsel %vm149, %v244, 0.0
  %v253 = vrot.slane %v252, 4
  %v254 = vadd.f32 %v252, %v253
  %v255 = vrot.slane %v254, 2
  %v256 = vadd.f32 %v254, %v255
  %v257 = vrot.slane %v256, 1
  %v258 = vadd.f32 %v256, %v257
  %v259 = vsel %vm149, %v245, 0.0
  %v260 = vrot.slane %v259, 4
  %v261 = vadd.f32 %v259, %v260
  %v262 = vrot.slane %v261, 2
  %v263 = vadd.f32 %v261, %v262
  %v264 = vrot.slane %v263, 1
  %v265 = vadd.f32 %v263, %v264
  %v266 = vsel %vm149, %v246, 0.0
  %v267 = vrot.slane %v266, 4
  %v268 = vadd.f32 %v266, %v267
  %v269 = vrot.slane %v268, 2
  %v270 = vadd.f32 %v268, %v269
  %v271 = vrot.slane %v270, 1
  %v272 = vadd.f32 %v270, %v271
  %v273 = vsel %vm149, %v247, 0.0
  %v274 = vrot.slane %v273, 4
  %v275 = vadd.f32 %v273, %v274
  %v276 = vrot.slane %v275, 2
  %v277 = vadd.f32 %v275, %v276
  %v278 = vrot.slane %v277, 1
  %v279 = vadd.f32 %v277, %v278
  %v280 = vsel %vm149, %v248, 0.0
  %v281 = vrot.slane %v280, 4
  %v282 = vadd.f32 %v280, %v281
  %v283 = vrot.slane %v282, 2
  %v284 = vadd.f32 %v282, %v283
  %v285 = vrot.slane %v284, 1
  %v286 = vadd.f32 %v284, %v285
  %v287 = vsel %vm149, %v249, 0.0
  %v288 = vrot.slane %v287, 4
  %v289 = vadd.f32 %v287, %v288
  %v290 = vrot.slane %v289, 2
  %v291 = vadd.f32 %v289, %v290
  %v292 = vrot.slane %v291, 1
  %v293 = vadd.f32 %v291, %v292
  %v294 = vsel %vm149, %v250, 0.0
  %v295 = vrot.slane %v294, 4
  %v296 = vadd.f32 %v294, %v295
  %v297 = vrot.slane %v296, 2
  %v298 = vadd.f32 %v296, %v297
  %v299 = vrot.slane %v298, 1
  %v300 = vadd.f32 %v298, %v299
  %v301 = vsel %vm149, %v251, 0.0
  %v302 = vrot.slane %v301, 4
  %v303 = vadd.f32 %v301, %v302
  %v304 = vrot.slane %v303, 2
  %v305 = vadd.f32 %v303, %v304
  %v306 = vrot.slane %v305, 1
  %v307 = vadd.f32 %v305, %v306
  %v308 = vadd.f32 %v206, %v258
  %v309 = vadd.f32 %v207, %v265
  %v310 = vadd.f32 %v208, %v272
  %v311 = vadd.f32 %v209, %v279
  %v312 = vadd.f32 %v210, %v286
  %v313 = vadd.f32 %v211, %v293
  %v314 = vadd.f32 %v212, %v300
  %v315 = vadd.f32 %v213, %v307
  %s316 = scalar_lea.vmem %s1, 8
  %v317 = vld [vmem:[%s316] sm:$0xf]
  %v318 = vperm.slane %v317, 0
  %v319 = vlaneseq
  %v320 = vshrl.u32 %v319, 7
  %322 = vset.pattern.permute.xlu0 %v320
  %323 = vperm.xlu0 %322, %v318
  %v324 = vpop.permute.xlu0 %323
  %v325 = vperm.slane %v317, 1
  %v326 = vlaneseq
  %v327 = vshrl.u32 %v326, 7
  %329 = vset.pattern.permute.xlu0 %v327
  %330 = vperm.xlu0 %329, %v325
  %v331 = vpop.permute.xlu0 %330
  %v332 = vperm.slane %v317, 2
  %v333 = vlaneseq
  %v334 = vshrl.u32 %v333, 7
  %336 = vset.pattern.permute.xlu0 %v334
  %337 = vperm.xlu0 %336, %v332
  %v338 = vpop.permute.xlu0 %337
  %v339 = vperm.slane %v317, 3
  %v340 = vlaneseq
  %v341 = vshrl.u32 %v340, 7
  %343 = vset.pattern.permute.xlu0 %v341
  %344 = vperm.xlu0 %343, %v339
  %v345 = vpop.permute.xlu0 %344
  %v346 = vmul.f32 %v324, %v110
  %v347 = vmul.f32 %v324, %v111
  %v348 = vmul.f32 %v331, %v110
  %v349 = vmul.f32 %v331, %v111
  %v350 = vmul.f32 %v338, %v110
  %v351 = vmul.f32 %v338, %v111
  %v352 = vmul.f32 %v345, %v110
  %v353 = vmul.f32 %v345, %v111
  %v354 = vsel %vm149, %v346, 0.0
  %v355 = vrot.slane %v354, 4
  %v356 = vadd.f32 %v354, %v355
  %v357 = vrot.slane %v356, 2
  %v358 = vadd.f32 %v356, %v357
  %v359 = vrot.slane %v358, 1
  %v360 = vadd.f32 %v358, %v359
  %v361 = vsel %vm149, %v347, 0.0
  %v362 = vrot.slane %v361, 4
  %v363 = vadd.f32 %v361, %v362
  %v364 = vrot.slane %v363, 2
  %v365 = vadd.f32 %v363, %v364
  %v366 = vrot.slane %v365, 1
  %v367 = vadd.f32 %v365, %v366
  %v368 = vsel %vm149, %v348, 0.0
  %v369 = vrot.slane %v368, 4
  %v370 = vadd.f32 %v368, %v369
  %v371 = vrot.slane %v370, 2
  %v372 = vadd.f32 %v370, %v371
  %v373 = vrot.slane %v372, 1
  %v374 = vadd.f32 %v372, %v373
  %v375 = vsel %vm149, %v349, 0.0
  %v376 = vrot.slane %v375, 4
  %v377 = vadd.f32 %v375, %v376
  %v378 = vrot.slane %v377, 2
  %v379 = vadd.f32 %v377, %v378
  %v380 = vrot.slane %v379, 1
  %v381 = vadd.f32 %v379, %v380
  %v382 = vsel %vm149, %v350, 0.0
  %v383 = vrot.slane %v382, 4
  %v384 = vadd.f32 %v382, %v383
  %v385 = vrot.slane %v384, 2
  %v386 = vadd.f32 %v384, %v385
  %v387 = vrot.slane %v386, 1
  %v388 = vadd.f32 %v386, %v387
  %v389 = vsel %vm149, %v351, 0.0
  %v390 = vrot.slane %v389, 4
  %v391 = vadd.f32 %v389, %v390
  %v392 = vrot.slane %v391, 2
  %v393 = vadd.f32 %v391, %v392
  %v394 = vrot.slane %v393, 1
  %v395 = vadd.f32 %v393, %v394
  %v396 = vsel %vm149, %v352, 0.0
  %v397 = vrot.slane %v396, 4
  %v398 = vadd.f32 %v396, %v397
  %v399 = vrot.slane %v398, 2
  %v400 = vadd.f32 %v398, %v399
  %v401 = vrot.slane %v400, 1
  %v402 = vadd.f32 %v400, %v401
  %v403 = vsel %vm149, %v353, 0.0
  %v404 = vrot.slane %v403, 4
  %v405 = vadd.f32 %v403, %v404
  %v406 = vrot.slane %v405, 2
  %v407 = vadd.f32 %v405, %v406
  %v408 = vrot.slane %v407, 1
  %v409 = vadd.f32 %v407, %v408
  %v410 = vadd.f32 %v308, %v360
  %v411 = vadd.f32 %v309, %v367
  %v412 = vadd.f32 %v310, %v374
  %v413 = vadd.f32 %v311, %v381
  %v414 = vadd.f32 %v312, %v388
  %v415 = vadd.f32 %v313, %v395
  %v416 = vadd.f32 %v314, %v402
  %v417 = vadd.f32 %v315, %v409
  %418 = vst [vmem:[#allocation1] ss:$2 sm:$0xff] %v49
  %v419 = vld.sshfl [vmem:[#allocation1] sm:$0xff pattern:$0x75316420]
  %v420 = vld.sshfl [vmem:[#allocation1 + $0x8] sm:$0xff pattern:$0x75316420]
  %423 = vrot.lane.b32.xlu0 %v419, 1
  %v424 = vpop.permute.xlu0 %423
  %425 = vrot.lane.b32.xlu0 %v420, 1
  %v426 = vpop.permute.xlu0 %425
  %v427 = vsel %vm90, %v424, %v426
  %v428 = vsel %vm90, %v426, %v424
  %429 = vst [vmem:[#allocation1] ss:$2 sm:$0xff] %v49
  %v430 = vld.sshfl [vmem:[#allocation1] sm:$0xff pattern:$0x75316420]
  %v431 = vld.sshfl [vmem:[#allocation1 + $0x8] sm:$0xff pattern:$0x75316420]
  %434 = vrot.lane.b32.xlu0 %v430, 127
  %v435 = vpop.permute.xlu0 %434
  %436 = vrot.lane.b32.xlu0 %v431, 127
  %v437 = vpop.permute.xlu0 %436
  %v438 = vsel %vm97, %v435, %v437
  %v439 = vsel %vm97, %v437, %v435
  %v440 = vsel %vm102, %v438, %v428
  %v441 = vsel %vm103, %v439, %v427
  %v442 = vsel %vm108, %v428, %v438
  %v443 = vsel %vm109, %v427, %v439
  %s444 = scalar_lea.vmem %s1, 12
  %v445 = vld [vmem:[%s444] sm:$0xf]
  %v446 = vperm.slane %v445, 0
  %v447 = vlaneseq
  %v448 = vshrl.u32 %v447, 7
  %450 = vset.pattern.permute.xlu0 %v448
  %451 = vperm.xlu0 %450, %v446
  %v452 = vpop.permute.xlu0 %451
  %v453 = vperm.slane %v445, 1
  %v454 = vlaneseq
  %v455 = vshrl.u32 %v454, 7
  %457 = vset.pattern.permute.xlu0 %v455
  %458 = vperm.xlu0 %457, %v453
  %v459 = vpop.permute.xlu0 %458
  %v460 = vperm.slane %v445, 2
  %v461 = vlaneseq
  %v462 = vshrl.u32 %v461, 7
  %464 = vset.pattern.permute.xlu0 %v462
  %465 = vperm.xlu0 %464, %v460
  %v466 = vpop.permute.xlu0 %465
  %v467 = vperm.slane %v445, 3
  %v468 = vlaneseq
  %v469 = vshrl.u32 %v468, 7
  %471 = vset.pattern.permute.xlu0 %v469
  %472 = vperm.xlu0 %471, %v467
  %v473 = vpop.permute.xlu0 %472
  %v474 = vmul.f32 %v452, %v440
  %v475 = vmul.f32 %v452, %v441
  %v476 = vmul.f32 %v459, %v440
  %v477 = vmul.f32 %v459, %v441
  %v478 = vmul.f32 %v466, %v440
  %v479 = vmul.f32 %v466, %v441
  %v480 = vmul.f32 %v473, %v440
  %v481 = vmul.f32 %v473, %v441
  %v482 = vsel %vm149, %v474, 0.0
  %v483 = vrot.slane %v482, 4
  %v484 = vadd.f32 %v482, %v483
  %v485 = vrot.slane %v484, 2
  %v486 = vadd.f32 %v484, %v485
  %v487 = vrot.slane %v486, 1
  %v488 = vadd.f32 %v486, %v487
  %v489 = vsel %vm149, %v475, 0.0
  %v490 = vrot.slane %v489, 4
  %v491 = vadd.f32 %v489, %v490
  %v492 = vrot.slane %v491, 2
  %v493 = vadd.f32 %v491, %v492
  %v494 = vrot.slane %v493, 1
  %v495 = vadd.f32 %v493, %v494
  %v496 = vsel %vm149, %v476, 0.0
  %v497 = vrot.slane %v496, 4
  %v498 = vadd.f32 %v496, %v497
  %v499 = vrot.slane %v498, 2
  %v500 = vadd.f32 %v498, %v499
  %v501 = vrot.slane %v500, 1
  %v502 = vadd.f32 %v500, %v501
  %v503 = vsel %vm149, %v477, 0.0
  %v504 = vrot.slane %v503, 4
  %v505 = vadd.f32 %v503, %v504
  %v506 = vrot.slane %v505, 2
  %v507 = vadd.f32 %v505, %v506
  %v508 = vrot.slane %v507, 1
  %v509 = vadd.f32 %v507, %v508
  %v510 = vsel %vm149, %v478, 0.0
  %v511 = vrot.slane %v510, 4
  %v512 = vadd.f32 %v510, %v511
  %v513 = vrot.slane %v512, 2
  %v514 = vadd.f32 %v512, %v513
  %v515 = vrot.slane %v514, 1
  %v516 = vadd.f32 %v514, %v515
  %v517 = vsel %vm149, %v479, 0.0
  %v518 = vrot.slane %v517, 4
  %v519 = vadd.f32 %v517, %v518
  %v520 = vrot.slane %v519, 2
  %v521 = vadd.f32 %v519, %v520
  %v522 = vrot.slane %v521, 1
  %v523 = vadd.f32 %v521, %v522
  %v524 = vsel %vm149, %v480, 0.0
  %v525 = vrot.slane %v524, 4
  %v526 = vadd.f32 %v524, %v525
  %v527 = vrot.slane %v526, 2
  %v528 = vadd.f32 %v526, %v527
  %v529 = vrot.slane %v528, 1
  %v530 = vadd.f32 %v528, %v529
  %v531 = vsel %vm149, %v481, 0.0
  %v532 = vrot.slane %v531, 4
  %v533 = vadd.f32 %v531, %v532
  %v534 = vrot.slane %v533, 2
  %v535 = vadd.f32 %v533, %v534
  %v536 = vrot.slane %v535, 1
  %v537 = vadd.f32 %v535, %v536
  %v538 = vadd.f32 %v410, %v488
  %v539 = vadd.f32 %v411, %v495
  %v540 = vadd.f32 %v412, %v502
  %v541 = vadd.f32 %v413, %v509
  %v542 = vadd.f32 %v414, %v516
  %v543 = vadd.f32 %v415, %v523
  %v544 = vadd.f32 %v416, %v530
  %v545 = vadd.f32 %v417, %v537
  %s546 = scalar_lea.vmem %s1, 16
  %v547 = vld [vmem:[%s546] sm:$0xf]
  %v548 = vperm.slane %v547, 0
  %v549 = vlaneseq
  %v550 = vshrl.u32 %v549, 7
  %552 = vset.pattern.permute.xlu0 %v550
  %553 = vperm.xlu0 %552, %v548
  %v554 = vpop.permute.xlu0 %553
  %v555 = vperm.slane %v547, 1
  %v556 = vlaneseq
  %v557 = vshrl.u32 %v556, 7
  %559 = vset.pattern.permute.xlu0 %v557
  %560 = vperm.xlu0 %559, %v555
  %v561 = vpop.permute.xlu0 %560
  %v562 = vperm.slane %v547, 2
  %v563 = vlaneseq
  %v564 = vshrl.u32 %v563, 7
  %566 = vset.pattern.permute.xlu0 %v564
  %567 = vperm.xlu0 %566, %v562
  %v568 = vpop.permute.xlu0 %567
  %v569 = vperm.slane %v547, 3
  %v570 = vlaneseq
  %v571 = vshrl.u32 %v570, 7
  %573 = vset.pattern.permute.xlu0 %v571
  %574 = vperm.xlu0 %573, %v569
  %v575 = vpop.permute.xlu0 %574
  %576 = vst [vmem:[#allocation1] ss:$2 sm:$0xff] %v49
  %v577 = vld.sshfl [vmem:[#allocation1] sm:$0xff pattern:$0x75316420]
  %v578 = vld.sshfl [vmem:[#allocation1 + $0x8] sm:$0xff pattern:$0x75316420]
  %s579 = scalar_lea.vmem [#allocation1], 16
  %580 = vst [vmem:[%s579] ss:$2 sm:$0xff] %v49
  %v581 = vld.sshfl [vmem:[#allocation1 + $0x10] sm:$0xff pattern:$0x75316420]
  %v582 = vld.sshfl [vmem:[#allocation1 + $0x18] sm:$0xff pattern:$0x75316420]
  %s583 = scalar_lea.vmem [#allocation1], 32
  %584 = vst [vmem:[%s583] ss:$2 sm:$0xff] %v49
  %v585 = vld.sshfl [vmem:[#allocation1 + $0x20] sm:$0xff pattern:$0x75316420]
  %v586 = vld.sshfl [vmem:[#allocation1 + $0x28] sm:$0xff pattern:$0x75316420]
  %s587 = scalar_lea.vmem [#allocation1], 48
  %588 = vst [vmem:[%s587] ss:$2 sm:$0xff] %v49
  %v589 = vld.sshfl [vmem:[#allocation1 + $0x30] sm:$0xff pattern:$0x75316420]
  %v590 = vld.sshfl [vmem:[#allocation1 + $0x38] sm:$0xff pattern:$0x75316420]
  %v599 = vmul.f32 %v554, %v577
  %v600 = vmul.f32 %v554, %v578
  %v601 = vmul.f32 %v561, %v581
  %v602 = vmul.f32 %v561, %v582
  %v603 = vmul.f32 %v568, %v585
  %v604 = vmul.f32 %v568, %v586
  %v605 = vmul.f32 %v575, %v589
  %v606 = vmul.f32 %v575, %v590
  %v607 = vsel %vm149, %v599, 0.0
  %v608 = vrot.slane %v607, 4
  %v609 = vadd.f32 %v607, %v608
  %v610 = vrot.slane %v609, 2
  %v611 = vadd.f32 %v609, %v610
  %v612 = vrot.slane %v611, 1
  %v613 = vadd.f32 %v611, %v612
  %v614 = vsel %vm149, %v600, 0.0
  %v615 = vrot.slane %v614, 4
  %v616 = vadd.f32 %v614, %v615
  %v617 = vrot.slane %v616, 2
  %v618 = vadd.f32 %v616, %v617
  %v619 = vrot.slane %v618, 1
  %v620 = vadd.f32 %v618, %v619
  %v621 = vsel %vm149, %v601, 0.0
  %v622 = vrot.slane %v621, 4
  %v623 = vadd.f32 %v621, %v622
  %v624 = vrot.slane %v623, 2
  %v625 = vadd.f32 %v623, %v624
  %v626 = vrot.slane %v625, 1
  %v627 = vadd.f32 %v625, %v626
  %v628 = vsel %vm149, %v602, 0.0
  %v629 = vrot.slane %v628, 4
  %v630 = vadd.f32 %v628, %v629
  %v631 = vrot.slane %v630, 2
  %v632 = vadd.f32 %v630, %v631
  %v633 = vrot.slane %v632, 1
  %v634 = vadd.f32 %v632, %v633
  %v635 = vsel %vm149, %v603, 0.0
  %v636 = vrot.slane %v635, 4
  %v637 = vadd.f32 %v635, %v636
  %v638 = vrot.slane %v637, 2
  %v639 = vadd.f32 %v637, %v638
  %v640 = vrot.slane %v639, 1
  %v641 = vadd.f32 %v639, %v640
  %v642 = vsel %vm149, %v604, 0.0
  %v643 = vrot.slane %v642, 4
  %v644 = vadd.f32 %v642, %v643
  %v645 = vrot.slane %v644, 2
  %v646 = vadd.f32 %v644, %v645
  %v647 = vrot.slane %v646, 1
  %v648 = vadd.f32 %v646, %v647
  %v649 = vsel %vm149, %v605, 0.0
  %v650 = vrot.slane %v649, 4
  %v651 = vadd.f32 %v649, %v650
  %v652 = vrot.slane %v651, 2
  %v653 = vadd.f32 %v651, %v652
  %v654 = vrot.slane %v653, 1
  %v655 = vadd.f32 %v653, %v654
  %v656 = vsel %vm149, %v606, 0.0
  %v657 = vrot.slane %v656, 4
  %v658 = vadd.f32 %v656, %v657
  %v659 = vrot.slane %v658, 2
  %v660 = vadd.f32 %v658, %v659
  %v661 = vrot.slane %v660, 1
  %v662 = vadd.f32 %v660, %v661
  %v663 = vadd.f32 %v538, %v613
  %v664 = vadd.f32 %v539, %v620
  %v665 = vadd.f32 %v540, %v627
  %v666 = vadd.f32 %v541, %v634
  %v667 = vadd.f32 %v542, %v641
  %v668 = vadd.f32 %v543, %v648
  %v669 = vadd.f32 %v544, %v655
  %v670 = vadd.f32 %v545, %v662
  %s671 = scalar_lea.vmem %s1, 20
  %v672 = vld [vmem:[%s671] sm:$0xf]
  %v673 = vperm.slane %v672, 0
  %v674 = vlaneseq
  %v675 = vshrl.u32 %v674, 7
  %677 = vset.pattern.permute.xlu0 %v675
  %678 = vperm.xlu0 %677, %v673
  %v679 = vpop.permute.xlu0 %678
  %v680 = vperm.slane %v672, 1
  %v681 = vlaneseq
  %v682 = vshrl.u32 %v681, 7
  %684 = vset.pattern.permute.xlu0 %v682
  %685 = vperm.xlu0 %684, %v680
  %v686 = vpop.permute.xlu0 %685
  %v687 = vperm.slane %v672, 2
  %v688 = vlaneseq
  %v689 = vshrl.u32 %v688, 7
  %691 = vset.pattern.permute.xlu0 %v689
  %692 = vperm.xlu0 %691, %v687
  %v693 = vpop.permute.xlu0 %692
  %v694 = vperm.slane %v672, 3
  %v695 = vlaneseq
  %v696 = vshrl.u32 %v695, 7
  %698 = vset.pattern.permute.xlu0 %v696
  %699 = vperm.xlu0 %698, %v694
  %v700 = vpop.permute.xlu0 %699
  %v701 = vmul.f32 %v679, %v442
  %v702 = vmul.f32 %v679, %v443
  %v703 = vmul.f32 %v686, %v442
  %v704 = vmul.f32 %v686, %v443
  %v705 = vmul.f32 %v693, %v442
  %v706 = vmul.f32 %v693, %v443
  %v707 = vmul.f32 %v700, %v442
  %v708 = vmul.f32 %v700, %v443
  %v709 = vsel %vm149, %v701, 0.0
  %v710 = vrot.slane %v709, 4
  %v711 = vadd.f32 %v709, %v710
  %v712 = vrot.slane %v711, 2
  %v713 = vadd.f32 %v711, %v712
  %v714 = vrot.slane %v713, 1
  %v715 = vadd.f32 %v713, %v714
  %v716 = vsel %vm149, %v702, 0.0
  %v717 = vrot.slane %v716, 4
  %v718 = vadd.f32 %v716, %v717
  %v719 = vrot.slane %v718, 2
  %v720 = vadd.f32 %v718, %v719
  %v721 = vrot.slane %v720, 1
  %v722 = vadd.f32 %v720, %v721
  %v723 = vsel %vm149, %v703, 0.0
  %v724 = vrot.slane %v723, 4
  %v725 = vadd.f32 %v723, %v724
  %v726 = vrot.slane %v725, 2
  %v727 = vadd.f32 %v725, %v726
  %v728 = vrot.slane %v727, 1
  %v729 = vadd.f32 %v727, %v728
  %v730 = vsel %vm149, %v704, 0.0
  %v731 = vrot.slane %v730, 4
  %v732 = vadd.f32 %v730, %v731
  %v733 = vrot.slane %v732, 2
  %v734 = vadd.f32 %v732, %v733
  %v735 = vrot.slane %v734, 1
  %v736 = vadd.f32 %v734, %v735
  %v737 = vsel %vm149, %v705, 0.0
  %v738 = vrot.slane %v737, 4
  %v739 = vadd.f32 %v737, %v738
  %v740 = vrot.slane %v739, 2
  %v741 = vadd.f32 %v739, %v740
  %v742 = vrot.slane %v741, 1
  %v743 = vadd.f32 %v741, %v742
  %v744 = vsel %vm149, %v706, 0.0
  %v745 = vrot.slane %v744, 4
  %v746 = vadd.f32 %v744, %v745
  %v747 = vrot.slane %v746, 2
  %v748 = vadd.f32 %v746, %v747
  %v749 = vrot.slane %v748, 1
  %v750 = vadd.f32 %v748, %v749
  %v751 = vsel %vm149, %v707, 0.0
  %v752 = vrot.slane %v751, 4
  %v753 = vadd.f32 %v751, %v752
  %v754 = vrot.slane %v753, 2
  %v755 = vadd.f32 %v753, %v754
  %v756 = vrot.slane %v755, 1
  %v757 = vadd.f32 %v755, %v756
  %v758 = vsel %vm149, %v708, 0.0
  %v759 = vrot.slane %v758, 4
  %v760 = vadd.f32 %v758, %v759
  %v761 = vrot.slane %v760, 2
  %v762 = vadd.f32 %v760, %v761
  %v763 = vrot.slane %v762, 1
  %v764 = vadd.f32 %v762, %v763
  %v765 = vadd.f32 %v663, %v715
  %v766 = vadd.f32 %v664, %v722
  %v767 = vadd.f32 %v665, %v729
  %v768 = vadd.f32 %v666, %v736
  %v769 = vadd.f32 %v667, %v743
  %v770 = vadd.f32 %v668, %v750
  %v771 = vadd.f32 %v669, %v757
  %v772 = vadd.f32 %v670, %v764
  %773 = vrot.lane.b32.xlu0 %v84, 1
  %v774 = vpop.permute.xlu0 %773
  %775 = vrot.lane.b32.xlu0 %v85, 1
  %v776 = vpop.permute.xlu0 %775
  %v777 = vsel %vm90, %v774, %v776
  %v778 = vsel %vm90, %v776, %v774
  %779 = vrot.lane.b32.xlu0 %v84, 127
  %v780 = vpop.permute.xlu0 %779
  %781 = vrot.lane.b32.xlu0 %v85, 127
  %v782 = vpop.permute.xlu0 %781
  %v783 = vsel %vm97, %v780, %v782
  %v784 = vsel %vm97, %v782, %v780
  %v785 = vsel %vm102, %v783, %v778
  %v786 = vsel %vm103, %v784, %v777
  %v787 = vsel %vm108, %v778, %v783
  %v788 = vsel %vm109, %v777, %v784
  %s789 = scalar_lea.vmem %s1, 24
  %v790 = vld [vmem:[%s789] sm:$0xf]
  %v791 = vperm.slane %v790, 0
  %v792 = vlaneseq
  %v793 = vshrl.u32 %v792, 7
  %795 = vset.pattern.permute.xlu0 %v793
  %796 = vperm.xlu0 %795, %v791
  %v797 = vpop.permute.xlu0 %796
  %v798 = vperm.slane %v790, 1
  %v799 = vlaneseq
  %v800 = vshrl.u32 %v799, 7
  %802 = vset.pattern.permute.xlu0 %v800
  %803 = vperm.xlu0 %802, %v798
  %v804 = vpop.permute.xlu0 %803
  %v805 = vperm.slane %v790, 2
  %v806 = vlaneseq
  %v807 = vshrl.u32 %v806, 7
  %809 = vset.pattern.permute.xlu0 %v807
  %810 = vperm.xlu0 %809, %v805
  %v811 = vpop.permute.xlu0 %810
  %v812 = vperm.slane %v790, 3
  %v813 = vlaneseq
  %v814 = vshrl.u32 %v813, 7
  %816 = vset.pattern.permute.xlu0 %v814
  %817 = vperm.xlu0 %816, %v812
  %v818 = vpop.permute.xlu0 %817
  %v819 = vmul.f32 %v797, %v785
  %v820 = vmul.f32 %v797, %v786
  %v821 = vmul.f32 %v804, %v785
  %v822 = vmul.f32 %v804, %v786
  %v823 = vmul.f32 %v811, %v785
  %v824 = vmul.f32 %v811, %v786
  %v825 = vmul.f32 %v818, %v785
  %v826 = vmul.f32 %v818, %v786
  %v827 = vsel %vm149, %v819, 0.0
  %v828 = vrot.slane %v827, 4
  %v829 = vadd.f32 %v827, %v828
  %v830 = vrot.slane %v829, 2
  %v831 = vadd.f32 %v829, %v830
  %v832 = vrot.slane %v831, 1
  %v833 = vadd.f32 %v831, %v832
  %v834 = vsel %vm149, %v820, 0.0
  %v835 = vrot.slane %v834, 4
  %v836 = vadd.f32 %v834, %v835
  %v837 = vrot.slane %v836, 2
  %v838 = vadd.f32 %v836, %v837
  %v839 = vrot.slane %v838, 1
  %v840 = vadd.f32 %v838, %v839
  %v841 = vsel %vm149, %v821, 0.0
  %v842 = vrot.slane %v841, 4
  %v843 = vadd.f32 %v841, %v842
  %v844 = vrot.slane %v843, 2
  %v845 = vadd.f32 %v843, %v844
  %v846 = vrot.slane %v845, 1
  %v847 = vadd.f32 %v845, %v846
  %v848 = vsel %vm149, %v822, 0.0
  %v849 = vrot.slane %v848, 4
  %v850 = vadd.f32 %v848, %v849
  %v851 = vrot.slane %v850, 2
  %v852 = vadd.f32 %v850, %v851
  %v853 = vrot.slane %v852, 1
  %v854 = vadd.f32 %v852, %v853
  %v855 = vsel %vm149, %v823, 0.0
  %v856 = vrot.slane %v855, 4
  %v857 = vadd.f32 %v855, %v856
  %v858 = vrot.slane %v857, 2
  %v859 = vadd.f32 %v857, %v858
  %v860 = vrot.slane %v859, 1
  %v861 = vadd.f32 %v859, %v860
  %v862 = vsel %vm149, %v824, 0.0
  %v863 = vrot.slane %v862, 4
  %v864 = vadd.f32 %v862, %v863
  %v865 = vrot.slane %v864, 2
  %v866 = vadd.f32 %v864, %v865
  %v867 = vrot.slane %v866, 1
  %v868 = vadd.f32 %v866, %v867
  %v869 = vsel %vm149, %v825, 0.0
  %v870 = vrot.slane %v869, 4
  %v871 = vadd.f32 %v869, %v870
  %v872 = vrot.slane %v871, 2
  %v873 = vadd.f32 %v871, %v872
  %v874 = vrot.slane %v873, 1
  %v875 = vadd.f32 %v873, %v874
  %v876 = vsel %vm149, %v826, 0.0
  %v877 = vrot.slane %v876, 4
  %v878 = vadd.f32 %v876, %v877
  %v879 = vrot.slane %v878, 2
  %v880 = vadd.f32 %v878, %v879
  %v881 = vrot.slane %v880, 1
  %v882 = vadd.f32 %v880, %v881
  %v883 = vadd.f32 %v765, %v833
  %v884 = vadd.f32 %v766, %v840
  %v885 = vadd.f32 %v767, %v847
  %v886 = vadd.f32 %v768, %v854
  %v887 = vadd.f32 %v769, %v861
  %v888 = vadd.f32 %v770, %v868
  %v889 = vadd.f32 %v771, %v875
  %v890 = vadd.f32 %v772, %v882
  %s891 = scalar_lea.vmem %s1, 28
  %v892 = vld [vmem:[%s891] sm:$0xf]
  %v893 = vperm.slane %v892, 0
  %v894 = vlaneseq
  %v895 = vshrl.u32 %v894, 7
  %897 = vset.pattern.permute.xlu0 %v895
  %898 = vperm.xlu0 %897, %v893
  %v899 = vpop.permute.xlu0 %898
  %v900 = vperm.slane %v892, 1
  %v901 = vlaneseq
  %v902 = vshrl.u32 %v901, 7
  %904 = vset.pattern.permute.xlu0 %v902
  %905 = vperm.xlu0 %904, %v900
  %v906 = vpop.permute.xlu0 %905
  %v907 = vperm.slane %v892, 2
  %v908 = vlaneseq
  %v909 = vshrl.u32 %v908, 7
  %911 = vset.pattern.permute.xlu0 %v909
  %912 = vperm.xlu0 %911, %v907
  %v913 = vpop.permute.xlu0 %912
  %v914 = vperm.slane %v892, 3
  %v915 = vlaneseq
  %v916 = vshrl.u32 %v915, 7
  %918 = vset.pattern.permute.xlu0 %v916
  %919 = vperm.xlu0 %918, %v914
  %v920 = vpop.permute.xlu0 %919
  %v921 = vmul.f32 %v899, %v84
  %v922 = vmul.f32 %v899, %v85
  %v923 = vmul.f32 %v906, %v84
  %v924 = vmul.f32 %v906, %v85
  %v925 = vmul.f32 %v913, %v84
  %v926 = vmul.f32 %v913, %v85
  %v927 = vmul.f32 %v920, %v84
  %v928 = vmul.f32 %v920, %v85
  %v929 = vsel %vm149, %v921, 0.0
  %v930 = vrot.slane %v929, 4
  %v931 = vadd.f32 %v929, %v930
  %v932 = vrot.slane %v931, 2
  %v933 = vadd.f32 %v931, %v932
  %v934 = vrot.slane %v933, 1
  %v935 = vadd.f32 %v933, %v934
  %v936 = vsel %vm149, %v922, 0.0
  %v937 = vrot.slane %v936, 4
  %v938 = vadd.f32 %v936, %v937
  %v939 = vrot.slane %v938, 2
  %v940 = vadd.f32 %v938, %v939
  %v941 = vrot.slane %v940, 1
  %v942 = vadd.f32 %v940, %v941
  %v943 = vsel %vm149, %v923, 0.0
  %v944 = vrot.slane %v943, 4
  %v945 = vadd.f32 %v943, %v944
  %v946 = vrot.slane %v945, 2
  %v947 = vadd.f32 %v945, %v946
  %v948 = vrot.slane %v947, 1
  %v949 = vadd.f32 %v947, %v948
  %v950 = vsel %vm149, %v924, 0.0
  %v951 = vrot.slane %v950, 4
  %v952 = vadd.f32 %v950, %v951
  %v953 = vrot.slane %v952, 2
  %v954 = vadd.f32 %v952, %v953
  %v955 = vrot.slane %v954, 1
  %v956 = vadd.f32 %v954, %v955
  %v957 = vsel %vm149, %v925, 0.0
  %v958 = vrot.slane %v957, 4
  %v959 = vadd.f32 %v957, %v958
  %v960 = vrot.slane %v959, 2
  %v961 = vadd.f32 %v959, %v960
  %v962 = vrot.slane %v961, 1
  %v963 = vadd.f32 %v961, %v962
  %v964 = vsel %vm149, %v926, 0.0
  %v965 = vrot.slane %v964, 4
  %v966 = vadd.f32 %v964, %v965
  %v967 = vrot.slane %v966, 2
  %v968 = vadd.f32 %v966, %v967
  %v969 = vrot.slane %v968, 1
  %v970 = vadd.f32 %v968, %v969
  %v971 = vsel %vm149, %v927, 0.0
  %v972 = vrot.slane %v971, 4
  %v973 = vadd.f32 %v971, %v972
  %v974 = vrot.slane %v973, 2
  %v975 = vadd.f32 %v973, %v974
  %v976 = vrot.slane %v975, 1
  %v977 = vadd.f32 %v975, %v976
  %v978 = vsel %vm149, %v928, 0.0
  %v979 = vrot.slane %v978, 4
  %v980 = vadd.f32 %v978, %v979
  %v981 = vrot.slane %v980, 2
  %v982 = vadd.f32 %v980, %v981
  %v983 = vrot.slane %v982, 1
  %v984 = vadd.f32 %v982, %v983
  %v985 = vadd.f32 %v883, %v935
  %v986 = vadd.f32 %v884, %v942
  %v987 = vadd.f32 %v885, %v949
  %v988 = vadd.f32 %v886, %v956
  %v989 = vadd.f32 %v887, %v963
  %v990 = vadd.f32 %v888, %v970
  %v991 = vadd.f32 %v889, %v977
  %v992 = vadd.f32 %v890, %v984
  %s993 = scalar_lea.vmem %s1, 32
  %v994 = vld [vmem:[%s993] sm:$0xf]
  %v995 = vperm.slane %v994, 0
  %v996 = vlaneseq
  %v997 = vshrl.u32 %v996, 7
  %999 = vset.pattern.permute.xlu0 %v997
  %1000 = vperm.xlu0 %999, %v995
  %v1001 = vpop.permute.xlu0 %1000
  %v1002 = vperm.slane %v994, 1
  %v1003 = vlaneseq
  %v1004 = vshrl.u32 %v1003, 7
  %1006 = vset.pattern.permute.xlu0 %v1004
  %1007 = vperm.xlu0 %1006, %v1002
  %v1008 = vpop.permute.xlu0 %1007
  %v1009 = vperm.slane %v994, 2
  %v1010 = vlaneseq
  %v1011 = vshrl.u32 %v1010, 7
  %1013 = vset.pattern.permute.xlu0 %v1011
  %1014 = vperm.xlu0 %1013, %v1009
  %v1015 = vpop.permute.xlu0 %1014
  %v1016 = vperm.slane %v994, 3
  %v1017 = vlaneseq
  %v1018 = vshrl.u32 %v1017, 7
  %1020 = vset.pattern.permute.xlu0 %v1018
  %1021 = vperm.xlu0 %1020, %v1016
  %v1022 = vpop.permute.xlu0 %1021
  %v1023 = vmul.f32 %v1001, %v787
  %v1024 = vmul.f32 %v1001, %v788
  %v1025 = vmul.f32 %v1008, %v787
  %v1026 = vmul.f32 %v1008, %v788
  %v1027 = vmul.f32 %v1015, %v787
  %v1028 = vmul.f32 %v1015, %v788
  %v1029 = vmul.f32 %v1022, %v787
  %v1030 = vmul.f32 %v1022, %v788
  %v1031 = vsel %vm149, %v1023, 0.0
  %v1032 = vrot.slane %v1031, 4
  %v1033 = vadd.f32 %v1031, %v1032
  %v1034 = vrot.slane %v1033, 2
  %v1035 = vadd.f32 %v1033, %v1034
  %v1036 = vrot.slane %v1035, 1
  %v1037 = vadd.f32 %v1035, %v1036
  %v1038 = vsel %vm149, %v1024, 0.0
  %v1039 = vrot.slane %v1038, 4
  %v1040 = vadd.f32 %v1038, %v1039
  %v1041 = vrot.slane %v1040, 2
  %v1042 = vadd.f32 %v1040, %v1041
  %v1043 = vrot.slane %v1042, 1
  %v1044 = vadd.f32 %v1042, %v1043
  %v1045 = vsel %vm149, %v1025, 0.0
  %v1046 = vrot.slane %v1045, 4
  %v1047 = vadd.f32 %v1045, %v1046
  %v1048 = vrot.slane %v1047, 2
  %v1049 = vadd.f32 %v1047, %v1048
  %v1050 = vrot.slane %v1049, 1
  %v1051 = vadd.f32 %v1049, %v1050
  %v1052 = vsel %vm149, %v1026, 0.0
  %v1053 = vrot.slane %v1052, 4
  %v1054 = vadd.f32 %v1052, %v1053
  %v1055 = vrot.slane %v1054, 2
  %v1056 = vadd.f32 %v1054, %v1055
  %v1057 = vrot.slane %v1056, 1
  %v1058 = vadd.f32 %v1056, %v1057
  %v1059 = vsel %vm149, %v1027, 0.0
  %v1060 = vrot.slane %v1059, 4
  %v1061 = vadd.f32 %v1059, %v1060
  %v1062 = vrot.slane %v1061, 2
  %v1063 = vadd.f32 %v1061, %v1062
  %v1064 = vrot.slane %v1063, 1
  %v1065 = vadd.f32 %v1063, %v1064
  %v1066 = vsel %vm149, %v1028, 0.0
  %v1067 = vrot.slane %v1066, 4
  %v1068 = vadd.f32 %v1066, %v1067
  %v1069 = vrot.slane %v1068, 2
  %v1070 = vadd.f32 %v1068, %v1069
  %v1071 = vrot.slane %v1070, 1
  %v1072 = vadd.f32 %v1070, %v1071
  %v1073 = vsel %vm149, %v1029, 0.0
  %v1074 = vrot.slane %v1073, 4
  %v1075 = vadd.f32 %v1073, %v1074
  %v1076 = vrot.slane %v1075, 2
  %v1077 = vadd.f32 %v1075, %v1076
  %v1078 = vrot.slane %v1077, 1
  %v1079 = vadd.f32 %v1077, %v1078
  %v1080 = vsel %vm149, %v1030, 0.0
  %v1081 = vrot.slane %v1080, 4
  %v1082 = vadd.f32 %v1080, %v1081
  %v1083 = vrot.slane %v1082, 2
  %v1084 = vadd.f32 %v1082, %v1083
  %v1085 = vrot.slane %v1084, 1
  %v1086 = vadd.f32 %v1084, %v1085
  %v1087 = vadd.f32 %v985, %v1037
  %v1088 = vadd.f32 %v986, %v1044
  %v1089 = vadd.f32 %v987, %v1051
  %v1090 = vadd.f32 %v988, %v1058
  %v1091 = vadd.f32 %v989, %v1065
  %v1092 = vadd.f32 %v990, %v1072
  %v1093 = vadd.f32 %v991, %v1079
  %v1094 = vadd.f32 %v992, %v1086
  %vm1103 = vcmask 1041409
  %v1104 = vsel %vm1103, %v1089, %v1087
  %vm1105 = vcmask 1042434
  %v1106 = vsel %vm1105, %v1091, %v1104
  %vm1107 = vcmask 1043459
  %v1108 = vsel %vm1107, %v1093, %v1106
  %v1109 = vsel %vm1103, %v1090, %v1088
  %v1110 = vsel %vm1105, %v1092, %v1109
  %v1111 = vsel %vm1107, %v1094, %v1110
  %v1114 = vsel %vm149, %v1108, 0.0
  %v1115 = vsel %vm149, %v1111, 0.0
  %v1116 = vadd.f32 %v1114, %v1115
  %1117 = vadd.xlane.f32.xlu0 %v1116
  %v1118 = vpop.xlane.xlu0 %1117
  %v1119 = vmul.f32 %v1118, 0.00390625
  %v1121 = vrot.slane %v1119, 1
  %v1122 = vrot.slane %v1119, 2
  %v1123 = vrot.slane %v1119, 3
  %v1128 = vsub.f32 %v1087, %v1119
  %v1129 = vsub.f32 %v1088, %v1119
  %v1130 = vsub.f32 %v1089, %v1121
  %v1131 = vsub.f32 %v1090, %v1121
  %v1132 = vsub.f32 %v1091, %v1122
  %v1133 = vsub.f32 %v1092, %v1122
  %v1134 = vsub.f32 %v1093, %v1123
  %v1135 = vsub.f32 %v1094, %v1123
  %v1136 = vmul.f32 %v1128, %v1128
  %v1137 = vmul.f32 %v1129, %v1129
  %v1138 = vmul.f32 %v1130, %v1130
  %v1139 = vmul.f32 %v1131, %v1131
  %v1140 = vmul.f32 %v1132, %v1132
  %v1141 = vmul.f32 %v1133, %v1133
  %v1142 = vmul.f32 %v1134, %v1134
  %v1143 = vmul.f32 %v1135, %v1135
  %v1152 = vrot.slane %v1138, 7
  %v1153 = vsel %vm1103, %v1152, %v1136
  %v1154 = vrot.slane %v1140, 6
  %v1155 = vsel %vm1105, %v1154, %v1153
  %v1156 = vrot.slane %v1142, 5
  %v1157 = vsel %vm1107, %v1156, %v1155
  %v1158 = vrot.slane %v1139, 7
  %v1159 = vsel %vm1103, %v1158, %v1137
  %v1160 = vrot.slane %v1141, 6
  %v1161 = vsel %vm1105, %v1160, %v1159
  %v1162 = vrot.slane %v1143, 5
  %v1163 = vsel %vm1107, %v1162, %v1161
  %v1166 = vsel %vm149, %v1157, 0.0
  %v1167 = vsel %vm149, %v1163, 0.0
  %v1168 = vadd.f32 %v1166, %v1167
  %1169 = vadd.xlane.f32.xlu0 %v1168
  %v1170 = vpop.xlane.xlu0 %1169
  %v1171 = vmul.f32 %v1170, 0.00390625
  %v1172 = vadd.f32 %v1171, 1e-05
  %v1173 = vrsqrt.pop %v1172
  %v1174 = vmul.f32 %v1173, %v1172
  %v1175 = vmul.f32 %v1174, %v1173
  %v1176 = vmul.f32 0.5, %v1175
  %v1177 = vsub.f32 1.5, %v1176
  %v1178 = vmul.f32 %v1173, %v1177
  %vm1179 = vweird.f32 %v1172
  %vm1180 = vweird.f32 %v1173
  %vm1181 = vmor %vm1179, %vm1180
  %v1182 = vsel %vm1181, %v1173, %v1178
  %v1184 = vrot.slane %v1182, 1
  %v1185 = vrot.slane %v1182, 2
  %v1186 = vrot.slane %v1182, 3
  %v1191 = vmul.f32 %v1128, %v1182
  %v1192 = vmul.f32 %v1129, %v1182
  %v1193 = vmul.f32 %v1130, %v1184
  %v1194 = vmul.f32 %v1131, %v1184
  %v1195 = vmul.f32 %v1132, %v1185
  %v1196 = vmul.f32 %v1133, %v1185
  %v1197 = vmul.f32 %v1134, %v1186
  %v1198 = vmul.f32 %v1135, %v1186
  %v1199 = vmax.f32 %v1191, 0.0
  %v1200 = vmax.f32 %v1192, 0.0
  %v1201 = vmax.f32 %v1193, 0.0
  %v1202 = vmax.f32 %v1194, 0.0
  %v1203 = vmax.f32 %v1195, 0.0
  %v1204 = vmax.f32 %v1196, 0.0
  %v1205 = vmax.f32 %v1197, 0.0
  %v1206 = vmax.f32 %v1198, 0.0
  %v1215 = vrot.slane %v1201, 7
  %v1216 = vsel %vm1103, %v1215, %v1199
  %v1217 = vrot.slane %v1203, 6
  %v1218 = vsel %vm1105, %v1217, %v1216
  %v1219 = vrot.slane %v1205, 5
  %v1220 = vsel %vm1107, %v1219, %v1218
  %v1221 = vrot.slane %v1202, 7
  %v1222 = vsel %vm1103, %v1221, %v1200
  %v1223 = vrot.slane %v1204, 6
  %v1224 = vsel %vm1105, %v1223, %v1222
  %v1225 = vrot.slane %v1206, 5
  %v1226 = vsel %vm1107, %v1225, %v1224
  %1229 = vrot.lane.b32.xlu0 %v1220, 16
  %v1230 = vpop.permute.xlu0 %1229
  %1231 = vrot.lane.b32.xlu0 %v1226, 16
  %v1232 = vpop.permute.xlu0 %1231
  %v1233 = vsel %vm45, %v1230, %v1232
  %v1234 = vsel %vm45, %v1232, %v1230
  %1235 = vrot.lane.b32.xlu0 %v1220, 112
  %v1236 = vpop.permute.xlu0 %1235
  %1237 = vrot.lane.b32.xlu0 %v1226, 112
  %v1238 = vpop.permute.xlu0 %1237
  %v1239 = vsel %vm71, %v1236, %v1238
  %v1240 = vsel %vm71, %v1238, %v1236
  %v1241 = vsel %vm76, %v1239, %v1234
  %v1242 = vsel %vm77, %v1240, %v1233
  %v1243 = vsel %vm82, %v1234, %v1239
  %v1244 = vsel %vm83, %v1233, %v1240
  %1245 = vrot.lane.b32.xlu0 %v1241, 1
  %v1246 = vpop.permute.xlu0 %1245
  %1247 = vrot.lane.b32.xlu0 %v1242, 1
  %v1248 = vpop.permute.xlu0 %1247
  %v1249 = vsel %vm90, %v1246, %v1248
  %v1250 = vsel %vm90, %v1248, %v1246
  %1251 = vrot.lane.b32.xlu0 %v1241, 127
  %v1252 = vpop.permute.xlu0 %1251
  %1253 = vrot.lane.b32.xlu0 %v1242, 127
  %v1254 = vpop.permute.xlu0 %1253
  %v1255 = vsel %vm97, %v1252, %v1254
  %v1256 = vsel %vm97, %v1254, %v1252
  %v1257 = vsel %vm102, %v1255, %v1250
  %v1258 = vsel %vm103, %v1256, %v1249
  %v1259 = vsel %vm108, %v1250, %v1255
  %v1260 = vsel %vm109, %v1249, %v1256
  %v1261 = vld [vmem:[%s2] sm:$0xf]
  %v1262 = vperm.slane %v1261, 0
  %v1263 = vlaneseq
  %v1264 = vshrl.u32 %v1263, 7
  %1266 = vset.pattern.permute.xlu0 %v1264
  %1267 = vperm.xlu0 %1266, %v1262
  %v1268 = vpop.permute.xlu0 %1267
  %v1269 = vperm.slane %v1261, 1
  %v1270 = vlaneseq
  %v1271 = vshrl.u32 %v1270, 7
  %1273 = vset.pattern.permute.xlu0 %v1271
  %1274 = vperm.xlu0 %1273, %v1269
  %v1275 = vpop.permute.xlu0 %1274
  %v1276 = vperm.slane %v1261, 2
  %v1277 = vlaneseq
  %v1278 = vshrl.u32 %v1277, 7
  %1280 = vset.pattern.permute.xlu0 %v1278
  %1281 = vperm.xlu0 %1280, %v1276
  %v1282 = vpop.permute.xlu0 %1281
  %v1283 = vperm.slane %v1261, 3
  %v1284 = vlaneseq
  %v1285 = vshrl.u32 %v1284, 7
  %1287 = vset.pattern.permute.xlu0 %v1285
  %1288 = vperm.xlu0 %1287, %v1283
  %v1289 = vpop.permute.xlu0 %1288
  %v1290 = vmul.f32 %v1268, %v1257
  %v1291 = vmul.f32 %v1268, %v1258
  %v1292 = vmul.f32 %v1275, %v1257
  %v1293 = vmul.f32 %v1275, %v1258
  %v1294 = vmul.f32 %v1282, %v1257
  %v1295 = vmul.f32 %v1282, %v1258
  %v1296 = vmul.f32 %v1289, %v1257
  %v1297 = vmul.f32 %v1289, %v1258
  %v1298 = vsel %vm149, %v1290, 0.0
  %v1299 = vrot.slane %v1298, 4
  %v1300 = vadd.f32 %v1298, %v1299
  %v1301 = vrot.slane %v1300, 2
  %v1302 = vadd.f32 %v1300, %v1301
  %v1303 = vrot.slane %v1302, 1
  %v1304 = vadd.f32 %v1302, %v1303
  %v1305 = vsel %vm149, %v1291, 0.0
  %v1306 = vrot.slane %v1305, 4
  %v1307 = vadd.f32 %v1305, %v1306
  %v1308 = vrot.slane %v1307, 2
  %v1309 = vadd.f32 %v1307, %v1308
  %v1310 = vrot.slane %v1309, 1
  %v1311 = vadd.f32 %v1309, %v1310
  %v1312 = vsel %vm149, %v1292, 0.0
  %v1313 = vrot.slane %v1312, 4
  %v1314 = vadd.f32 %v1312, %v1313
  %v1315 = vrot.slane %v1314, 2
  %v1316 = vadd.f32 %v1314, %v1315
  %v1317 = vrot.slane %v1316, 1
  %v1318 = vadd.f32 %v1316, %v1317
  %v1319 = vsel %vm149, %v1293, 0.0
  %v1320 = vrot.slane %v1319, 4
  %v1321 = vadd.f32 %v1319, %v1320
  %v1322 = vrot.slane %v1321, 2
  %v1323 = vadd.f32 %v1321, %v1322
  %v1324 = vrot.slane %v1323, 1
  %v1325 = vadd.f32 %v1323, %v1324
  %v1326 = vsel %vm149, %v1294, 0.0
  %v1327 = vrot.slane %v1326, 4
  %v1328 = vadd.f32 %v1326, %v1327
  %v1329 = vrot.slane %v1328, 2
  %v1330 = vadd.f32 %v1328, %v1329
  %v1331 = vrot.slane %v1330, 1
  %v1332 = vadd.f32 %v1330, %v1331
  %v1333 = vsel %vm149, %v1295, 0.0
  %v1334 = vrot.slane %v1333, 4
  %v1335 = vadd.f32 %v1333, %v1334
  %v1336 = vrot.slane %v1335, 2
  %v1337 = vadd.f32 %v1335, %v1336
  %v1338 = vrot.slane %v1337, 1
  %v1339 = vadd.f32 %v1337, %v1338
  %v1340 = vsel %vm149, %v1296, 0.0
  %v1341 = vrot.slane %v1340, 4
  %v1342 = vadd.f32 %v1340, %v1341
  %v1343 = vrot.slane %v1342, 2
  %v1344 = vadd.f32 %v1342, %v1343
  %v1345 = vrot.slane %v1344, 1
  %v1346 = vadd.f32 %v1344, %v1345
  %v1347 = vsel %vm149, %v1297, 0.0
  %v1348 = vrot.slane %v1347, 4
  %v1349 = vadd.f32 %v1347, %v1348
  %v1350 = vrot.slane %v1349, 2
  %v1351 = vadd.f32 %v1349, %v1350
  %v1352 = vrot.slane %v1351, 1
  %v1353 = vadd.f32 %v1351, %v1352
  %v1354 = vadd.f32 %v1304, 0.0
  %v1355 = vadd.f32 %v1311, 0.0
  %v1356 = vadd.f32 %v1318, 0.0
  %v1357 = vadd.f32 %v1325, 0.0
  %v1358 = vadd.f32 %v1332, 0.0
  %v1359 = vadd.f32 %v1339, 0.0
  %v1360 = vadd.f32 %v1346, 0.0
  %v1361 = vadd.f32 %v1353, 0.0
  %s1362 = scalar_lea.vmem %s2, 4
  %v1363 = vld [vmem:[%s1362] sm:$0xf]
  %v1364 = vperm.slane %v1363, 0
  %v1365 = vlaneseq
  %v1366 = vshrl.u32 %v1365, 7
  %1368 = vset.pattern.permute.xlu0 %v1366
  %1369 = vperm.xlu0 %1368, %v1364
  %v1370 = vpop.permute.xlu0 %1369
  %v1371 = vperm.slane %v1363, 1
  %v1372 = vlaneseq
  %v1373 = vshrl.u32 %v1372, 7
  %1375 = vset.pattern.permute.xlu0 %v1373
  %1376 = vperm.xlu0 %1375, %v1371
  %v1377 = vpop.permute.xlu0 %1376
  %v1378 = vperm.slane %v1363, 2
  %v1379 = vlaneseq
  %v1380 = vshrl.u32 %v1379, 7
  %1382 = vset.pattern.permute.xlu0 %v1380
  %1383 = vperm.xlu0 %1382, %v1378
  %v1384 = vpop.permute.xlu0 %1383
  %v1385 = vperm.slane %v1363, 3
  %v1386 = vlaneseq
  %v1387 = vshrl.u32 %v1386, 7
  %1389 = vset.pattern.permute.xlu0 %v1387
  %1390 = vperm.xlu0 %1389, %v1385
  %v1391 = vpop.permute.xlu0 %1390
  %v1392 = vmul.f32 %v1370, %v1241
  %v1393 = vmul.f32 %v1370, %v1242
  %v1394 = vmul.f32 %v1377, %v1241
  %v1395 = vmul.f32 %v1377, %v1242
  %v1396 = vmul.f32 %v1384, %v1241
  %v1397 = vmul.f32 %v1384, %v1242
  %v1398 = vmul.f32 %v1391, %v1241
  %v1399 = vmul.f32 %v1391, %v1242
  %v1400 = vsel %vm149, %v1392, 0.0
  %v1401 = vrot.slane %v1400, 4
  %v1402 = vadd.f32 %v1400, %v1401
  %v1403 = vrot.slane %v1402, 2
  %v1404 = vadd.f32 %v1402, %v1403
  %v1405 = vrot.slane %v1404, 1
  %v1406 = vadd.f32 %v1404, %v1405
  %v1407 = vsel %vm149, %v1393, 0.0
  %v1408 = vrot.slane %v1407, 4
  %v1409 = vadd.f32 %v1407, %v1408
  %v1410 = vrot.slane %v1409, 2
  %v1411 = vadd.f32 %v1409, %v1410
  %v1412 = vrot.slane %v1411, 1
  %v1413 = vadd.f32 %v1411, %v1412
  %v1414 = vsel %vm149, %v1394, 0.0
  %v1415 = vrot.slane %v1414, 4
  %v1416 = vadd.f32 %v1414, %v1415
  %v1417 = vrot.slane %v1416, 2
  %v1418 = vadd.f32 %v1416, %v1417
  %v1419 = vrot.slane %v1418, 1
  %v1420 = vadd.f32 %v1418, %v1419
  %v1421 = vsel %vm149, %v1395, 0.0
  %v1422 = vrot.slane %v1421, 4
  %v1423 = vadd.f32 %v1421, %v1422
  %v1424 = vrot.slane %v1423, 2
  %v1425 = vadd.f32 %v1423, %v1424
  %v1426 = vrot.slane %v1425, 1
  %v1427 = vadd.f32 %v1425, %v1426
  %v1428 = vsel %vm149, %v1396, 0.0
  %v1429 = vrot.slane %v1428, 4
  %v1430 = vadd.f32 %v1428, %v1429
  %v1431 = vrot.slane %v1430, 2
  %v1432 = vadd.f32 %v1430, %v1431
  %v1433 = vrot.slane %v1432, 1
  %v1434 = vadd.f32 %v1432, %v1433
  %v1435 = vsel %vm149, %v1397, 0.0
  %v1436 = vrot.slane %v1435, 4
  %v1437 = vadd.f32 %v1435, %v1436
  %v1438 = vrot.slane %v1437, 2
  %v1439 = vadd.f32 %v1437, %v1438
  %v1440 = vrot.slane %v1439, 1
  %v1441 = vadd.f32 %v1439, %v1440
  %v1442 = vsel %vm149, %v1398, 0.0
  %v1443 = vrot.slane %v1442, 4
  %v1444 = vadd.f32 %v1442, %v1443
  %v1445 = vrot.slane %v1444, 2
  %v1446 = vadd.f32 %v1444, %v1445
  %v1447 = vrot.slane %v1446, 1
  %v1448 = vadd.f32 %v1446, %v1447
  %v1449 = vsel %vm149, %v1399, 0.0
  %v1450 = vrot.slane %v1449, 4
  %v1451 = vadd.f32 %v1449, %v1450
  %v1452 = vrot.slane %v1451, 2
  %v1453 = vadd.f32 %v1451, %v1452
  %v1454 = vrot.slane %v1453, 1
  %v1455 = vadd.f32 %v1453, %v1454
  %v1456 = vadd.f32 %v1354, %v1406
  %v1457 = vadd.f32 %v1355, %v1413
  %v1458 = vadd.f32 %v1356, %v1420
  %v1459 = vadd.f32 %v1357, %v1427
  %v1460 = vadd.f32 %v1358, %v1434
  %v1461 = vadd.f32 %v1359, %v1441
  %v1462 = vadd.f32 %v1360, %v1448
  %v1463 = vadd.f32 %v1361, %v1455
  %s1464 = scalar_lea.vmem %s2, 8
  %v1465 = vld [vmem:[%s1464] sm:$0xf]
  %v1466 = vperm.slane %v1465, 0
  %v1467 = vlaneseq
  %v1468 = vshrl.u32 %v1467, 7
  %1470 = vset.pattern.permute.xlu0 %v1468
  %1471 = vperm.xlu0 %1470, %v1466
  %v1472 = vpop.permute.xlu0 %1471
  %v1473 = vperm.slane %v1465, 1
  %v1474 = vlaneseq
  %v1475 = vshrl.u32 %v1474, 7
  %1477 = vset.pattern.permute.xlu0 %v1475
  %1478 = vperm.xlu0 %1477, %v1473
  %v1479 = vpop.permute.xlu0 %1478
  %v1480 = vperm.slane %v1465, 2
  %v1481 = vlaneseq
  %v1482 = vshrl.u32 %v1481, 7
  %1484 = vset.pattern.permute.xlu0 %v1482
  %1485 = vperm.xlu0 %1484, %v1480
  %v1486 = vpop.permute.xlu0 %1485
  %v1487 = vperm.slane %v1465, 3
  %v1488 = vlaneseq
  %v1489 = vshrl.u32 %v1488, 7
  %1491 = vset.pattern.permute.xlu0 %v1489
  %1492 = vperm.xlu0 %1491, %v1487
  %v1493 = vpop.permute.xlu0 %1492
  %v1494 = vmul.f32 %v1472, %v1259
  %v1495 = vmul.f32 %v1472, %v1260
  %v1496 = vmul.f32 %v1479, %v1259
  %v1497 = vmul.f32 %v1479, %v1260
  %v1498 = vmul.f32 %v1486, %v1259
  %v1499 = vmul.f32 %v1486, %v1260
  %v1500 = vmul.f32 %v1493, %v1259
  %v1501 = vmul.f32 %v1493, %v1260
  %v1502 = vsel %vm149, %v1494, 0.0
  %v1503 = vrot.slane %v1502, 4
  %v1504 = vadd.f32 %v1502, %v1503
  %v1505 = vrot.slane %v1504, 2
  %v1506 = vadd.f32 %v1504, %v1505
  %v1507 = vrot.slane %v1506, 1
  %v1508 = vadd.f32 %v1506, %v1507
  %v1509 = vsel %vm149, %v1495, 0.0
  %v1510 = vrot.slane %v1509, 4
  %v1511 = vadd.f32 %v1509, %v1510
  %v1512 = vrot.slane %v1511, 2
  %v1513 = vadd.f32 %v1511, %v1512
  %v1514 = vrot.slane %v1513, 1
  %v1515 = vadd.f32 %v1513, %v1514
  %v1516 = vsel %vm149, %v1496, 0.0
  %v1517 = vrot.slane %v1516, 4
  %v1518 = vadd.f32 %v1516, %v1517
  %v1519 = vrot.slane %v1518, 2
  %v1520 = vadd.f32 %v1518, %v1519
  %v1521 = vrot.slane %v1520, 1
  %v1522 = vadd.f32 %v1520, %v1521
  %v1523 = vsel %vm149, %v1497, 0.0
  %v1524 = vrot.slane %v1523, 4
  %v1525 = vadd.f32 %v1523, %v1524
  %v1526 = vrot.slane %v1525, 2
  %v1527 = vadd.f32 %v1525, %v1526
  %v1528 = vrot.slane %v1527, 1
  %v1529 = vadd.f32 %v1527, %v1528
  %v1530 = vsel %vm149, %v1498, 0.0
  %v1531 = vrot.slane %v1530, 4
  %v1532 = vadd.f32 %v1530, %v1531
  %v1533 = vrot.slane %v1532, 2
  %v1534 = vadd.f32 %v1532, %v1533
  %v1535 = vrot.slane %v1534, 1
  %v1536 = vadd.f32 %v1534, %v1535
  %v1537 = vsel %vm149, %v1499, 0.0
  %v1538 = vrot.slane %v1537, 4
  %v1539 = vadd.f32 %v1537, %v1538
  %v1540 = vrot.slane %v1539, 2
  %v1541 = vadd.f32 %v1539, %v1540
  %v1542 = vrot.slane %v1541, 1
  %v1543 = vadd.f32 %v1541, %v1542
  %v1544 = vsel %vm149, %v1500, 0.0
  %v1545 = vrot.slane %v1544, 4
  %v1546 = vadd.f32 %v1544, %v1545
  %v1547 = vrot.slane %v1546, 2
  %v1548 = vadd.f32 %v1546, %v1547
  %v1549 = vrot.slane %v1548, 1
  %v1550 = vadd.f32 %v1548, %v1549
  %v1551 = vsel %vm149, %v1501, 0.0
  %v1552 = vrot.slane %v1551, 4
  %v1553 = vadd.f32 %v1551, %v1552
  %v1554 = vrot.slane %v1553, 2
  %v1555 = vadd.f32 %v1553, %v1554
  %v1556 = vrot.slane %v1555, 1
  %v1557 = vadd.f32 %v1555, %v1556
  %v1558 = vadd.f32 %v1456, %v1508
  %v1559 = vadd.f32 %v1457, %v1515
  %v1560 = vadd.f32 %v1458, %v1522
  %v1561 = vadd.f32 %v1459, %v1529
  %v1562 = vadd.f32 %v1460, %v1536
  %v1563 = vadd.f32 %v1461, %v1543
  %v1564 = vadd.f32 %v1462, %v1550
  %v1565 = vadd.f32 %v1463, %v1557
  %1566 = vrot.lane.b32.xlu0 %v1220, 1
  %v1567 = vpop.permute.xlu0 %1566
  %1568 = vrot.lane.b32.xlu0 %v1226, 1
  %v1569 = vpop.permute.xlu0 %1568
  %v1570 = vsel %vm90, %v1567, %v1569
  %v1571 = vsel %vm90, %v1569, %v1567
  %1572 = vrot.lane.b32.xlu0 %v1220, 127
  %v1573 = vpop.permute.xlu0 %1572
  %1574 = vrot.lane.b32.xlu0 %v1226, 127
  %v1575 = vpop.permute.xlu0 %1574
  %v1576 = vsel %vm97, %v1573, %v1575
  %v1577 = vsel %vm97, %v1575, %v1573
  %v1578 = vsel %vm102, %v1576, %v1571
  %v1579 = vsel %vm103, %v1577, %v1570
  %v1580 = vsel %vm108, %v1571, %v1576
  %v1581 = vsel %vm109, %v1570, %v1577
  %s1582 = scalar_lea.vmem %s2, 12
  %v1583 = vld [vmem:[%s1582] sm:$0xf]
  %v1584 = vperm.slane %v1583, 0
  %v1585 = vlaneseq
  %v1586 = vshrl.u32 %v1585, 7
  %1588 = vset.pattern.permute.xlu0 %v1586
  %1589 = vperm.xlu0 %1588, %v1584
  %v1590 = vpop.permute.xlu0 %1589
  %v1591 = vperm.slane %v1583, 1
  %v1592 = vlaneseq
  %v1593 = vshrl.u32 %v1592, 7
  %1595 = vset.pattern.permute.xlu0 %v1593
  %1596 = vperm.xlu0 %1595, %v1591
  %v1597 = vpop.permute.xlu0 %1596
  %v1598 = vperm.slane %v1583, 2
  %v1599 = vlaneseq
  %v1600 = vshrl.u32 %v1599, 7
  %1602 = vset.pattern.permute.xlu0 %v1600
  %1603 = vperm.xlu0 %1602, %v1598
  %v1604 = vpop.permute.xlu0 %1603
  %v1605 = vperm.slane %v1583, 3
  %v1606 = vlaneseq
  %v1607 = vshrl.u32 %v1606, 7
  %1609 = vset.pattern.permute.xlu0 %v1607
  %1610 = vperm.xlu0 %1609, %v1605
  %v1611 = vpop.permute.xlu0 %1610
  %v1612 = vmul.f32 %v1590, %v1578
  %v1613 = vmul.f32 %v1590, %v1579
  %v1614 = vmul.f32 %v1597, %v1578
  %v1615 = vmul.f32 %v1597, %v1579
  %v1616 = vmul.f32 %v1604, %v1578
  %v1617 = vmul.f32 %v1604, %v1579
  %v1618 = vmul.f32 %v1611, %v1578
  %v1619 = vmul.f32 %v1611, %v1579
  %v1620 = vsel %vm149, %v1612, 0.0
  %v1621 = vrot.slane %v1620, 4
  %v1622 = vadd.f32 %v1620, %v1621
  %v1623 = vrot.slane %v1622, 2
  %v1624 = vadd.f32 %v1622, %v1623
  %v1625 = vrot.slane %v1624, 1
  %v1626 = vadd.f32 %v1624, %v1625
  %v1627 = vsel %vm149, %v1613, 0.0
  %v1628 = vrot.slane %v1627, 4
  %v1629 = vadd.f32 %v1627, %v1628
  %v1630 = vrot.slane %v1629, 2
  %v1631 = vadd.f32 %v1629, %v1630
  %v1632 = vrot.slane %v1631, 1
  %v1633 = vadd.f32 %v1631, %v1632
  %v1634 = vsel %vm149, %v1614, 0.0
  %v1635 = vrot.slane %v1634, 4
  %v1636 = vadd.f32 %v1634, %v1635
  %v1637 = vrot.slane %v1636, 2
  %v1638 = vadd.f32 %v1636, %v1637
  %v1639 = vrot.slane %v1638, 1
  %v1640 = vadd.f32 %v1638, %v1639
  %v1641 = vsel %vm149, %v1615, 0.0
  %v1642 = vrot.slane %v1641, 4
  %v1643 = vadd.f32 %v1641, %v1642
  %v1644 = vrot.slane %v1643, 2
  %v1645 = vadd.f32 %v1643, %v1644
  %v1646 = vrot.slane %v1645, 1
  %v1647 = vadd.f32 %v1645, %v1646
  %v1648 = vsel %vm149, %v1616, 0.0
  %v1649 = vrot.slane %v1648, 4
  %v1650 = vadd.f32 %v1648, %v1649
  %v1651 = vrot.slane %v1650, 2
  %v1652 = vadd.f32 %v1650, %v1651
  %v1653 = vrot.slane %v1652, 1
  %v1654 = vadd.f32 %v1652, %v1653
  %v1655 = vsel %vm149, %v1617, 0.0
  %v1656 = vrot.slane %v1655, 4
  %v1657 = vadd.f32 %v1655, %v1656
  %v1658 = vrot.slane %v1657, 2
  %v1659 = vadd.f32 %v1657, %v1658
  %v1660 = vrot.slane %v1659, 1
  %v1661 = vadd.f32 %v1659, %v1660
  %v1662 = vsel %vm149, %v1618, 0.0
  %v1663 = vrot.slane %v1662, 4
  %v1664 = vadd.f32 %v1662, %v1663
  %v1665 = vrot.slane %v1664, 2
  %v1666 = vadd.f32 %v1664, %v1665
  %v1667 = vrot.slane %v1666, 1
  %v1668 = vadd.f32 %v1666, %v1667
  %v1669 = vsel %vm149, %v1619, 0.0
  %v1670 = vrot.slane %v1669, 4
  %v1671 = vadd.f32 %v1669, %v1670
  %v1672 = vrot.slane %v1671, 2
  %v1673 = vadd.f32 %v1671, %v1672
  %v1674 = vrot.slane %v1673, 1
  %v1675 = vadd.f32 %v1673, %v1674
  %v1676 = vadd.f32 %v1558, %v1626
  %v1677 = vadd.f32 %v1559, %v1633
  %v1678 = vadd.f32 %v1560, %v1640
  %v1679 = vadd.f32 %v1561, %v1647
  %v1680 = vadd.f32 %v1562, %v1654
  %v1681 = vadd.f32 %v1563, %v1661
  %v1682 = vadd.f32 %v1564, %v1668
  %v1683 = vadd.f32 %v1565, %v1675
  %s1684 = scalar_lea.vmem %s2, 16
  %v1685 = vld [vmem:[%s1684] sm:$0xf]
  %v1686 = vperm.slane %v1685, 0
  %v1687 = vlaneseq
  %v1688 = vshrl.u32 %v1687, 7
  %1690 = vset.pattern.permute.xlu0 %v1688
  %1691 = vperm.xlu0 %1690, %v1686
  %v1692 = vpop.permute.xlu0 %1691
  %v1693 = vperm.slane %v1685, 1
  %v1694 = vlaneseq
  %v1695 = vshrl.u32 %v1694, 7
  %1697 = vset.pattern.permute.xlu0 %v1695
  %1698 = vperm.xlu0 %1697, %v1693
  %v1699 = vpop.permute.xlu0 %1698
  %v1700 = vperm.slane %v1685, 2
  %v1701 = vlaneseq
  %v1702 = vshrl.u32 %v1701, 7
  %1704 = vset.pattern.permute.xlu0 %v1702
  %1705 = vperm.xlu0 %1704, %v1700
  %v1706 = vpop.permute.xlu0 %1705
  %v1707 = vperm.slane %v1685, 3
  %v1708 = vlaneseq
  %v1709 = vshrl.u32 %v1708, 7
  %1711 = vset.pattern.permute.xlu0 %v1709
  %1712 = vperm.xlu0 %1711, %v1707
  %v1713 = vpop.permute.xlu0 %1712
  %v1714 = vmul.f32 %v1692, %v1220
  %v1715 = vmul.f32 %v1692, %v1226
  %v1716 = vmul.f32 %v1699, %v1220
  %v1717 = vmul.f32 %v1699, %v1226
  %v1718 = vmul.f32 %v1706, %v1220
  %v1719 = vmul.f32 %v1706, %v1226
  %v1720 = vmul.f32 %v1713, %v1220
  %v1721 = vmul.f32 %v1713, %v1226
  %v1722 = vsel %vm149, %v1714, 0.0
  %v1723 = vrot.slane %v1722, 4
  %v1724 = vadd.f32 %v1722, %v1723
  %v1725 = vrot.slane %v1724, 2
  %v1726 = vadd.f32 %v1724, %v1725
  %v1727 = vrot.slane %v1726, 1
  %v1728 = vadd.f32 %v1726, %v1727
  %v1729 = vsel %vm149, %v1715, 0.0
  %v1730 = vrot.slane %v1729, 4
  %v1731 = vadd.f32 %v1729, %v1730
  %v1732 = vrot.slane %v1731, 2
  %v1733 = vadd.f32 %v1731, %v1732
  %v1734 = vrot.slane %v1733, 1
  %v1735 = vadd.f32 %v1733, %v1734
  %v1736 = vsel %vm149, %v1716, 0.0
  %v1737 = vrot.slane %v1736, 4
  %v1738 = vadd.f32 %v1736, %v1737
  %v1739 = vrot.slane %v1738, 2
  %v1740 = vadd.f32 %v1738, %v1739
  %v1741 = vrot.slane %v1740, 1
  %v1742 = vadd.f32 %v1740, %v1741
  %v1743 = vsel %vm149, %v1717, 0.0
  %v1744 = vrot.slane %v1743, 4
  %v1745 = vadd.f32 %v1743, %v1744
  %v1746 = vrot.slane %v1745, 2
  %v1747 = vadd.f32 %v1745, %v1746
  %v1748 = vrot.slane %v1747, 1
  %v1749 = vadd.f32 %v1747, %v1748
  %v1750 = vsel %vm149, %v1718, 0.0
  %v1751 = vrot.slane %v1750, 4
  %v1752 = vadd.f32 %v1750, %v1751
  %v1753 = vrot.slane %v1752, 2
  %v1754 = vadd.f32 %v1752, %v1753
  %v1755 = vrot.slane %v1754, 1
  %v1756 = vadd.f32 %v1754, %v1755
  %v1757 = vsel %vm149, %v1719, 0.0
  %v1758 = vrot.slane %v1757, 4
  %v1759 = vadd.f32 %v1757, %v1758
  %v1760 = vrot.slane %v1759, 2
  %v1761 = vadd.f32 %v1759, %v1760
  %v1762 = vrot.slane %v1761, 1
  %v1763 = vadd.f32 %v1761, %v1762
  %v1764 = vsel %vm149, %v1720, 0.0
  %v1765 = vrot.slane %v1764, 4
  %v1766 = vadd.f32 %v1764, %v1765
  %v1767 = vrot.slane %v1766, 2
  %v1768 = vadd.f32 %v1766, %v1767
  %v1769 = vrot.slane %v1768, 1
  %v1770 = vadd.f32 %v1768, %v1769
  %v1771 = vsel %vm149, %v1721, 0.0
  %v1772 = vrot.slane %v1771, 4
  %v1773 = vadd.f32 %v1771, %v1772
  %v1774 = vrot.slane %v1773, 2
  %v1775 = vadd.f32 %v1773, %v1774
  %v1776 = vrot.slane %v1775, 1
  %v1777 = vadd.f32 %v1775, %v1776
  %v1778 = vadd.f32 %v1676, %v1728
  %v1779 = vadd.f32 %v1677, %v1735
  %v1780 = vadd.f32 %v1678, %v1742
  %v1781 = vadd.f32 %v1679, %v1749
  %v1782 = vadd.f32 %v1680, %v1756
  %v1783 = vadd.f32 %v1681, %v1763
  %v1784 = vadd.f32 %v1682, %v1770
  %v1785 = vadd.f32 %v1683, %v1777
  %s1786 = scalar_lea.vmem %s2, 20
  %v1787 = vld [vmem:[%s1786] sm:$0xf]
  %v1788 = vperm.slane %v1787, 0
  %v1789 = vlaneseq
  %v1790 = vshrl.u32 %v1789, 7
  %1792 = vset.pattern.permute.xlu0 %v1790
  %1793 = vperm.xlu0 %1792, %v1788
  %v1794 = vpop.permute.xlu0 %1793
  %v1795 = vperm.slane %v1787, 1
  %v1796 = vlaneseq
  %v1797 = vshrl.u32 %v1796, 7
  %1799 = vset.pattern.permute.xlu0 %v1797
  %1800 = vperm.xlu0 %1799, %v1795
  %v1801 = vpop.permute.xlu0 %1800
  %v1802 = vperm.slane %v1787, 2
  %v1803 = vlaneseq
  %v1804 = vshrl.u32 %v1803, 7
  %1806 = vset.pattern.permute.xlu0 %v1804
  %1807 = vperm.xlu0 %1806, %v1802
  %v1808 = vpop.permute.xlu0 %1807
  %v1809 = vperm.slane %v1787, 3
  %v1810 = vlaneseq
  %v1811 = vshrl.u32 %v1810, 7
  %1813 = vset.pattern.permute.xlu0 %v1811
  %1814 = vperm.xlu0 %1813, %v1809
  %v1815 = vpop.permute.xlu0 %1814
  %v1816 = vmul.f32 %v1794, %v1580
  %v1817 = vmul.f32 %v1794, %v1581
  %v1818 = vmul.f32 %v1801, %v1580
  %v1819 = vmul.f32 %v1801, %v1581
  %v1820 = vmul.f32 %v1808, %v1580
  %v1821 = vmul.f32 %v1808, %v1581
  %v1822 = vmul.f32 %v1815, %v1580
  %v1823 = vmul.f32 %v1815, %v1581
  %v1824 = vsel %vm149, %v1816, 0.0
  %v1825 = vrot.slane %v1824, 4
  %v1826 = vadd.f32 %v1824, %v1825
  %v1827 = vrot.slane %v1826, 2
  %v1828 = vadd.f32 %v1826, %v1827
  %v1829 = vrot.slane %v1828, 1
  %v1830 = vadd.f32 %v1828, %v1829
  %v1831 = vsel %vm149, %v1817, 0.0
  %v1832 = vrot.slane %v1831, 4
  %v1833 = vadd.f32 %v1831, %v1832
  %v1834 = vrot.slane %v1833, 2
  %v1835 = vadd.f32 %v1833, %v1834
  %v1836 = vrot.slane %v1835, 1
  %v1837 = vadd.f32 %v1835, %v1836
  %v1838 = vsel %vm149, %v1818, 0.0
  %v1839 = vrot.slane %v1838, 4
  %v1840 = vadd.f32 %v1838, %v1839
  %v1841 = vrot.slane %v1840, 2
  %v1842 = vadd.f32 %v1840, %v1841
  %v1843 = vrot.slane %v1842, 1
  %v1844 = vadd.f32 %v1842, %v1843
  %v1845 = vsel %vm149, %v1819, 0.0
  %v1846 = vrot.slane %v1845, 4
  %v1847 = vadd.f32 %v1845, %v1846
  %v1848 = vrot.slane %v1847, 2
  %v1849 = vadd.f32 %v1847, %v1848
  %v1850 = vrot.slane %v1849, 1
  %v1851 = vadd.f32 %v1849, %v1850
  %v1852 = vsel %vm149, %v1820, 0.0
  %v1853 = vrot.slane %v1852, 4
  %v1854 = vadd.f32 %v1852, %v1853
  %v1855 = vrot.slane %v1854, 2
  %v1856 = vadd.f32 %v1854, %v1855
  %v1857 = vrot.slane %v1856, 1
  %v1858 = vadd.f32 %v1856, %v1857
  %v1859 = vsel %vm149, %v1821, 0.0
  %v1860 = vrot.slane %v1859, 4
  %v1861 = vadd.f32 %v1859, %v1860
  %v1862 = vrot.slane %v1861, 2
  %v1863 = vadd.f32 %v1861, %v1862
  %v1864 = vrot.slane %v1863, 1
  %v1865 = vadd.f32 %v1863, %v1864
  %v1866 = vsel %vm149, %v1822, 0.0
  %v1867 = vrot.slane %v1866, 4
  %v1868 = vadd.f32 %v1866, %v1867
  %v1869 = vrot.slane %v1868, 2
  %v1870 = vadd.f32 %v1868, %v1869
  %v1871 = vrot.slane %v1870, 1
  %v1872 = vadd.f32 %v1870, %v1871
  %v1873 = vsel %vm149, %v1823, 0.0
  %v1874 = vrot.slane %v1873, 4
  %v1875 = vadd.f32 %v1873, %v1874
  %v1876 = vrot.slane %v1875, 2
  %v1877 = vadd.f32 %v1875, %v1876
  %v1878 = vrot.slane %v1877, 1
  %v1879 = vadd.f32 %v1877, %v1878
  %v1880 = vadd.f32 %v1778, %v1830
  %v1881 = vadd.f32 %v1779, %v1837
  %v1882 = vadd.f32 %v1780, %v1844
  %v1883 = vadd.f32 %v1781, %v1851
  %v1884 = vadd.f32 %v1782, %v1858
  %v1885 = vadd.f32 %v1783, %v1865
  %v1886 = vadd.f32 %v1784, %v1872
  %v1887 = vadd.f32 %v1785, %v1879
  %1888 = vrot.lane.b32.xlu0 %v1243, 1
  %v1889 = vpop.permute.xlu0 %1888
  %1890 = vrot.lane.b32.xlu0 %v1244, 1
  %v1891 = vpop.permute.xlu0 %1890
  %v1892 = vsel %vm90, %v1889, %v1891
  %v1893 = vsel %vm90, %v1891, %v1889
  %1894 = vrot.lane.b32.xlu0 %v1243, 127
  %v1895 = vpop.permute.xlu0 %1894
  %1896 = vrot.lane.b32.xlu0 %v1244, 127
  %v1897 = vpop.permute.xlu0 %1896
  %v1898 = vsel %vm97, %v1895, %v1897
  %v1899 = vsel %vm97, %v1897, %v1895
  %v1900 = vsel %vm102, %v1898, %v1893
  %v1901 = vsel %vm103, %v1899, %v1892
  %v1902 = vsel %vm108, %v1893, %v1898
  %v1903 = vsel %vm109, %v1892, %v1899
  %s1904 = scalar_lea.vmem %s2, 24
  %v1905 = vld [vmem:[%s1904] sm:$0xf]
  %v1906 = vperm.slane %v1905, 0
  %v1907 = vlaneseq
  %v1908 = vshrl.u32 %v1907, 7
  %1910 = vset.pattern.permute.xlu0 %v1908
  %1911 = vperm.xlu0 %1910, %v1906
  %v1912 = vpop.permute.xlu0 %1911
  %v1913 = vperm.slane %v1905, 1
  %v1914 = vlaneseq
  %v1915 = vshrl.u32 %v1914, 7
  %1917 = vset.pattern.permute.xlu0 %v1915
  %1918 = vperm.xlu0 %1917, %v1913
  %v1919 = vpop.permute.xlu0 %1918
  %v1920 = vperm.slane %v1905, 2
  %v1921 = vlaneseq
  %v1922 = vshrl.u32 %v1921, 7
  %1924 = vset.pattern.permute.xlu0 %v1922
  %1925 = vperm.xlu0 %1924, %v1920
  %v1926 = vpop.permute.xlu0 %1925
  %v1927 = vperm.slane %v1905, 3
  %v1928 = vlaneseq
  %v1929 = vshrl.u32 %v1928, 7
  %1931 = vset.pattern.permute.xlu0 %v1929
  %1932 = vperm.xlu0 %1931, %v1927
  %v1933 = vpop.permute.xlu0 %1932
  %v1934 = vmul.f32 %v1912, %v1900
  %v1935 = vmul.f32 %v1912, %v1901
  %v1936 = vmul.f32 %v1919, %v1900
  %v1937 = vmul.f32 %v1919, %v1901
  %v1938 = vmul.f32 %v1926, %v1900
  %v1939 = vmul.f32 %v1926, %v1901
  %v1940 = vmul.f32 %v1933, %v1900
  %v1941 = vmul.f32 %v1933, %v1901
  %v1942 = vsel %vm149, %v1934, 0.0
  %v1943 = vrot.slane %v1942, 4
  %v1944 = vadd.f32 %v1942, %v1943
  %v1945 = vrot.slane %v1944, 2
  %v1946 = vadd.f32 %v1944, %v1945
  %v1947 = vrot.slane %v1946, 1
  %v1948 = vadd.f32 %v1946, %v1947
  %v1949 = vsel %vm149, %v1935, 0.0
  %v1950 = vrot.slane %v1949, 4
  %v1951 = vadd.f32 %v1949, %v1950
  %v1952 = vrot.slane %v1951, 2
  %v1953 = vadd.f32 %v1951, %v1952
  %v1954 = vrot.slane %v1953, 1
  %v1955 = vadd.f32 %v1953, %v1954
  %v1956 = vsel %vm149, %v1936, 0.0
  %v1957 = vrot.slane %v1956, 4
  %v1958 = vadd.f32 %v1956, %v1957
  %v1959 = vrot.slane %v1958, 2
  %v1960 = vadd.f32 %v1958, %v1959
  %v1961 = vrot.slane %v1960, 1
  %v1962 = vadd.f32 %v1960, %v1961
  %v1963 = vsel %vm149, %v1937, 0.0
  %v1964 = vrot.slane %v1963, 4
  %v1965 = vadd.f32 %v1963, %v1964
  %v1966 = vrot.slane %v1965, 2
  %v1967 = vadd.f32 %v1965, %v1966
  %v1968 = vrot.slane %v1967, 1
  %v1969 = vadd.f32 %v1967, %v1968
  %v1970 = vsel %vm149, %v1938, 0.0
  %v1971 = vrot.slane %v1970, 4
  %v1972 = vadd.f32 %v1970, %v1971
  %v1973 = vrot.slane %v1972, 2
  %v1974 = vadd.f32 %v1972, %v1973
  %v1975 = vrot.slane %v1974, 1
  %v1976 = vadd.f32 %v1974, %v1975
  %v1977 = vsel %vm149, %v1939, 0.0
  %v1978 = vrot.slane %v1977, 4
  %v1979 = vadd.f32 %v1977, %v1978
  %v1980 = vrot.slane %v1979, 2
  %v1981 = vadd.f32 %v1979, %v1980
  %v1982 = vrot.slane %v1981, 1
  %v1983 = vadd.f32 %v1981, %v1982
  %v1984 = vsel %vm149, %v1940, 0.0
  %v1985 = vrot.slane %v1984, 4
  %v1986 = vadd.f32 %v1984, %v1985
  %v1987 = vrot.slane %v1986, 2
  %v1988 = vadd.f32 %v1986, %v1987
  %v1989 = vrot.slane %v1988, 1
  %v1990 = vadd.f32 %v1988, %v1989
  %v1991 = vsel %vm149, %v1941, 0.0
  %v1992 = vrot.slane %v1991, 4
  %v1993 = vadd.f32 %v1991, %v1992
  %v1994 = vrot.slane %v1993, 2
  %v1995 = vadd.f32 %v1993, %v1994
  %v1996 = vrot.slane %v1995, 1
  %v1997 = vadd.f32 %v1995, %v1996
  %v1998 = vadd.f32 %v1880, %v1948
  %v1999 = vadd.f32 %v1881, %v1955
  %v2000 = vadd.f32 %v1882, %v1962
  %v2001 = vadd.f32 %v1883, %v1969
  %v2002 = vadd.f32 %v1884, %v1976
  %v2003 = vadd.f32 %v1885, %v1983
  %v2004 = vadd.f32 %v1886, %v1990
  %v2005 = vadd.f32 %v1887, %v1997
  %s2006 = scalar_lea.vmem %s2, 28
  %v2007 = vld [vmem:[%s2006] sm:$0xf]
  %v2008 = vperm.slane %v2007, 0
  %v2009 = vlaneseq
  %v2010 = vshrl.u32 %v2009, 7
  %2012 = vset.pattern.permute.xlu0 %v2010
  %2013 = vperm.xlu0 %2012, %v2008
  %v2014 = vpop.permute.xlu0 %2013
  %v2015 = vperm.slane %v2007, 1
  %v2016 = vlaneseq
  %v2017 = vshrl.u32 %v2016, 7
  %2019 = vset.pattern.permute.xlu0 %v2017
  %2020 = vperm.xlu0 %2019, %v2015
  %v2021 = vpop.permute.xlu0 %2020
  %v2022 = vperm.slane %v2007, 2
  %v2023 = vlaneseq
  %v2024 = vshrl.u32 %v2023, 7
  %2026 = vset.pattern.permute.xlu0 %v2024
  %2027 = vperm.xlu0 %2026, %v2022
  %v2028 = vpop.permute.xlu0 %2027
  %v2029 = vperm.slane %v2007, 3
  %v2030 = vlaneseq
  %v2031 = vshrl.u32 %v2030, 7
  %2033 = vset.pattern.permute.xlu0 %v2031
  %2034 = vperm.xlu0 %2033, %v2029
  %v2035 = vpop.permute.xlu0 %2034
  %v2036 = vmul.f32 %v2014, %v1243
  %v2037 = vmul.f32 %v2014, %v1244
  %v2038 = vmul.f32 %v2021, %v1243
  %v2039 = vmul.f32 %v2021, %v1244
  %v2040 = vmul.f32 %v2028, %v1243
  %v2041 = vmul.f32 %v2028, %v1244
  %v2042 = vmul.f32 %v2035, %v1243
  %v2043 = vmul.f32 %v2035, %v1244
  %v2044 = vsel %vm149, %v2036, 0.0
  %v2045 = vrot.slane %v2044, 4
  %v2046 = vadd.f32 %v2044, %v2045
  %v2047 = vrot.slane %v2046, 2
  %v2048 = vadd.f32 %v2046, %v2047
  %v2049 = vrot.slane %v2048, 1
  %v2050 = vadd.f32 %v2048, %v2049
  %v2051 = vsel %vm149, %v2037, 0.0
  %v2052 = vrot.slane %v2051, 4
  %v2053 = vadd.f32 %v2051, %v2052
  %v2054 = vrot.slane %v2053, 2
  %v2055 = vadd.f32 %v2053, %v2054
  %v2056 = vrot.slane %v2055, 1
  %v2057 = vadd.f32 %v2055, %v2056
  %v2058 = vsel %vm149, %v2038, 0.0
  %v2059 = vrot.slane %v2058, 4
  %v2060 = vadd.f32 %v2058, %v2059
  %v2061 = vrot.slane %v2060, 2
  %v2062 = vadd.f32 %v2060, %v2061
  %v2063 = vrot.slane %v2062, 1
  %v2064 = vadd.f32 %v2062, %v2063
  %v2065 = vsel %vm149, %v2039, 0.0
  %v2066 = vrot.slane %v2065, 4
  %v2067 = vadd.f32 %v2065, %v2066
  %v2068 = vrot.slane %v2067, 2
  %v2069 = vadd.f32 %v2067, %v2068
  %v2070 = vrot.slane %v2069, 1
  %v2071 = vadd.f32 %v2069, %v2070
  %v2072 = vsel %vm149, %v2040, 0.0
  %v2073 = vrot.slane %v2072, 4
  %v2074 = vadd.f32 %v2072, %v2073
  %v2075 = vrot.slane %v2074, 2
  %v2076 = vadd.f32 %v2074, %v2075
  %v2077 = vrot.slane %v2076, 1
  %v2078 = vadd.f32 %v2076, %v2077
  %v2079 = vsel %vm149, %v2041, 0.0
  %v2080 = vrot.slane %v2079, 4
  %v2081 = vadd.f32 %v2079, %v2080
  %v2082 = vrot.slane %v2081, 2
  %v2083 = vadd.f32 %v2081, %v2082
  %v2084 = vrot.slane %v2083, 1
  %v2085 = vadd.f32 %v2083, %v2084
  %v2086 = vsel %vm149, %v2042, 0.0
  %v2087 = vrot.slane %v2086, 4
  %v2088 = vadd.f32 %v2086, %v2087
  %v2089 = vrot.slane %v2088, 2
  %v2090 = vadd.f32 %v2088, %v2089
  %v2091 = vrot.slane %v2090, 1
  %v2092 = vadd.f32 %v2090, %v2091
  %v2093 = vsel %vm149, %v2043, 0.0
  %v2094 = vrot.slane %v2093, 4
  %v2095 = vadd.f32 %v2093, %v2094
  %v2096 = vrot.slane %v2095, 2
  %v2097 = vadd.f32 %v2095, %v2096
  %v2098 = vrot.slane %v2097, 1
  %v2099 = vadd.f32 %v2097, %v2098
  %v2100 = vadd.f32 %v1998, %v2050
  %v2101 = vadd.f32 %v1999, %v2057
  %v2102 = vadd.f32 %v2000, %v2064
  %v2103 = vadd.f32 %v2001, %v2071
  %v2104 = vadd.f32 %v2002, %v2078
  %v2105 = vadd.f32 %v2003, %v2085
  %v2106 = vadd.f32 %v2004, %v2092
  %v2107 = vadd.f32 %v2005, %v2099
  %s2108 = scalar_lea.vmem %s2, 32
  %v2109 = vld [vmem:[%s2108] sm:$0xf]
  %v2110 = vperm.slane %v2109, 0
  %v2111 = vlaneseq
  %v2112 = vshrl.u32 %v2111, 7
  %2114 = vset.pattern.permute.xlu0 %v2112
  %2115 = vperm.xlu0 %2114, %v2110
  %v2116 = vpop.permute.xlu0 %2115
  %v2117 = vperm.slane %v2109, 1
  %v2118 = vlaneseq
  %v2119 = vshrl.u32 %v2118, 7
  %2121 = vset.pattern.permute.xlu0 %v2119
  %2122 = vperm.xlu0 %2121, %v2117
  %v2123 = vpop.permute.xlu0 %2122
  %v2124 = vperm.slane %v2109, 2
  %v2125 = vlaneseq
  %v2126 = vshrl.u32 %v2125, 7
  %2128 = vset.pattern.permute.xlu0 %v2126
  %2129 = vperm.xlu0 %2128, %v2124
  %v2130 = vpop.permute.xlu0 %2129
  %v2131 = vperm.slane %v2109, 3
  %v2132 = vlaneseq
  %v2133 = vshrl.u32 %v2132, 7
  %2135 = vset.pattern.permute.xlu0 %v2133
  %2136 = vperm.xlu0 %2135, %v2131
  %v2137 = vpop.permute.xlu0 %2136
  %v2138 = vmul.f32 %v2116, %v1902
  %v2139 = vmul.f32 %v2116, %v1903
  %v2140 = vmul.f32 %v2123, %v1902
  %v2141 = vmul.f32 %v2123, %v1903
  %v2142 = vmul.f32 %v2130, %v1902
  %v2143 = vmul.f32 %v2130, %v1903
  %v2144 = vmul.f32 %v2137, %v1902
  %v2145 = vmul.f32 %v2137, %v1903
  %v2146 = vsel %vm149, %v2138, 0.0
  %v2147 = vrot.slane %v2146, 4
  %v2148 = vadd.f32 %v2146, %v2147
  %v2149 = vrot.slane %v2148, 2
  %v2150 = vadd.f32 %v2148, %v2149
  %v2151 = vrot.slane %v2150, 1
  %v2152 = vadd.f32 %v2150, %v2151
  %v2153 = vsel %vm149, %v2139, 0.0
  %v2154 = vrot.slane %v2153, 4
  %v2155 = vadd.f32 %v2153, %v2154
  %v2156 = vrot.slane %v2155, 2
  %v2157 = vadd.f32 %v2155, %v2156
  %v2158 = vrot.slane %v2157, 1
  %v2159 = vadd.f32 %v2157, %v2158
  %v2160 = vsel %vm149, %v2140, 0.0
  %v2161 = vrot.slane %v2160, 4
  %v2162 = vadd.f32 %v2160, %v2161
  %v2163 = vrot.slane %v2162, 2
  %v2164 = vadd.f32 %v2162, %v2163
  %v2165 = vrot.slane %v2164, 1
  %v2166 = vadd.f32 %v2164, %v2165
  %v2167 = vsel %vm149, %v2141, 0.0
  %v2168 = vrot.slane %v2167, 4
  %v2169 = vadd.f32 %v2167, %v2168
  %v2170 = vrot.slane %v2169, 2
  %v2171 = vadd.f32 %v2169, %v2170
  %v2172 = vrot.slane %v2171, 1
  %v2173 = vadd.f32 %v2171, %v2172
  %v2174 = vsel %vm149, %v2142, 0.0
  %v2175 = vrot.slane %v2174, 4
  %v2176 = vadd.f32 %v2174, %v2175
  %v2177 = vrot.slane %v2176, 2
  %v2178 = vadd.f32 %v2176, %v2177
  %v2179 = vrot.slane %v2178, 1
  %v2180 = vadd.f32 %v2178, %v2179
  %v2181 = vsel %vm149, %v2143, 0.0
  %v2182 = vrot.slane %v2181, 4
  %v2183 = vadd.f32 %v2181, %v2182
  %v2184 = vrot.slane %v2183, 2
  %v2185 = vadd.f32 %v2183, %v2184
  %v2186 = vrot.slane %v2185, 1
  %v2187 = vadd.f32 %v2185, %v2186
  %v2188 = vsel %vm149, %v2144, 0.0
  %v2189 = vrot.slane %v2188, 4
  %v2190 = vadd.f32 %v2188, %v2189
  %v2191 = vrot.slane %v2190, 2
  %v2192 = vadd.f32 %v2190, %v2191
  %v2193 = vrot.slane %v2192, 1
  %v2194 = vadd.f32 %v2192, %v2193
  %v2195 = vsel %vm149, %v2145, 0.0
  %v2196 = vrot.slane %v2195, 4
  %v2197 = vadd.f32 %v2195, %v2196
  %v2198 = vrot.slane %v2197, 2
  %v2199 = vadd.f32 %v2197, %v2198
  %v2200 = vrot.slane %v2199, 1
  %v2201 = vadd.f32 %v2199, %v2200
  %v2202 = vadd.f32 %v2100, %v2152
  %v2203 = vadd.f32 %v2101, %v2159
  %v2204 = vadd.f32 %v2102, %v2166
  %v2205 = vadd.f32 %v2103, %v2173
  %v2206 = vadd.f32 %v2104, %v2180
  %v2207 = vadd.f32 %v2105, %v2187
  %v2208 = vadd.f32 %v2106, %v2194
  %v2209 = vadd.f32 %v2107, %v2201
  %v2218 = vsel %vm1103, %v2204, %v2202
  %v2219 = vsel %vm1105, %v2206, %v2218
  %v2220 = vsel %vm1107, %v2208, %v2219
  %v2221 = vsel %vm1103, %v2205, %v2203
  %v2222 = vsel %vm1105, %v2207, %v2221
  %v2223 = vsel %vm1107, %v2209, %v2222
  %v2226 = vsel %vm149, %v2220, 0.0
  %v2227 = vsel %vm149, %v2223, 0.0
  %v2228 = vadd.f32 %v2226, %v2227
  %2229 = vadd.xlane.f32.xlu0 %v2228
  %v2230 = vpop.xlane.xlu0 %2229
  %v2231 = vmul.f32 %v2230, 0.00390625
  %v2233 = vrot.slane %v2231, 1
  %v2234 = vrot.slane %v2231, 2
  %v2235 = vrot.slane %v2231, 3
  %v2240 = vsub.f32 %v2202, %v2231
  %v2241 = vsub.f32 %v2203, %v2231
  %v2242 = vsub.f32 %v2204, %v2233
  %v2243 = vsub.f32 %v2205, %v2233
  %v2244 = vsub.f32 %v2206, %v2234
  %v2245 = vsub.f32 %v2207, %v2234
  %v2246 = vsub.f32 %v2208, %v2235
  %v2247 = vsub.f32 %v2209, %v2235
  %v2248 = vmul.f32 %v2240, %v2240
  %v2249 = vmul.f32 %v2241, %v2241
  %v2250 = vmul.f32 %v2242, %v2242
  %v2251 = vmul.f32 %v2243, %v2243
  %v2252 = vmul.f32 %v2244, %v2244
  %v2253 = vmul.f32 %v2245, %v2245
  %v2254 = vmul.f32 %v2246, %v2246
  %v2255 = vmul.f32 %v2247, %v2247
  %v2264 = vrot.slane %v2250, 7
  %v2265 = vsel %vm1103, %v2264, %v2248
  %v2266 = vrot.slane %v2252, 6
  %v2267 = vsel %vm1105, %v2266, %v2265
  %v2268 = vrot.slane %v2254, 5
  %v2269 = vsel %vm1107, %v2268, %v2267
  %v2270 = vrot.slane %v2251, 7
  %v2271 = vsel %vm1103, %v2270, %v2249
  %v2272 = vrot.slane %v2253, 6
  %v2273 = vsel %vm1105, %v2272, %v2271
  %v2274 = vrot.slane %v2255, 5
  %v2275 = vsel %vm1107, %v2274, %v2273
  %v2278 = vsel %vm149, %v2269, 0.0
  %v2279 = vsel %vm149, %v2275, 0.0
  %v2280 = vadd.f32 %v2278, %v2279
  %2281 = vadd.xlane.f32.xlu0 %v2280
  %v2282 = vpop.xlane.xlu0 %2281
  %v2283 = vmul.f32 %v2282, 0.00390625
  %v2284 = vadd.f32 %v2283, 1e-05
  %v2285 = vrsqrt.pop %v2284
  %v2286 = vmul.f32 %v2285, %v2284
  %v2287 = vmul.f32 %v2286, %v2285
  %v2288 = vmul.f32 0.5, %v2287
  %v2289 = vsub.f32 1.5, %v2288
  %v2290 = vmul.f32 %v2285, %v2289
  %vm2291 = vweird.f32 %v2284
  %vm2292 = vweird.f32 %v2285
  %vm2293 = vmor %vm2291, %vm2292
  %v2294 = vsel %vm2293, %v2285, %v2290
  %v2296 = vrot.slane %v2294, 1
  %v2297 = vrot.slane %v2294, 2
  %v2298 = vrot.slane %v2294, 3
  %v2303 = vmul.f32 %v2240, %v2294
  %v2304 = vmul.f32 %v2241, %v2294
  %v2305 = vmul.f32 %v2242, %v2296
  %v2306 = vmul.f32 %v2243, %v2296
  %v2307 = vmul.f32 %v2244, %v2297
  %v2308 = vmul.f32 %v2245, %v2297
  %v2309 = vmul.f32 %v2246, %v2298
  %v2310 = vmul.f32 %v2247, %v2298
  %v2319 = vrot.slane %v2304, 4
  %v2320 = vrot.slane %v2306, 4
  %v2321 = vrot.slane %v2308, 4
  %v2322 = vrot.slane %v2310, 4
  %v2323 = vsel %vm149, %v2303, %v2319
  %v2324 = vsel %vm149, %v2305, %v2320
  %v2325 = vsel %vm149, %v2307, %v2321
  %v2326 = vsel %vm149, %v2309, %v2322
  %v2327 = vrot.slane %v2324, 7
  %v2328 = vsel %vm1103, %v2327, %v2323
  %vm2329 = vcmask 1045509
  %v2330 = vsel %vm2329, %v2327, %v2328
  %v2331 = vrot.slane %v2325, 6
  %v2332 = vsel %vm1105, %v2331, %v2330
  %vm2333 = vcmask 1046534
  %v2334 = vsel %vm2333, %v2331, %v2332
  %v2335 = vrot.slane %v2326, 5
  %v2336 = vsel %vm1107, %v2335, %v2334
  %vm2337 = vcmask 1047559
  %v2338 = vsel %vm2337, %v2335, %v2336
  %v2340 = vadd.f32 %v49, %v2338
  %2341 = vst [vmem:[%s3] sm:$0xff] %v2340
  %s2342 = scalar_lea.vmem %s0, 8
  %v2343 = vld [vmem:[%s2342] sm:$0xff]
  %2345 = vst [vmem:[#allocation1] ss:$2 sm:$0xff] %v2343
  %v2346 = vld.sshfl [vmem:[#allocation1] sm:$0xff pattern:$0x75316420]
  %v2347 = vld.sshfl [vmem:[#allocation1 + $0x8] sm:$0xff pattern:$0x75316420]
  %2350 = vrot.lane.b32.xlu0 %v2346, 16
  %v2351 = vpop.permute.xlu0 %2350
  %2352 = vrot.lane.b32.xlu0 %v2347, 16
  %v2353 = vpop.permute.xlu0 %2352
  %v2354 = vsel %vm45, %v2351, %v2353
  %v2355 = vsel %vm45, %v2353, %v2351
  %2356 = vst [vmem:[#allocation1] ss:$2 sm:$0xff] %v2343
  %v2357 = vld.sshfl [vmem:[#allocation1] sm:$0xff pattern:$0x75316420]
  %v2358 = vld.sshfl [vmem:[#allocation1 + $0x8] sm:$0xff pattern:$0x75316420]
  %2361 = vrot.lane.b32.xlu0 %v2357, 112
  %v2362 = vpop.permute.xlu0 %2361
  %2363 = vrot.lane.b32.xlu0 %v2358, 112
  %v2364 = vpop.permute.xlu0 %2363
  %v2365 = vsel %vm71, %v2362, %v2364
  %v2366 = vsel %vm71, %v2364, %v2362
  %v2367 = vsel %vm76, %v2365, %v2355
  %v2368 = vsel %vm77, %v2366, %v2354
  %v2369 = vsel %vm82, %v2355, %v2365
  %v2370 = vsel %vm83, %v2354, %v2366
  %2371 = vrot.lane.b32.xlu0 %v2367, 1
  %v2372 = vpop.permute.xlu0 %2371
  %2373 = vrot.lane.b32.xlu0 %v2368, 1
  %v2374 = vpop.permute.xlu0 %2373
  %v2375 = vsel %vm90, %v2372, %v2374
  %v2376 = vsel %vm90, %v2374, %v2372
  %2377 = vrot.lane.b32.xlu0 %v2367, 127
  %v2378 = vpop.permute.xlu0 %2377
  %2379 = vrot.lane.b32.xlu0 %v2368, 127
  %v2380 = vpop.permute.xlu0 %2379
  %v2381 = vsel %vm97, %v2378, %v2380
  %v2382 = vsel %vm97, %v2380, %v2378
  %v2383 = vsel %vm102, %v2381, %v2376
  %v2384 = vsel %vm103, %v2382, %v2375
  %v2385 = vsel %vm108, %v2376, %v2381
  %v2386 = vsel %vm109, %v2375, %v2382
  %v2387 = vld [vmem:[%s1] sm:$0xf]
  %v2388 = vperm.slane %v2387, 0
  %v2389 = vlaneseq
  %v2390 = vshrl.u32 %v2389, 7
  %2392 = vset.pattern.permute.xlu0 %v2390
  %2393 = vperm.xlu0 %2392, %v2388
  %v2394 = vpop.permute.xlu0 %2393
  %v2395 = vperm.slane %v2387, 1
  %v2396 = vlaneseq
  %v2397 = vshrl.u32 %v2396, 7
  %2399 = vset.pattern.permute.xlu0 %v2397
  %2400 = vperm.xlu0 %2399, %v2395
  %v2401 = vpop.permute.xlu0 %2400
  %v2402 = vperm.slane %v2387, 2
  %v2403 = vlaneseq
  %v2404 = vshrl.u32 %v2403, 7
  %2406 = vset.pattern.permute.xlu0 %v2404
  %2407 = vperm.xlu0 %2406, %v2402
  %v2408 = vpop.permute.xlu0 %2407
  %v2409 = vperm.slane %v2387, 3
  %v2410 = vlaneseq
  %v2411 = vshrl.u32 %v2410, 7
  %2413 = vset.pattern.permute.xlu0 %v2411
  %2414 = vperm.xlu0 %2413, %v2409
  %v2415 = vpop.permute.xlu0 %2414
  %v2416 = vmul.f32 %v2394, %v2383
  %v2417 = vmul.f32 %v2394, %v2384
  %v2418 = vmul.f32 %v2401, %v2383
  %v2419 = vmul.f32 %v2401, %v2384
  %v2420 = vmul.f32 %v2408, %v2383
  %v2421 = vmul.f32 %v2408, %v2384
  %v2422 = vmul.f32 %v2415, %v2383
  %v2423 = vmul.f32 %v2415, %v2384
  %v2424 = vsel %vm149, %v2416, 0.0
  %v2425 = vrot.slane %v2424, 4
  %v2426 = vadd.f32 %v2424, %v2425
  %v2427 = vrot.slane %v2426, 2
  %v2428 = vadd.f32 %v2426, %v2427
  %v2429 = vrot.slane %v2428, 1
  %v2430 = vadd.f32 %v2428, %v2429
  %v2431 = vsel %vm149, %v2417, 0.0
  %v2432 = vrot.slane %v2431, 4
  %v2433 = vadd.f32 %v2431, %v2432
  %v2434 = vrot.slane %v2433, 2
  %v2435 = vadd.f32 %v2433, %v2434
  %v2436 = vrot.slane %v2435, 1
  %v2437 = vadd.f32 %v2435, %v2436
  %v2438 = vsel %vm149, %v2418, 0.0
  %v2439 = vrot.slane %v2438, 4
  %v2440 = vadd.f32 %v2438, %v2439
  %v2441 = vrot.slane %v2440, 2
  %v2442 = vadd.f32 %v2440, %v2441
  %v2443 = vrot.slane %v2442, 1
  %v2444 = vadd.f32 %v2442, %v2443
  %v2445 = vsel %vm149, %v2419, 0.0
  %v2446 = vrot.slane %v2445, 4
  %v2447 = vadd.f32 %v2445, %v2446
  %v2448 = vrot.slane %v2447, 2
  %v2449 = vadd.f32 %v2447, %v2448
  %v2450 = vrot.slane %v2449, 1
  %v2451 = vadd.f32 %v2449, %v2450
  %v2452 = vsel %vm149, %v2420, 0.0
  %v2453 = vrot.slane %v2452, 4
  %v2454 = vadd.f32 %v2452, %v2453
  %v2455 = vrot.slane %v2454, 2
  %v2456 = vadd.f32 %v2454, %v2455
  %v2457 = vrot.slane %v2456, 1
  %v2458 = vadd.f32 %v2456, %v2457
  %v2459 = vsel %vm149, %v2421, 0.0
  %v2460 = vrot.slane %v2459, 4
  %v2461 = vadd.f32 %v2459, %v2460
  %v2462 = vrot.slane %v2461, 2
  %v2463 = vadd.f32 %v2461, %v2462
  %v2464 = vrot.slane %v2463, 1
  %v2465 = vadd.f32 %v2463, %v2464
  %v2466 = vsel %vm149, %v2422, 0.0
  %v2467 = vrot.slane %v2466, 4
  %v2468 = vadd.f32 %v2466, %v2467
  %v2469 = vrot.slane %v2468, 2
  %v2470 = vadd.f32 %v2468, %v2469
  %v2471 = vrot.slane %v2470, 1
  %v2472 = vadd.f32 %v2470, %v2471
  %v2473 = vsel %vm149, %v2423, 0.0
  %v2474 = vrot.slane %v2473, 4
  %v2475 = vadd.f32 %v2473, %v2474
  %v2476 = vrot.slane %v2475, 2
  %v2477 = vadd.f32 %v2475, %v2476
  %v2478 = vrot.slane %v2477, 1
  %v2479 = vadd.f32 %v2477, %v2478
  %v2480 = vadd.f32 %v2430, 0.0
  %v2481 = vadd.f32 %v2437, 0.0
  %v2482 = vadd.f32 %v2444, 0.0
  %v2483 = vadd.f32 %v2451, 0.0
  %v2484 = vadd.f32 %v2458, 0.0
  %v2485 = vadd.f32 %v2465, 0.0
  %v2486 = vadd.f32 %v2472, 0.0
  %v2487 = vadd.f32 %v2479, 0.0
  %v2488 = vld [vmem:[%s214] sm:$0xf]
  %v2489 = vperm.slane %v2488, 0
  %v2490 = vlaneseq
  %v2491 = vshrl.u32 %v2490, 7
  %2493 = vset.pattern.permute.xlu0 %v2491
  %2494 = vperm.xlu0 %2493, %v2489
  %v2495 = vpop.permute.xlu0 %2494
  %v2496 = vperm.slane %v2488, 1
  %v2497 = vlaneseq
  %v2498 = vshrl.u32 %v2497, 7
  %2500 = vset.pattern.permute.xlu0 %v2498
  %2501 = vperm.xlu0 %2500, %v2496
  %v2502 = vpop.permute.xlu0 %2501
  %v2503 = vperm.slane %v2488, 2
  %v2504 = vlaneseq
  %v2505 = vshrl.u32 %v2504, 7
  %2507 = vset.pattern.permute.xlu0 %v2505
  %2508 = vperm.xlu0 %2507, %v2503
  %v2509 = vpop.permute.xlu0 %2508
  %v2510 = vperm.slane %v2488, 3
  %v2511 = vlaneseq
  %v2512 = vshrl.u32 %v2511, 7
  %2514 = vset.pattern.permute.xlu0 %v2512
  %2515 = vperm.xlu0 %2514, %v2510
  %v2516 = vpop.permute.xlu0 %2515
  %v2517 = vmul.f32 %v2495, %v2367
  %v2518 = vmul.f32 %v2495, %v2368
  %v2519 = vmul.f32 %v2502, %v2367
  %v2520 = vmul.f32 %v2502, %v2368
  %v2521 = vmul.f32 %v2509, %v2367
  %v2522 = vmul.f32 %v2509, %v2368
  %v2523 = vmul.f32 %v2516, %v2367
  %v2524 = vmul.f32 %v2516, %v2368
  %v2525 = vsel %vm149, %v2517, 0.0
  %v2526 = vrot.slane %v2525, 4
  %v2527 = vadd.f32 %v2525, %v2526
  %v2528 = vrot.slane %v2527, 2
  %v2529 = vadd.f32 %v2527, %v2528
  %v2530 = vrot.slane %v2529, 1
  %v2531 = vadd.f32 %v2529, %v2530
  %v2532 = vsel %vm149, %v2518, 0.0
  %v2533 = vrot.slane %v2532, 4
  %v2534 = vadd.f32 %v2532, %v2533
  %v2535 = vrot.slane %v2534, 2
  %v2536 = vadd.f32 %v2534, %v2535
  %v2537 = vrot.slane %v2536, 1
  %v2538 = vadd.f32 %v2536, %v2537
  %v2539 = vsel %vm149, %v2519, 0.0
  %v2540 = vrot.slane %v2539, 4
  %v2541 = vadd.f32 %v2539, %v2540
  %v2542 = vrot.slane %v2541, 2
  %v2543 = vadd.f32 %v2541, %v2542
  %v2544 = vrot.slane %v2543, 1
  %v2545 = vadd.f32 %v2543, %v2544
  %v2546 = vsel %vm149, %v2520, 0.0
  %v2547 = vrot.slane %v2546, 4
  %v2548 = vadd.f32 %v2546, %v2547
  %v2549 = vrot.slane %v2548, 2
  %v2550 = vadd.f32 %v2548, %v2549
  %v2551 = vrot.slane %v2550, 1
  %v2552 = vadd.f32 %v2550, %v2551
  %v2553 = vsel %vm149, %v2521, 0.0
  %v2554 = vrot.slane %v2553, 4
  %v2555 = vadd.f32 %v2553, %v2554
  %v2556 = vrot.slane %v2555, 2
  %v2557 = vadd.f32 %v2555, %v2556
  %v2558 = vrot.slane %v2557, 1
  %v2559 = vadd.f32 %v2557, %v2558
  %v2560 = vsel %vm149, %v2522, 0.0
  %v2561 = vrot.slane %v2560, 4
  %v2562 = vadd.f32 %v2560, %v2561
  %v2563 = vrot.slane %v2562, 2
  %v2564 = vadd.f32 %v2562, %v2563
  %v2565 = vrot.slane %v2564, 1
  %v2566 = vadd.f32 %v2564, %v2565
  %v2567 = vsel %vm149, %v2523, 0.0
  %v2568 = vrot.slane %v2567, 4
  %v2569 = vadd.f32 %v2567, %v2568
  %v2570 = vrot.slane %v2569, 2
  %v2571 = vadd.f32 %v2569, %v2570
  %v2572 = vrot.slane %v2571, 1
  %v2573 = vadd.f32 %v2571, %v2572
  %v2574 = vsel %vm149, %v2524, 0.0
  %v2575 = vrot.slane %v2574, 4
  %v2576 = vadd.f32 %v2574, %v2575
  %v2577 = vrot.slane %v2576, 2
  %v2578 = vadd.f32 %v2576, %v2577
  %v2579 = vrot.slane %v2578, 1
  %v2580 = vadd.f32 %v2578, %v2579
  %v2581 = vadd.f32 %v2480, %v2531
  %v2582 = vadd.f32 %v2481, %v2538
  %v2583 = vadd.f32 %v2482, %v2545
  %v2584 = vadd.f32 %v2483, %v2552
  %v2585 = vadd.f32 %v2484, %v2559
  %v2586 = vadd.f32 %v2485, %v2566
  %v2587 = vadd.f32 %v2486, %v2573
  %v2588 = vadd.f32 %v2487, %v2580
  %v2589 = vld [vmem:[%s316] sm:$0xf]
  %v2590 = vperm.slane %v2589, 0
  %v2591 = vlaneseq
  %v2592 = vshrl.u32 %v2591, 7
  %2594 = vset.pattern.permute.xlu0 %v2592
  %2595 = vperm.xlu0 %2594, %v2590
  %v2596 = vpop.permute.xlu0 %2595
  %v2597 = vperm.slane %v2589, 1
  %v2598 = vlaneseq
  %v2599 = vshrl.u32 %v2598, 7
  %2601 = vset.pattern.permute.xlu0 %v2599
  %2602 = vperm.xlu0 %2601, %v2597
  %v2603 = vpop.permute.xlu0 %2602
  %v2604 = vperm.slane %v2589, 2
  %v2605 = vlaneseq
  %v2606 = vshrl.u32 %v2605, 7
  %2608 = vset.pattern.permute.xlu0 %v2606
  %2609 = vperm.xlu0 %2608, %v2604
  %v2610 = vpop.permute.xlu0 %2609
  %v2611 = vperm.slane %v2589, 3
  %v2612 = vlaneseq
  %v2613 = vshrl.u32 %v2612, 7
  %2615 = vset.pattern.permute.xlu0 %v2613
  %2616 = vperm.xlu0 %2615, %v2611
  %v2617 = vpop.permute.xlu0 %2616
  %v2618 = vmul.f32 %v2596, %v2385
  %v2619 = vmul.f32 %v2596, %v2386
  %v2620 = vmul.f32 %v2603, %v2385
  %v2621 = vmul.f32 %v2603, %v2386
  %v2622 = vmul.f32 %v2610, %v2385
  %v2623 = vmul.f32 %v2610, %v2386
  %v2624 = vmul.f32 %v2617, %v2385
  %v2625 = vmul.f32 %v2617, %v2386
  %v2626 = vsel %vm149, %v2618, 0.0
  %v2627 = vrot.slane %v2626, 4
  %v2628 = vadd.f32 %v2626, %v2627
  %v2629 = vrot.slane %v2628, 2
  %v2630 = vadd.f32 %v2628, %v2629
  %v2631 = vrot.slane %v2630, 1
  %v2632 = vadd.f32 %v2630, %v2631
  %v2633 = vsel %vm149, %v2619, 0.0
  %v2634 = vrot.slane %v2633, 4
  %v2635 = vadd.f32 %v2633, %v2634
  %v2636 = vrot.slane %v2635, 2
  %v2637 = vadd.f32 %v2635, %v2636
  %v2638 = vrot.slane %v2637, 1
  %v2639 = vadd.f32 %v2637, %v2638
  %v2640 = vsel %vm149, %v2620, 0.0
  %v2641 = vrot.slane %v2640, 4
  %v2642 = vadd.f32 %v2640, %v2641
  %v2643 = vrot.slane %v2642, 2
  %v2644 = vadd.f32 %v2642, %v2643
  %v2645 = vrot.slane %v2644, 1
  %v2646 = vadd.f32 %v2644, %v2645
  %v2647 = vsel %vm149, %v2621, 0.0
  %v2648 = vrot.slane %v2647, 4
  %v2649 = vadd.f32 %v2647, %v2648
  %v2650 = vrot.slane %v2649, 2
  %v2651 = vadd.f32 %v2649, %v2650
  %v2652 = vrot.slane %v2651, 1
  %v2653 = vadd.f32 %v2651, %v2652
  %v2654 = vsel %vm149, %v2622, 0.0
  %v2655 = vrot.slane %v2654, 4
  %v2656 = vadd.f32 %v2654, %v2655
  %v2657 = vrot.slane %v2656, 2
  %v2658 = vadd.f32 %v2656, %v2657
  %v2659 = vrot.slane %v2658, 1
  %v2660 = vadd.f32 %v2658, %v2659
  %v2661 = vsel %vm149, %v2623, 0.0
  %v2662 = vrot.slane %v2661, 4
  %v2663 = vadd.f32 %v2661, %v2662
  %v2664 = vrot.slane %v2663, 2
  %v2665 = vadd.f32 %v2663, %v2664
  %v2666 = vrot.slane %v2665, 1
  %v2667 = vadd.f32 %v2665, %v2666
  %v2668 = vsel %vm149, %v2624, 0.0
  %v2669 = vrot.slane %v2668, 4
  %v2670 = vadd.f32 %v2668, %v2669
  %v2671 = vrot.slane %v2670, 2
  %v2672 = vadd.f32 %v2670, %v2671
  %v2673 = vrot.slane %v2672, 1
  %v2674 = vadd.f32 %v2672, %v2673
  %v2675 = vsel %vm149, %v2625, 0.0
  %v2676 = vrot.slane %v2675, 4
  %v2677 = vadd.f32 %v2675, %v2676
  %v2678 = vrot.slane %v2677, 2
  %v2679 = vadd.f32 %v2677, %v2678
  %v2680 = vrot.slane %v2679, 1
  %v2681 = vadd.f32 %v2679, %v2680
  %v2682 = vadd.f32 %v2581, %v2632
  %v2683 = vadd.f32 %v2582, %v2639
  %v2684 = vadd.f32 %v2583, %v2646
  %v2685 = vadd.f32 %v2584, %v2653
  %v2686 = vadd.f32 %v2585, %v2660
  %v2687 = vadd.f32 %v2586, %v2667
  %v2688 = vadd.f32 %v2587, %v2674
  %v2689 = vadd.f32 %v2588, %v2681
  %2690 = vst [vmem:[#allocation1] ss:$2 sm:$0xff] %v2343
  %v2691 = vld.sshfl [vmem:[#allocation1] sm:$0xff pattern:$0x75316420]
  %v2692 = vld.sshfl [vmem:[#allocation1 + $0x8] sm:$0xff pattern:$0x75316420]
  %2695 = vrot.lane.b32.xlu0 %v2691, 1
  %v2696 = vpop.permute.xlu0 %2695
  %2697 = vrot.lane.b32.xlu0 %v2692, 1
  %v2698 = vpop.permute.xlu0 %2697
  %v2699 = vsel %vm90, %v2696, %v2698
  %v2700 = vsel %vm90, %v2698, %v2696
  %2701 = vst [vmem:[#allocation1] ss:$2 sm:$0xff] %v2343
  %v2702 = vld.sshfl [vmem:[#allocation1] sm:$0xff pattern:$0x75316420]
  %v2703 = vld.sshfl [vmem:[#allocation1 + $0x8] sm:$0xff pattern:$0x75316420]
  %2706 = vrot.lane.b32.xlu0 %v2702, 127
  %v2707 = vpop.permute.xlu0 %2706
  %2708 = vrot.lane.b32.xlu0 %v2703, 127
  %v2709 = vpop.permute.xlu0 %2708
  %v2710 = vsel %vm97, %v2707, %v2709
  %v2711 = vsel %vm97, %v2709, %v2707
  %v2712 = vsel %vm102, %v2710, %v2700
  %v2713 = vsel %vm103, %v2711, %v2699
  %v2714 = vsel %vm108, %v2700, %v2710
  %v2715 = vsel %vm109, %v2699, %v2711
  %v2716 = vld [vmem:[%s444] sm:$0xf]
  %v2717 = vperm.slane %v2716, 0
  %v2718 = vlaneseq
  %v2719 = vshrl.u32 %v2718, 7
  %2721 = vset.pattern.permute.xlu0 %v2719
  %2722 = vperm.xlu0 %2721, %v2717
  %v2723 = vpop.permute.xlu0 %2722
  %v2724 = vperm.slane %v2716, 1
  %v2725 = vlaneseq
  %v2726 = vshrl.u32 %v2725, 7
  %2728 = vset.pattern.permute.xlu0 %v2726
  %2729 = vperm.xlu0 %2728, %v2724
  %v2730 = vpop.permute.xlu0 %2729
  %v2731 = vperm.slane %v2716, 2
  %v2732 = vlaneseq
  %v2733 = vshrl.u32 %v2732, 7
  %2735 = vset.pattern.permute.xlu0 %v2733
  %2736 = vperm.xlu0 %2735, %v2731
  %v2737 = vpop.permute.xlu0 %2736
  %v2738 = vperm.slane %v2716, 3
  %v2739 = vlaneseq
  %v2740 = vshrl.u32 %v2739, 7
  %2742 = vset.pattern.permute.xlu0 %v2740
  %2743 = vperm.xlu0 %2742, %v2738
  %v2744 = vpop.permute.xlu0 %2743
  %v2745 = vmul.f32 %v2723, %v2712
  %v2746 = vmul.f32 %v2723, %v2713
  %v2747 = vmul.f32 %v2730, %v2712
  %v2748 = vmul.f32 %v2730, %v2713
  %v2749 = vmul.f32 %v2737, %v2712
  %v2750 = vmul.f32 %v2737, %v2713
  %v2751 = vmul.f32 %v2744, %v2712
  %v2752 = vmul.f32 %v2744, %v2713
  %v2753 = vsel %vm149, %v2745, 0.0
  %v2754 = vrot.slane %v2753, 4
  %v2755 = vadd.f32 %v2753, %v2754
  %v2756 = vrot.slane %v2755, 2
  %v2757 = vadd.f32 %v2755, %v2756
  %v2758 = vrot.slane %v2757, 1
  %v2759 = vadd.f32 %v2757, %v2758
  %v2760 = vsel %vm149, %v2746, 0.0
  %v2761 = vrot.slane %v2760, 4
  %v2762 = vadd.f32 %v2760, %v2761
  %v2763 = vrot.slane %v2762, 2
  %v2764 = vadd.f32 %v2762, %v2763
  %v2765 = vrot.slane %v2764, 1
  %v2766 = vadd.f32 %v2764, %v2765
  %v2767 = vsel %vm149, %v2747, 0.0
  %v2768 = vrot.slane %v2767, 4
  %v2769 = vadd.f32 %v2767, %v2768
  %v2770 = vrot.slane %v2769, 2
  %v2771 = vadd.f32 %v2769, %v2770
  %v2772 = vrot.slane %v2771, 1
  %v2773 = vadd.f32 %v2771, %v2772
  %v2774 = vsel %vm149, %v2748, 0.0
  %v2775 = vrot.slane %v2774, 4
  %v2776 = vadd.f32 %v2774, %v2775
  %v2777 = vrot.slane %v2776, 2
  %v2778 = vadd.f32 %v2776, %v2777
  %v2779 = vrot.slane %v2778, 1
  %v2780 = vadd.f32 %v2778, %v2779
  %v2781 = vsel %vm149, %v2749, 0.0
  %v2782 = vrot.slane %v2781, 4
  %v2783 = vadd.f32 %v2781, %v2782
  %v2784 = vrot.slane %v2783, 2
  %v2785 = vadd.f32 %v2783, %v2784
  %v2786 = vrot.slane %v2785, 1
  %v2787 = vadd.f32 %v2785, %v2786
  %v2788 = vsel %vm149, %v2750, 0.0
  %v2789 = vrot.slane %v2788, 4
  %v2790 = vadd.f32 %v2788, %v2789
  %v2791 = vrot.slane %v2790, 2
  %v2792 = vadd.f32 %v2790, %v2791
  %v2793 = vrot.slane %v2792, 1
  %v2794 = vadd.f32 %v2792, %v2793
  %v2795 = vsel %vm149, %v2751, 0.0
  %v2796 = vrot.slane %v2795, 4
  %v2797 = vadd.f32 %v2795, %v2796
  %v2798 = vrot.slane %v2797, 2
  %v2799 = vadd.f32 %v2797, %v2798
  %v2800 = vrot.slane %v2799, 1
  %v2801 = vadd.f32 %v2799, %v2800
  %v2802 = vsel %vm149, %v2752, 0.0
  %v2803 = vrot.slane %v2802, 4
  %v2804 = vadd.f32 %v2802, %v2803
  %v2805 = vrot.slane %v2804, 2
  %v2806 = vadd.f32 %v2804, %v2805
  %v2807 = vrot.slane %v2806, 1
  %v2808 = vadd.f32 %v2806, %v2807
  %v2809 = vadd.f32 %v2682, %v2759
  %v2810 = vadd.f32 %v2683, %v2766
  %v2811 = vadd.f32 %v2684, %v2773
  %v2812 = vadd.f32 %v2685, %v2780
  %v2813 = vadd.f32 %v2686, %v2787
  %v2814 = vadd.f32 %v2687, %v2794
  %v2815 = vadd.f32 %v2688, %v2801
  %v2816 = vadd.f32 %v2689, %v2808
  %v2817 = vld [vmem:[%s546] sm:$0xf]
  %v2818 = vperm.slane %v2817, 0
  %v2819 = vlaneseq
  %v2820 = vshrl.u32 %v2819, 7
  %2822 = vset.pattern.permute.xlu0 %v2820
  %2823 = vperm.xlu0 %2822, %v2818
  %v2824 = vpop.permute.xlu0 %2823
  %v2825 = vperm.slane %v2817, 1
  %v2826 = vlaneseq
  %v2827 = vshrl.u32 %v2826, 7
  %2829 = vset.pattern.permute.xlu0 %v2827
  %2830 = vperm.xlu0 %2829, %v2825
  %v2831 = vpop.permute.xlu0 %2830
  %v2832 = vperm.slane %v2817, 2
  %v2833 = vlaneseq
  %v2834 = vshrl.u32 %v2833, 7
  %2836 = vset.pattern.permute.xlu0 %v2834
  %2837 = vperm.xlu0 %2836, %v2832
  %v2838 = vpop.permute.xlu0 %2837
  %v2839 = vperm.slane %v2817, 3
  %v2840 = vlaneseq
  %v2841 = vshrl.u32 %v2840, 7
  %2843 = vset.pattern.permute.xlu0 %v2841
  %2844 = vperm.xlu0 %2843, %v2839
  %v2845 = vpop.permute.xlu0 %2844
  %2846 = vst [vmem:[#allocation1] ss:$2 sm:$0xff] %v2343
  %v2847 = vld.sshfl [vmem:[#allocation1] sm:$0xff pattern:$0x75316420]
  %v2848 = vld.sshfl [vmem:[#allocation1 + $0x8] sm:$0xff pattern:$0x75316420]
  %s2849 = scalar_lea.vmem [#allocation1], 16
  %2850 = vst [vmem:[%s2849] ss:$2 sm:$0xff] %v2343
  %v2851 = vld.sshfl [vmem:[#allocation1 + $0x10] sm:$0xff pattern:$0x75316420]
  %v2852 = vld.sshfl [vmem:[#allocation1 + $0x18] sm:$0xff pattern:$0x75316420]
  %s2853 = scalar_lea.vmem [#allocation1], 32
  %2854 = vst [vmem:[%s2853] ss:$2 sm:$0xff] %v2343
  %v2855 = vld.sshfl [vmem:[#allocation1 + $0x20] sm:$0xff pattern:$0x75316420]
  %v2856 = vld.sshfl [vmem:[#allocation1 + $0x28] sm:$0xff pattern:$0x75316420]
  %s2857 = scalar_lea.vmem [#allocation1], 48
  %2858 = vst [vmem:[%s2857] ss:$2 sm:$0xff] %v2343
  %v2859 = vld.sshfl [vmem:[#allocation1 + $0x30] sm:$0xff pattern:$0x75316420]
  %v2860 = vld.sshfl [vmem:[#allocation1 + $0x38] sm:$0xff pattern:$0x75316420]
  %v2869 = vmul.f32 %v2824, %v2847
  %v2870 = vmul.f32 %v2824, %v2848
  %v2871 = vmul.f32 %v2831, %v2851
  %v2872 = vmul.f32 %v2831, %v2852
  %v2873 = vmul.f32 %v2838, %v2855
  %v2874 = vmul.f32 %v2838, %v2856
  %v2875 = vmul.f32 %v2845, %v2859
  %v2876 = vmul.f32 %v2845, %v2860
  %v2877 = vsel %vm149, %v2869, 0.0
  %v2878 = vrot.slane %v2877, 4
  %v2879 = vadd.f32 %v2877, %v2878
  %v2880 = vrot.slane %v2879, 2
  %v2881 = vadd.f32 %v2879, %v2880
  %v2882 = vrot.slane %v2881, 1
  %v2883 = vadd.f32 %v2881, %v2882
  %v2884 = vsel %vm149, %v2870, 0.0
  %v2885 = vrot.slane %v2884, 4
  %v2886 = vadd.f32 %v2884, %v2885
  %v2887 = vrot.slane %v2886, 2
  %v2888 = vadd.f32 %v2886, %v2887
  %v2889 = vrot.slane %v2888, 1
  %v2890 = vadd.f32 %v2888, %v2889
  %v2891 = vsel %vm149, %v2871, 0.0
  %v2892 = vrot.slane %v2891, 4
  %v2893 = vadd.f32 %v2891, %v2892
  %v2894 = vrot.slane %v2893, 2
  %v2895 = vadd.f32 %v2893, %v2894
  %v2896 = vrot.slane %v2895, 1
  %v2897 = vadd.f32 %v2895, %v2896
  %v2898 = vsel %vm149, %v2872, 0.0
  %v2899 = vrot.slane %v2898, 4
  %v2900 = vadd.f32 %v2898, %v2899
  %v2901 = vrot.slane %v2900, 2
  %v2902 = vadd.f32 %v2900, %v2901
  %v2903 = vrot.slane %v2902, 1
  %v2904 = vadd.f32 %v2902, %v2903
  %v2905 = vsel %vm149, %v2873, 0.0
  %v2906 = vrot.slane %v2905, 4
  %v2907 = vadd.f32 %v2905, %v2906
  %v2908 = vrot.slane %v2907, 2
  %v2909 = vadd.f32 %v2907, %v2908
  %v2910 = vrot.slane %v2909, 1
  %v2911 = vadd.f32 %v2909, %v2910
  %v2912 = vsel %vm149, %v2874, 0.0
  %v2913 = vrot.slane %v2912, 4
  %v2914 = vadd.f32 %v2912, %v2913
  %v2915 = vrot.slane %v2914, 2
  %v2916 = vadd.f32 %v2914, %v2915
  %v2917 = vrot.slane %v2916, 1
  %v2918 = vadd.f32 %v2916, %v2917
  %v2919 = vsel %vm149, %v2875, 0.0
  %v2920 = vrot.slane %v2919, 4
  %v2921 = vadd.f32 %v2919, %v2920
  %v2922 = vrot.slane %v2921, 2
  %v2923 = vadd.f32 %v2921, %v2922
  %v2924 = vrot.slane %v2923, 1
  %v2925 = vadd.f32 %v2923, %v2924
  %v2926 = vsel %vm149, %v2876, 0.0
  %v2927 = vrot.slane %v2926, 4
  %v2928 = vadd.f32 %v2926, %v2927
  %v2929 = vrot.slane %v2928, 2
  %v2930 = vadd.f32 %v2928, %v2929
  %v2931 = vrot.slane %v2930, 1
  %v2932 = vadd.f32 %v2930, %v2931
  %v2933 = vadd.f32 %v2809, %v2883
  %v2934 = vadd.f32 %v2810, %v2890
  %v2935 = vadd.f32 %v2811, %v2897
  %v2936 = vadd.f32 %v2812, %v2904
  %v2937 = vadd.f32 %v2813, %v2911
  %v2938 = vadd.f32 %v2814, %v2918
  %v2939 = vadd.f32 %v2815, %v2925
  %v2940 = vadd.f32 %v2816, %v2932
  %v2941 = vld [vmem:[%s671] sm:$0xf]
  %v2942 = vperm.slane %v2941, 0
  %v2943 = vlaneseq
  %v2944 = vshrl.u32 %v2943, 7
  %2946 = vset.pattern.permute.xlu0 %v2944
  %2947 = vperm.xlu0 %2946, %v2942
  %v2948 = vpop.permute.xlu0 %2947
  %v2949 = vperm.slane %v2941, 1
  %v2950 = vlaneseq
  %v2951 = vshrl.u32 %v2950, 7
  %2953 = vset.pattern.permute.xlu0 %v2951
  %2954 = vperm.xlu0 %2953, %v2949
  %v2955 = vpop.permute.xlu0 %2954
  %v2956 = vperm.slane %v2941, 2
  %v2957 = vlaneseq
  %v2958 = vshrl.u32 %v2957, 7
  %2960 = vset.pattern.permute.xlu0 %v2958
  %2961 = vperm.xlu0 %2960, %v2956
  %v2962 = vpop.permute.xlu0 %2961
  %v2963 = vperm.slane %v2941, 3
  %v2964 = vlaneseq
  %v2965 = vshrl.u32 %v2964, 7
  %2967 = vset.pattern.permute.xlu0 %v2965
  %2968 = vperm.xlu0 %2967, %v2963
  %v2969 = vpop.permute.xlu0 %2968
  %v2970 = vmul.f32 %v2948, %v2714
  %v2971 = vmul.f32 %v2948, %v2715
  %v2972 = vmul.f32 %v2955, %v2714
  %v2973 = vmul.f32 %v2955, %v2715
  %v2974 = vmul.f32 %v2962, %v2714
  %v2975 = vmul.f32 %v2962, %v2715
  %v2976 = vmul.f32 %v2969, %v2714
  %v2977 = vmul.f32 %v2969, %v2715
  %v2978 = vsel %vm149, %v2970, 0.0
  %v2979 = vrot.slane %v2978, 4
  %v2980 = vadd.f32 %v2978, %v2979
  %v2981 = vrot.slane %v2980, 2
  %v2982 = vadd.f32 %v2980, %v2981
  %v2983 = vrot.slane %v2982, 1
  %v2984 = vadd.f32 %v2982, %v2983
  %v2985 = vsel %vm149, %v2971, 0.0
  %v2986 = vrot.slane %v2985, 4
  %v2987 = vadd.f32 %v2985, %v2986
  %v2988 = vrot.slane %v2987, 2
  %v2989 = vadd.f32 %v2987, %v2988
  %v2990 = vrot.slane %v2989, 1
  %v2991 = vadd.f32 %v2989, %v2990
  %v2992 = vsel %vm149, %v2972, 0.0
  %v2993 = vrot.slane %v2992, 4
  %v2994 = vadd.f32 %v2992, %v2993
  %v2995 = vrot.slane %v2994, 2
  %v2996 = vadd.f32 %v2994, %v2995
  %v2997 = vrot.slane %v2996, 1
  %v2998 = vadd.f32 %v2996, %v2997
  %v2999 = vsel %vm149, %v2973, 0.0
  %v3000 = vrot.slane %v2999, 4
  %v3001 = vadd.f32 %v2999, %v3000
  %v3002 = vrot.slane %v3001, 2
  %v3003 = vadd.f32 %v3001, %v3002
  %v3004 = vrot.slane %v3003, 1
  %v3005 = vadd.f32 %v3003, %v3004
  %v3006 = vsel %vm149, %v2974, 0.0
  %v3007 = vrot.slane %v3006, 4
  %v3008 = vadd.f32 %v3006, %v3007
  %v3009 = vrot.slane %v3008, 2
  %v3010 = vadd.f32 %v3008, %v3009
  %v3011 = vrot.slane %v3010, 1
  %v3012 = vadd.f32 %v3010, %v3011
  %v3013 = vsel %vm149, %v2975, 0.0
  %v3014 = vrot.slane %v3013, 4
  %v3015 = vadd.f32 %v3013, %v3014
  %v3016 = vrot.slane %v3015, 2
  %v3017 = vadd.f32 %v3015, %v3016
  %v3018 = vrot.slane %v3017, 1
  %v3019 = vadd.f32 %v3017, %v3018
  %v3020 = vsel %vm149, %v2976, 0.0
  %v3021 = vrot.slane %v3020, 4
  %v3022 = vadd.f32 %v3020, %v3021
  %v3023 = vrot.slane %v3022, 2
  %v3024 = vadd.f32 %v3022, %v3023
  %v3025 = vrot.slane %v3024, 1
  %v3026 = vadd.f32 %v3024, %v3025
  %v3027 = vsel %vm149, %v2977, 0.0
  %v3028 = vrot.slane %v3027, 4
  %v3029 = vadd.f32 %v3027, %v3028
  %v3030 = vrot.slane %v3029, 2
  %v3031 = vadd.f32 %v3029, %v3030
  %v3032 = vrot.slane %v3031, 1
  %v3033 = vadd.f32 %v3031, %v3032
  %v3034 = vadd.f32 %v2933, %v2984
  %v3035 = vadd.f32 %v2934, %v2991
  %v3036 = vadd.f32 %v2935, %v2998
  %v3037 = vadd.f32 %v2936, %v3005
  %v3038 = vadd.f32 %v2937, %v3012
  %v3039 = vadd.f32 %v2938, %v3019
  %v3040 = vadd.f32 %v2939, %v3026
  %v3041 = vadd.f32 %v2940, %v3033
  %3042 = vrot.lane.b32.xlu0 %v2369, 1
  %v3043 = vpop.permute.xlu0 %3042
  %3044 = vrot.lane.b32.xlu0 %v2370, 1
  %v3045 = vpop.permute.xlu0 %3044
  %v3046 = vsel %vm90, %v3043, %v3045
  %v3047 = vsel %vm90, %v3045, %v3043
  %3048 = vrot.lane.b32.xlu0 %v2369, 127
  %v3049 = vpop.permute.xlu0 %3048
  %3050 = vrot.lane.b32.xlu0 %v2370, 127
  %v3051 = vpop.permute.xlu0 %3050
  %v3052 = vsel %vm97, %v3049, %v3051
  %v3053 = vsel %vm97, %v3051, %v3049
  %v3054 = vsel %vm102, %v3052, %v3047
  %v3055 = vsel %vm103, %v3053, %v3046
  %v3056 = vsel %vm108, %v3047, %v3052
  %v3057 = vsel %vm109, %v3046, %v3053
  %v3058 = vld [vmem:[%s789] sm:$0xf]
  %v3059 = vperm.slane %v3058, 0
  %v3060 = vlaneseq
  %v3061 = vshrl.u32 %v3060, 7
  %3063 = vset.pattern.permute.xlu0 %v3061
  %3064 = vperm.xlu0 %3063, %v3059
  %v3065 = vpop.permute.xlu0 %3064
  %v3066 = vperm.slane %v3058, 1
  %v3067 = vlaneseq
  %v3068 = vshrl.u32 %v3067, 7
  %3070 = vset.pattern.permute.xlu0 %v3068
  %3071 = vperm.xlu0 %3070, %v3066
  %v3072 = vpop.permute.xlu0 %3071
  %v3073 = vperm.slane %v3058, 2
  %v3074 = vlaneseq
  %v3075 = vshrl.u32 %v3074, 7
  %3077 = vset.pattern.permute.xlu0 %v3075
  %3078 = vperm.xlu0 %3077, %v3073
  %v3079 = vpop.permute.xlu0 %3078
  %v3080 = vperm.slane %v3058, 3
  %v3081 = vlaneseq
  %v3082 = vshrl.u32 %v3081, 7
  %3084 = vset.pattern.permute.xlu0 %v3082
  %3085 = vperm.xlu0 %3084, %v3080
  %v3086 = vpop.permute.xlu0 %3085
  %v3087 = vmul.f32 %v3065, %v3054
  %v3088 = vmul.f32 %v3065, %v3055
  %v3089 = vmul.f32 %v3072, %v3054
  %v3090 = vmul.f32 %v3072, %v3055
  %v3091 = vmul.f32 %v3079, %v3054
  %v3092 = vmul.f32 %v3079, %v3055
  %v3093 = vmul.f32 %v3086, %v3054
  %v3094 = vmul.f32 %v3086, %v3055
  %v3095 = vsel %vm149, %v3087, 0.0
  %v3096 = vrot.slane %v3095, 4
  %v3097 = vadd.f32 %v3095, %v3096
  %v3098 = vrot.slane %v3097, 2
  %v3099 = vadd.f32 %v3097, %v3098
  %v3100 = vrot.slane %v3099, 1
  %v3101 = vadd.f32 %v3099, %v3100
  %v3102 = vsel %vm149, %v3088, 0.0
  %v3103 = vrot.slane %v3102, 4
  %v3104 = vadd.f32 %v3102, %v3103
  %v3105 = vrot.slane %v3104, 2
  %v3106 = vadd.f32 %v3104, %v3105
  %v3107 = vrot.slane %v3106, 1
  %v3108 = vadd.f32 %v3106, %v3107
  %v3109 = vsel %vm149, %v3089, 0.0
  %v3110 = vrot.slane %v3109, 4
  %v3111 = vadd.f32 %v3109, %v3110
  %v3112 = vrot.slane %v3111, 2
  %v3113 = vadd.f32 %v3111, %v3112
  %v3114 = vrot.slane %v3113, 1
  %v3115 = vadd.f32 %v3113, %v3114
  %v3116 = vsel %vm149, %v3090, 0.0
  %v3117 = vrot.slane %v3116, 4
  %v3118 = vadd.f32 %v3116, %v3117
  %v3119 = vrot.slane %v3118, 2
  %v3120 = vadd.f32 %v3118, %v3119
  %v3121 = vrot.slane %v3120, 1
  %v3122 = vadd.f32 %v3120, %v3121
  %v3123 = vsel %vm149, %v3091, 0.0
  %v3124 = vrot.slane %v3123, 4
  %v3125 = vadd.f32 %v3123, %v3124
  %v3126 = vrot.slane %v3125, 2
  %v3127 = vadd.f32 %v3125, %v3126
  %v3128 = vrot.slane %v3127, 1
  %v3129 = vadd.f32 %v3127, %v3128
  %v3130 = vsel %vm149, %v3092, 0.0
  %v3131 = vrot.slane %v3130, 4
  %v3132 = vadd.f32 %v3130, %v3131
  %v3133 = vrot.slane %v3132, 2
  %v3134 = vadd.f32 %v3132, %v3133
  %v3135 = vrot.slane %v3134, 1
  %v3136 = vadd.f32 %v3134, %v3135
  %v3137 = vsel %vm149, %v3093, 0.0
  %v3138 = vrot.slane %v3137, 4
  %v3139 = vadd.f32 %v3137, %v3138
  %v3140 = vrot.slane %v3139, 2
  %v3141 = vadd.f32 %v3139, %v3140
  %v3142 = vrot.slane %v3141, 1
  %v3143 = vadd.f32 %v3141, %v3142
  %v3144 = vsel %vm149, %v3094, 0.0
  %v3145 = vrot.slane %v3144, 4
  %v3146 = vadd.f32 %v3144, %v3145
  %v3147 = vrot.slane %v3146, 2
  %v3148 = vadd.f32 %v3146, %v3147
  %v3149 = vrot.slane %v3148, 1
  %v3150 = vadd.f32 %v3148, %v3149
  %v3151 = vadd.f32 %v3034, %v3101
  %v3152 = vadd.f32 %v3035, %v3108
  %v3153 = vadd.f32 %v3036, %v3115
  %v3154 = vadd.f32 %v3037, %v3122
  %v3155 = vadd.f32 %v3038, %v3129
  %v3156 = vadd.f32 %v3039, %v3136
  %v3157 = vadd.f32 %v3040, %v3143
  %v3158 = vadd.f32 %v3041, %v3150
  %v3159 = vld [vmem:[%s891] sm:$0xf]
  %v3160 = vperm.slane %v3159, 0
  %v3161 = vlaneseq
  %v3162 = vshrl.u32 %v3161, 7
  %3164 = vset.pattern.permute.xlu0 %v3162
  %3165 = vperm.xlu0 %3164, %v3160
  %v3166 = vpop.permute.xlu0 %3165
  %v3167 = vperm.slane %v3159, 1
  %v3168 = vlaneseq
  %v3169 = vshrl.u32 %v3168, 7
  %3171 = vset.pattern.permute.xlu0 %v3169
  %3172 = vperm.xlu0 %3171, %v3167
  %v3173 = vpop.permute.xlu0 %3172
  %v3174 = vperm.slane %v3159, 2
  %v3175 = vlaneseq
  %v3176 = vshrl.u32 %v3175, 7
  %3178 = vset.pattern.permute.xlu0 %v3176
  %3179 = vperm.xlu0 %3178, %v3174
  %v3180 = vpop.permute.xlu0 %3179
  %v3181 = vperm.slane %v3159, 3
  %v3182 = vlaneseq
  %v3183 = vshrl.u32 %v3182, 7
  %3185 = vset.pattern.permute.xlu0 %v3183
  %3186 = vperm.xlu0 %3185, %v3181
  %v3187 = vpop.permute.xlu0 %3186
  %v3188 = vmul.f32 %v3166, %v2369
  %v3189 = vmul.f32 %v3166, %v2370
  %v3190 = vmul.f32 %v3173, %v2369
  %v3191 = vmul.f32 %v3173, %v2370
  %v3192 = vmul.f32 %v3180, %v2369
  %v3193 = vmul.f32 %v3180, %v2370
  %v3194 = vmul.f32 %v3187, %v2369
  %v3195 = vmul.f32 %v3187, %v2370
  %v3196 = vsel %vm149, %v3188, 0.0
  %v3197 = vrot.slane %v3196, 4
  %v3198 = vadd.f32 %v3196, %v3197
  %v3199 = vrot.slane %v3198, 2
  %v3200 = vadd.f32 %v3198, %v3199
  %v3201 = vrot.slane %v3200, 1
  %v3202 = vadd.f32 %v3200, %v3201
  %v3203 = vsel %vm149, %v3189, 0.0
  %v3204 = vrot.slane %v3203, 4
  %v3205 = vadd.f32 %v3203, %v3204
  %v3206 = vrot.slane %v3205, 2
  %v3207 = vadd.f32 %v3205, %v3206
  %v3208 = vrot.slane %v3207, 1
  %v3209 = vadd.f32 %v3207, %v3208
  %v3210 = vsel %vm149, %v3190, 0.0
  %v3211 = vrot.slane %v3210, 4
  %v3212 = vadd.f32 %v3210, %v3211
  %v3213 = vrot.slane %v3212, 2
  %v3214 = vadd.f32 %v3212, %v3213
  %v3215 = vrot.slane %v3214, 1
  %v3216 = vadd.f32 %v3214, %v3215
  %v3217 = vsel %vm149, %v3191, 0.0
  %v3218 = vrot.slane %v3217, 4
  %v3219 = vadd.f32 %v3217, %v3218
  %v3220 = vrot.slane %v3219, 2
  %v3221 = vadd.f32 %v3219, %v3220
  %v3222 = vrot.slane %v3221, 1
  %v3223 = vadd.f32 %v3221, %v3222
  %v3224 = vsel %vm149, %v3192, 0.0
  %v3225 = vrot.slane %v3224, 4
  %v3226 = vadd.f32 %v3224, %v3225
  %v3227 = vrot.slane %v3226, 2
  %v3228 = vadd.f32 %v3226, %v3227
  %v3229 = vrot.slane %v3228, 1
  %v3230 = vadd.f32 %v3228, %v3229
  %v3231 = vsel %vm149, %v3193, 0.0
  %v3232 = vrot.slane %v3231, 4
  %v3233 = vadd.f32 %v3231, %v3232
  %v3234 = vrot.slane %v3233, 2
  %v3235 = vadd.f32 %v3233, %v3234
  %v3236 = vrot.slane %v3235, 1
  %v3237 = vadd.f32 %v3235, %v3236
  %v3238 = vsel %vm149, %v3194, 0.0
  %v3239 = vrot.slane %v3238, 4
  %v3240 = vadd.f32 %v3238, %v3239
  %v3241 = vrot.slane %v3240, 2
  %v3242 = vadd.f32 %v3240, %v3241
  %v3243 = vrot.slane %v3242, 1
  %v3244 = vadd.f32 %v3242, %v3243
  %v3245 = vsel %vm149, %v3195, 0.0
  %v3246 = vrot.slane %v3245, 4
  %v3247 = vadd.f32 %v3245, %v3246
  %v3248 = vrot.slane %v3247, 2
  %v3249 = vadd.f32 %v3247, %v3248
  %v3250 = vrot.slane %v3249, 1
  %v3251 = vadd.f32 %v3249, %v3250
  %v3252 = vadd.f32 %v3151, %v3202
  %v3253 = vadd.f32 %v3152, %v3209
  %v3254 = vadd.f32 %v3153, %v3216
  %v3255 = vadd.f32 %v3154, %v3223
  %v3256 = vadd.f32 %v3155, %v3230
  %v3257 = vadd.f32 %v3156, %v3237
  %v3258 = vadd.f32 %v3157, %v3244
  %v3259 = vadd.f32 %v3158, %v3251
  %v3260 = vld [vmem:[%s993] sm:$0xf]
  %v3261 = vperm.slane %v3260, 0
  %v3262 = vlaneseq
  %v3263 = vshrl.u32 %v3262, 7
  %3265 = vset.pattern.permute.xlu0 %v3263
  %3266 = vperm.xlu0 %3265, %v3261
  %v3267 = vpop.permute.xlu0 %3266
  %v3268 = vperm.slane %v3260, 1
  %v3269 = vlaneseq
  %v3270 = vshrl.u32 %v3269, 7
  %3272 = vset.pattern.permute.xlu0 %v3270
  %3273 = vperm.xlu0 %3272, %v3268
  %v3274 = vpop.permute.xlu0 %3273
  %v3275 = vperm.slane %v3260, 2
  %v3276 = vlaneseq
  %v3277 = vshrl.u32 %v3276, 7
  %3279 = vset.pattern.permute.xlu0 %v3277
  %3280 = vperm.xlu0 %3279, %v3275
  %v3281 = vpop.permute.xlu0 %3280
  %v3282 = vperm.slane %v3260, 3
  %v3283 = vlaneseq
  %v3284 = vshrl.u32 %v3283, 7
  %3286 = vset.pattern.permute.xlu0 %v3284
  %3287 = vperm.xlu0 %3286, %v3282
  %v3288 = vpop.permute.xlu0 %3287
  %v3289 = vmul.f32 %v3267, %v3056
  %v3290 = vmul.f32 %v3267, %v3057
  %v3291 = vmul.f32 %v3274, %v3056
  %v3292 = vmul.f32 %v3274, %v3057
  %v3293 = vmul.f32 %v3281, %v3056
  %v3294 = vmul.f32 %v3281, %v3057
  %v3295 = vmul.f32 %v3288, %v3056
  %v3296 = vmul.f32 %v3288, %v3057
  %v3297 = vsel %vm149, %v3289, 0.0
  %v3298 = vrot.slane %v3297, 4
  %v3299 = vadd.f32 %v3297, %v3298
  %v3300 = vrot.slane %v3299, 2
  %v3301 = vadd.f32 %v3299, %v3300
  %v3302 = vrot.slane %v3301, 1
  %v3303 = vadd.f32 %v3301, %v3302
  %v3304 = vsel %vm149, %v3290, 0.0
  %v3305 = vrot.slane %v3304, 4
  %v3306 = vadd.f32 %v3304, %v3305
  %v3307 = vrot.slane %v3306, 2
  %v3308 = vadd.f32 %v3306, %v3307
  %v3309 = vrot.slane %v3308, 1
  %v3310 = vadd.f32 %v3308, %v3309
  %v3311 = vsel %vm149, %v3291, 0.0
  %v3312 = vrot.slane %v3311, 4
  %v3313 = vadd.f32 %v3311, %v3312
  %v3314 = vrot.slane %v3313, 2
  %v3315 = vadd.f32 %v3313, %v3314
  %v3316 = vrot.slane %v3315, 1
  %v3317 = vadd.f32 %v3315, %v3316
  %v3318 = vsel %vm149, %v3292, 0.0
  %v3319 = vrot.slane %v3318, 4
  %v3320 = vadd.f32 %v3318, %v3319
  %v3321 = vrot.slane %v3320, 2
  %v3322 = vadd.f32 %v3320, %v3321
  %v3323 = vrot.slane %v3322, 1
  %v3324 = vadd.f32 %v3322, %v3323
  %v3325 = vsel %vm149, %v3293, 0.0
  %v3326 = vrot.slane %v3325, 4
  %v3327 = vadd.f32 %v3325, %v3326
  %v3328 = vrot.slane %v3327, 2
  %v3329 = vadd.f32 %v3327, %v3328
  %v3330 = vrot.slane %v3329, 1
  %v3331 = vadd.f32 %v3329, %v3330
  %v3332 = vsel %vm149, %v3294, 0.0
  %v3333 = vrot.slane %v3332, 4
  %v3334 = vadd.f32 %v3332, %v3333
  %v3335 = vrot.slane %v3334, 2
  %v3336 = vadd.f32 %v3334, %v3335
  %v3337 = vrot.slane %v3336, 1
  %v3338 = vadd.f32 %v3336, %v3337
  %v3339 = vsel %vm149, %v3295, 0.0
  %v3340 = vrot.slane %v3339, 4
  %v3341 = vadd.f32 %v3339, %v3340
  %v3342 = vrot.slane %v3341, 2
  %v3343 = vadd.f32 %v3341, %v3342
  %v3344 = vrot.slane %v3343, 1
  %v3345 = vadd.f32 %v3343, %v3344
  %v3346 = vsel %vm149, %v3296, 0.0
  %v3347 = vrot.slane %v3346, 4
  %v3348 = vadd.f32 %v3346, %v3347
  %v3349 = vrot.slane %v3348, 2
  %v3350 = vadd.f32 %v3348, %v3349
  %v3351 = vrot.slane %v3350, 1
  %v3352 = vadd.f32 %v3350, %v3351
  %v3353 = vadd.f32 %v3252, %v3303
  %v3354 = vadd.f32 %v3253, %v3310
  %v3355 = vadd.f32 %v3254, %v3317
  %v3356 = vadd.f32 %v3255, %v3324
  %v3357 = vadd.f32 %v3256, %v3331
  %v3358 = vadd.f32 %v3257, %v3338
  %v3359 = vadd.f32 %v3258, %v3345
  %v3360 = vadd.f32 %v3259, %v3352
  %v3369 = vsel %vm1103, %v3355, %v3353
  %v3370 = vsel %vm1105, %v3357, %v3369
  %v3371 = vsel %vm1107, %v3359, %v3370
  %v3372 = vsel %vm1103, %v3356, %v3354
  %v3373 = vsel %vm1105, %v3358, %v3372
  %v3374 = vsel %vm1107, %v3360, %v3373
  %v3377 = vsel %vm149, %v3371, 0.0
  %v3378 = vsel %vm149, %v3374, 0.0
  %v3379 = vadd.f32 %v3377, %v3378
  %3380 = vadd.xlane.f32.xlu0 %v3379
  %v3381 = vpop.xlane.xlu0 %3380
  %v3382 = vmul.f32 %v3381, 0.00390625
  %v3384 = vrot.slane %v3382, 1
  %v3385 = vrot.slane %v3382, 2
  %v3386 = vrot.slane %v3382, 3
  %v3391 = vsub.f32 %v3353, %v3382
  %v3392 = vsub.f32 %v3354, %v3382
  %v3393 = vsub.f32 %v3355, %v3384
  %v3394 = vsub.f32 %v3356, %v3384
  %v3395 = vsub.f32 %v3357, %v3385
  %v3396 = vsub.f32 %v3358, %v3385
  %v3397 = vsub.f32 %v3359, %v3386
  %v3398 = vsub.f32 %v3360, %v3386
  %v3399 = vmul.f32 %v3391, %v3391
  %v3400 = vmul.f32 %v3392, %v3392
  %v3401 = vmul.f32 %v3393, %v3393
  %v3402 = vmul.f32 %v3394, %v3394
  %v3403 = vmul.f32 %v3395, %v3395
  %v3404 = vmul.f32 %v3396, %v3396
  %v3405 = vmul.f32 %v3397, %v3397
  %v3406 = vmul.f32 %v3398, %v3398
  %v3415 = vrot.slane %v3401, 7
  %v3416 = vsel %vm1103, %v3415, %v3399
  %v3417 = vrot.slane %v3403, 6
  %v3418 = vsel %vm1105, %v3417, %v3416
  %v3419 = vrot.slane %v3405, 5
  %v3420 = vsel %vm1107, %v3419, %v3418
  %v3421 = vrot.slane %v3402, 7
  %v3422 = vsel %vm1103, %v3421, %v3400
  %v3423 = vrot.slane %v3404, 6
  %v3424 = vsel %vm1105, %v3423, %v3422
  %v3425 = vrot.slane %v3406, 5
  %v3426 = vsel %vm1107, %v3425, %v3424
  %v3429 = vsel %vm149, %v3420, 0.0
  %v3430 = vsel %vm149, %v3426, 0.0
  %v3431 = vadd.f32 %v3429, %v3430
  %3432 = vadd.xlane.f32.xlu0 %v3431
  %v3433 = vpop.xlane.xlu0 %3432
  %v3434 = vmul.f32 %v3433, 0.00390625
  %v3435 = vadd.f32 %v3434, 1e-05
  %v3436 = vrsqrt.pop %v3435
  %v3437 = vmul.f32 %v3436, %v3435
  %v3438 = vmul.f32 %v3437, %v3436
  %v3439 = vmul.f32 0.5, %v3438
  %v3440 = vsub.f32 1.5, %v3439
  %v3441 = vmul.f32 %v3436, %v3440
  %vm3442 = vweird.f32 %v3435
  %vm3443 = vweird.f32 %v3436
  %vm3444 = vmor %vm3442, %vm3443
  %v3445 = vsel %vm3444, %v3436, %v3441
  %v3447 = vrot.slane %v3445, 1
  %v3448 = vrot.slane %v3445, 2
  %v3449 = vrot.slane %v3445, 3
  %v3454 = vmul.f32 %v3391, %v3445
  %v3455 = vmul.f32 %v3392, %v3445
  %v3456 = vmul.f32 %v3393, %v3447
  %v3457 = vmul.f32 %v3394, %v3447
  %v3458 = vmul.f32 %v3395, %v3448
  %v3459 = vmul.f32 %v3396, %v3448
  %v3460 = vmul.f32 %v3397, %v3449
  %v3461 = vmul.f32 %v3398, %v3449
  %v3462 = vmax.f32 %v3454, 0.0
  %v3463 = vmax.f32 %v3455, 0.0
  %v3464 = vmax.f32 %v3456, 0.0
  %v3465 = vmax.f32 %v3457, 0.0
  %v3466 = vmax.f32 %v3458, 0.0
  %v3467 = vmax.f32 %v3459, 0.0
  %v3468 = vmax.f32 %v3460, 0.0
  %v3469 = vmax.f32 %v3461, 0.0
  %v3478 = vrot.slane %v3464, 7
  %v3479 = vsel %vm1103, %v3478, %v3462
  %v3480 = vrot.slane %v3466, 6
  %v3481 = vsel %vm1105, %v3480, %v3479
  %v3482 = vrot.slane %v3468, 5
  %v3483 = vsel %vm1107, %v3482, %v3481
  %v3484 = vrot.slane %v3465, 7
  %v3485 = vsel %vm1103, %v3484, %v3463
  %v3486 = vrot.slane %v3467, 6
  %v3487 = vsel %vm1105, %v3486, %v3485
  %v3488 = vrot.slane %v3469, 5
  %v3489 = vsel %vm1107, %v3488, %v3487
  %3492 = vrot.lane.b32.xlu0 %v3483, 16
  %v3493 = vpop.permute.xlu0 %3492
  %3494 = vrot.lane.b32.xlu0 %v3489, 16
  %v3495 = vpop.permute.xlu0 %3494
  %v3496 = vsel %vm45, %v3493, %v3495
  %v3497 = vsel %vm45, %v3495, %v3493
  %3498 = vrot.lane.b32.xlu0 %v3483, 112
  %v3499 = vpop.permute.xlu0 %3498
  %3500 = vrot.lane.b32.xlu0 %v3489, 112
  %v3501 = vpop.permute.xlu0 %3500
  %v3502 = vsel %vm71, %v3499, %v3501
  %v3503 = vsel %vm71, %v3501, %v3499
  %v3504 = vsel %vm76, %v3502, %v3497
  %v3505 = vsel %vm77, %v3503, %v3496
  %v3506 = vsel %vm82, %v3497, %v3502
  %v3507 = vsel %vm83, %v3496, %v3503
  %3508 = vrot.lane.b32.xlu0 %v3504, 1
  %v3509 = vpop.permute.xlu0 %3508
  %3510 = vrot.lane.b32.xlu0 %v3505, 1
  %v3511 = vpop.permute.xlu0 %3510
  %v3512 = vsel %vm90, %v3509, %v3511
  %v3513 = vsel %vm90, %v3511, %v3509
  %3514 = vrot.lane.b32.xlu0 %v3504, 127
  %v3515 = vpop.permute.xlu0 %3514
  %3516 = vrot.lane.b32.xlu0 %v3505, 127
  %v3517 = vpop.permute.xlu0 %3516
  %v3518 = vsel %vm97, %v3515, %v3517
  %v3519 = vsel %vm97, %v3517, %v3515
  %v3520 = vsel %vm102, %v3518, %v3513
  %v3521 = vsel %vm103, %v3519, %v3512
  %v3522 = vsel %vm108, %v3513, %v3518
  %v3523 = vsel %vm109, %v3512, %v3519
  %v3524 = vld [vmem:[%s2] sm:$0xf]
  %v3525 = vperm.slane %v3524, 0
  %v3526 = vlaneseq
  %v3527 = vshrl.u32 %v3526, 7
  %3529 = vset.pattern.permute.xlu0 %v3527
  %3530 = vperm.xlu0 %3529, %v3525
  %v3531 = vpop.permute.xlu0 %3530
  %v3532 = vperm.slane %v3524, 1
  %v3533 = vlaneseq
  %v3534 = vshrl.u32 %v3533, 7
  %3536 = vset.pattern.permute.xlu0 %v3534
  %3537 = vperm.xlu0 %3536, %v3532
  %v3538 = vpop.permute.xlu0 %3537
  %v3539 = vperm.slane %v3524, 2
  %v3540 = vlaneseq
  %v3541 = vshrl.u32 %v3540, 7
  %3543 = vset.pattern.permute.xlu0 %v3541
  %3544 = vperm.xlu0 %3543, %v3539
  %v3545 = vpop.permute.xlu0 %3544
  %v3546 = vperm.slane %v3524, 3
  %v3547 = vlaneseq
  %v3548 = vshrl.u32 %v3547, 7
  %3550 = vset.pattern.permute.xlu0 %v3548
  %3551 = vperm.xlu0 %3550, %v3546
  %v3552 = vpop.permute.xlu0 %3551
  %v3553 = vmul.f32 %v3531, %v3520
  %v3554 = vmul.f32 %v3531, %v3521
  %v3555 = vmul.f32 %v3538, %v3520
  %v3556 = vmul.f32 %v3538, %v3521
  %v3557 = vmul.f32 %v3545, %v3520
  %v3558 = vmul.f32 %v3545, %v3521
  %v3559 = vmul.f32 %v3552, %v3520
  %v3560 = vmul.f32 %v3552, %v3521
  %v3561 = vsel %vm149, %v3553, 0.0
  %v3562 = vrot.slane %v3561, 4
  %v3563 = vadd.f32 %v3561, %v3562
  %v3564 = vrot.slane %v3563, 2
  %v3565 = vadd.f32 %v3563, %v3564
  %v3566 = vrot.slane %v3565, 1
  %v3567 = vadd.f32 %v3565, %v3566
  %v3568 = vsel %vm149, %v3554, 0.0
  %v3569 = vrot.slane %v3568, 4
  %v3570 = vadd.f32 %v3568, %v3569
  %v3571 = vrot.slane %v3570, 2
  %v3572 = vadd.f32 %v3570, %v3571
  %v3573 = vrot.slane %v3572, 1
  %v3574 = vadd.f32 %v3572, %v3573
  %v3575 = vsel %vm149, %v3555, 0.0
  %v3576 = vrot.slane %v3575, 4
  %v3577 = vadd.f32 %v3575, %v3576
  %v3578 = vrot.slane %v3577, 2
  %v3579 = vadd.f32 %v3577, %v3578
  %v3580 = vrot.slane %v3579, 1
  %v3581 = vadd.f32 %v3579, %v3580
  %v3582 = vsel %vm149, %v3556, 0.0
  %v3583 = vrot.slane %v3582, 4
  %v3584 = vadd.f32 %v3582, %v3583
  %v3585 = vrot.slane %v3584, 2
  %v3586 = vadd.f32 %v3584, %v3585
  %v3587 = vrot.slane %v3586, 1
  %v3588 = vadd.f32 %v3586, %v3587
  %v3589 = vsel %vm149, %v3557, 0.0
  %v3590 = vrot.slane %v3589, 4
  %v3591 = vadd.f32 %v3589, %v3590
  %v3592 = vrot.slane %v3591, 2
  %v3593 = vadd.f32 %v3591, %v3592
  %v3594 = vrot.slane %v3593, 1
  %v3595 = vadd.f32 %v3593, %v3594
  %v3596 = vsel %vm149, %v3558, 0.0
  %v3597 = vrot.slane %v3596, 4
  %v3598 = vadd.f32 %v3596, %v3597
  %v3599 = vrot.slane %v3598, 2
  %v3600 = vadd.f32 %v3598, %v3599
  %v3601 = vrot.slane %v3600, 1
  %v3602 = vadd.f32 %v3600, %v3601
  %v3603 = vsel %vm149, %v3559, 0.0
  %v3604 = vrot.slane %v3603, 4
  %v3605 = vadd.f32 %v3603, %v3604
  %v3606 = vrot.slane %v3605, 2
  %v3607 = vadd.f32 %v3605, %v3606
  %v3608 = vrot.slane %v3607, 1
  %v3609 = vadd.f32 %v3607, %v3608
  %v3610 = vsel %vm149, %v3560, 0.0
  %v3611 = vrot.slane %v3610, 4
  %v3612 = vadd.f32 %v3610, %v3611
  %v3613 = vrot.slane %v3612, 2
  %v3614 = vadd.f32 %v3612, %v3613
  %v3615 = vrot.slane %v3614, 1
  %v3616 = vadd.f32 %v3614, %v3615
  %v3617 = vadd.f32 %v3567, 0.0
  %v3618 = vadd.f32 %v3574, 0.0
  %v3619 = vadd.f32 %v3581, 0.0
  %v3620 = vadd.f32 %v3588, 0.0
  %v3621 = vadd.f32 %v3595, 0.0
  %v3622 = vadd.f32 %v3602, 0.0
  %v3623 = vadd.f32 %v3609, 0.0
  %v3624 = vadd.f32 %v3616, 0.0
  %v3625 = vld [vmem:[%s1362] sm:$0xf]
  %v3626 = vperm.slane %v3625, 0
  %v3627 = vlaneseq
  %v3628 = vshrl.u32 %v3627, 7
  %3630 = vset.pattern.permute.xlu0 %v3628
  %3631 = vperm.xlu0 %3630, %v3626
  %v3632 = vpop.permute.xlu0 %3631
  %v3633 = vperm.slane %v3625, 1
  %v3634 = vlaneseq
  %v3635 = vshrl.u32 %v3634, 7
  %3637 = vset.pattern.permute.xlu0 %v3635
  %3638 = vperm.xlu0 %3637, %v3633
  %v3639 = vpop.permute.xlu0 %3638
  %v3640 = vperm.slane %v3625, 2
  %v3641 = vlaneseq
  %v3642 = vshrl.u32 %v3641, 7
  %3644 = vset.pattern.permute.xlu0 %v3642
  %3645 = vperm.xlu0 %3644, %v3640
  %v3646 = vpop.permute.xlu0 %3645
  %v3647 = vperm.slane %v3625, 3
  %v3648 = vlaneseq
  %v3649 = vshrl.u32 %v3648, 7
  %3651 = vset.pattern.permute.xlu0 %v3649
  %3652 = vperm.xlu0 %3651, %v3647
  %v3653 = vpop.permute.xlu0 %3652
  %v3654 = vmul.f32 %v3632, %v3504
  %v3655 = vmul.f32 %v3632, %v3505
  %v3656 = vmul.f32 %v3639, %v3504
  %v3657 = vmul.f32 %v3639, %v3505
  %v3658 = vmul.f32 %v3646, %v3504
  %v3659 = vmul.f32 %v3646, %v3505
  %v3660 = vmul.f32 %v3653, %v3504
  %v3661 = vmul.f32 %v3653, %v3505
  %v3662 = vsel %vm149, %v3654, 0.0
  %v3663 = vrot.slane %v3662, 4
  %v3664 = vadd.f32 %v3662, %v3663
  %v3665 = vrot.slane %v3664, 2
  %v3666 = vadd.f32 %v3664, %v3665
  %v3667 = vrot.slane %v3666, 1
  %v3668 = vadd.f32 %v3666, %v3667
  %v3669 = vsel %vm149, %v3655, 0.0
  %v3670 = vrot.slane %v3669, 4
  %v3671 = vadd.f32 %v3669, %v3670
  %v3672 = vrot.slane %v3671, 2
  %v3673 = vadd.f32 %v3671, %v3672
  %v3674 = vrot.slane %v3673, 1
  %v3675 = vadd.f32 %v3673, %v3674
  %v3676 = vsel %vm149, %v3656, 0.0
  %v3677 = vrot.slane %v3676, 4
  %v3678 = vadd.f32 %v3676, %v3677
  %v3679 = vrot.slane %v3678, 2
  %v3680 = vadd.f32 %v3678, %v3679
  %v3681 = vrot.slane %v3680, 1
  %v3682 = vadd.f32 %v3680, %v3681
  %v3683 = vsel %vm149, %v3657, 0.0
  %v3684 = vrot.slane %v3683, 4
  %v3685 = vadd.f32 %v3683, %v3684
  %v3686 = vrot.slane %v3685, 2
  %v3687 = vadd.f32 %v3685, %v3686
  %v3688 = vrot.slane %v3687, 1
  %v3689 = vadd.f32 %v3687, %v3688
  %v3690 = vsel %vm149, %v3658, 0.0
  %v3691 = vrot.slane %v3690, 4
  %v3692 = vadd.f32 %v3690, %v3691
  %v3693 = vrot.slane %v3692, 2
  %v3694 = vadd.f32 %v3692, %v3693
  %v3695 = vrot.slane %v3694, 1
  %v3696 = vadd.f32 %v3694, %v3695
  %v3697 = vsel %vm149, %v3659, 0.0
  %v3698 = vrot.slane %v3697, 4
  %v3699 = vadd.f32 %v3697, %v3698
  %v3700 = vrot.slane %v3699, 2
  %v3701 = vadd.f32 %v3699, %v3700
  %v3702 = vrot.slane %v3701, 1
  %v3703 = vadd.f32 %v3701, %v3702
  %v3704 = vsel %vm149, %v3660, 0.0
  %v3705 = vrot.slane %v3704, 4
  %v3706 = vadd.f32 %v3704, %v3705
  %v3707 = vrot.slane %v3706, 2
  %v3708 = vadd.f32 %v3706, %v3707
  %v3709 = vrot.slane %v3708, 1
  %v3710 = vadd.f32 %v3708, %v3709
  %v3711 = vsel %vm149, %v3661, 0.0
  %v3712 = vrot.slane %v3711, 4
  %v3713 = vadd.f32 %v3711, %v3712
  %v3714 = vrot.slane %v3713, 2
  %v3715 = vadd.f32 %v3713, %v3714
  %v3716 = vrot.slane %v3715, 1
  %v3717 = vadd.f32 %v3715, %v3716
  %v3718 = vadd.f32 %v3617, %v3668
  %v3719 = vadd.f32 %v3618, %v3675
  %v3720 = vadd.f32 %v3619, %v3682
  %v3721 = vadd.f32 %v3620, %v3689
  %v3722 = vadd.f32 %v3621, %v3696
  %v3723 = vadd.f32 %v3622, %v3703
  %v3724 = vadd.f32 %v3623, %v3710
  %v3725 = vadd.f32 %v3624, %v3717
  %v3726 = vld [vmem:[%s1464] sm:$0xf]
  %v3727 = vperm.slane %v3726, 0
  %v3728 = vlaneseq
  %v3729 = vshrl.u32 %v3728, 7
  %3731 = vset.pattern.permute.xlu0 %v3729
  %3732 = vperm.xlu0 %3731, %v3727
  %v3733 = vpop.permute.xlu0 %3732
  %v3734 = vperm.slane %v3726, 1
  %v3735 = vlaneseq
  %v3736 = vshrl.u32 %v3735, 7
  %3738 = vset.pattern.permute.xlu0 %v3736
  %3739 = vperm.xlu0 %3738, %v3734
  %v3740 = vpop.permute.xlu0 %3739
  %v3741 = vperm.slane %v3726, 2
  %v3742 = vlaneseq
  %v3743 = vshrl.u32 %v3742, 7
  %3745 = vset.pattern.permute.xlu0 %v3743
  %3746 = vperm.xlu0 %3745, %v3741
  %v3747 = vpop.permute.xlu0 %3746
  %v3748 = vperm.slane %v3726, 3
  %v3749 = vlaneseq
  %v3750 = vshrl.u32 %v3749, 7
  %3752 = vset.pattern.permute.xlu0 %v3750
  %3753 = vperm.xlu0 %3752, %v3748
  %v3754 = vpop.permute.xlu0 %3753
  %v3755 = vmul.f32 %v3733, %v3522
  %v3756 = vmul.f32 %v3733, %v3523
  %v3757 = vmul.f32 %v3740, %v3522
  %v3758 = vmul.f32 %v3740, %v3523
  %v3759 = vmul.f32 %v3747, %v3522
  %v3760 = vmul.f32 %v3747, %v3523
  %v3761 = vmul.f32 %v3754, %v3522
  %v3762 = vmul.f32 %v3754, %v3523
  %v3763 = vsel %vm149, %v3755, 0.0
  %v3764 = vrot.slane %v3763, 4
  %v3765 = vadd.f32 %v3763, %v3764
  %v3766 = vrot.slane %v3765, 2
  %v3767 = vadd.f32 %v3765, %v3766
  %v3768 = vrot.slane %v3767, 1
  %v3769 = vadd.f32 %v3767, %v3768
  %v3770 = vsel %vm149, %v3756, 0.0
  %v3771 = vrot.slane %v3770, 4
  %v3772 = vadd.f32 %v3770, %v3771
  %v3773 = vrot.slane %v3772, 2
  %v3774 = vadd.f32 %v3772, %v3773
  %v3775 = vrot.slane %v3774, 1
  %v3776 = vadd.f32 %v3774, %v3775
  %v3777 = vsel %vm149, %v3757, 0.0
  %v3778 = vrot.slane %v3777, 4
  %v3779 = vadd.f32 %v3777, %v3778
  %v3780 = vrot.slane %v3779, 2
  %v3781 = vadd.f32 %v3779, %v3780
  %v3782 = vrot.slane %v3781, 1
  %v3783 = vadd.f32 %v3781, %v3782
  %v3784 = vsel %vm149, %v3758, 0.0
  %v3785 = vrot.slane %v3784, 4
  %v3786 = vadd.f32 %v3784, %v3785
  %v3787 = vrot.slane %v3786, 2
  %v3788 = vadd.f32 %v3786, %v3787
  %v3789 = vrot.slane %v3788, 1
  %v3790 = vadd.f32 %v3788, %v3789
  %v3791 = vsel %vm149, %v3759, 0.0
  %v3792 = vrot.slane %v3791, 4
  %v3793 = vadd.f32 %v3791, %v3792
  %v3794 = vrot.slane %v3793, 2
  %v3795 = vadd.f32 %v3793, %v3794
  %v3796 = vrot.slane %v3795, 1
  %v3797 = vadd.f32 %v3795, %v3796
  %v3798 = vsel %vm149, %v3760, 0.0
  %v3799 = vrot.slane %v3798, 4
  %v3800 = vadd.f32 %v3798, %v3799
  %v3801 = vrot.slane %v3800, 2
  %v3802 = vadd.f32 %v3800, %v3801
  %v3803 = vrot.slane %v3802, 1
  %v3804 = vadd.f32 %v3802, %v3803
  %v3805 = vsel %vm149, %v3761, 0.0
  %v3806 = vrot.slane %v3805, 4
  %v3807 = vadd.f32 %v3805, %v3806
  %v3808 = vrot.slane %v3807, 2
  %v3809 = vadd.f32 %v3807, %v3808
  %v3810 = vrot.slane %v3809, 1
  %v3811 = vadd.f32 %v3809, %v3810
  %v3812 = vsel %vm149, %v3762, 0.0
  %v3813 = vrot.slane %v3812, 4
  %v3814 = vadd.f32 %v3812, %v3813
  %v3815 = vrot.slane %v3814, 2
  %v3816 = vadd.f32 %v3814, %v3815
  %v3817 = vrot.slane %v3816, 1
  %v3818 = vadd.f32 %v3816, %v3817
  %v3819 = vadd.f32 %v3718, %v3769
  %v3820 = vadd.f32 %v3719, %v3776
  %v3821 = vadd.f32 %v3720, %v3783
  %v3822 = vadd.f32 %v3721, %v3790
  %v3823 = vadd.f32 %v3722, %v3797
  %v3824 = vadd.f32 %v3723, %v3804
  %v3825 = vadd.f32 %v3724, %v3811
  %v3826 = vadd.f32 %v3725, %v3818
  %3827 = vrot.lane.b32.xlu0 %v3483, 1
  %v3828 = vpop.permute.xlu0 %3827
  %3829 = vrot.lane.b32.xlu0 %v3489, 1
  %v3830 = vpop.permute.xlu0 %3829
  %v3831 = vsel %vm90, %v3828, %v3830
  %v3832 = vsel %vm90, %v3830, %v3828
  %3833 = vrot.lane.b32.xlu0 %v3483, 127
  %v3834 = vpop.permute.xlu0 %3833
  %3835 = vrot.lane.b32.xlu0 %v3489, 127
  %v3836 = vpop.permute.xlu0 %3835
  %v3837 = vsel %vm97, %v3834, %v3836
  %v3838 = vsel %vm97, %v3836, %v3834
  %v3839 = vsel %vm102, %v3837, %v3832
  %v3840 = vsel %vm103, %v3838, %v3831
  %v3841 = vsel %vm108, %v3832, %v3837
  %v3842 = vsel %vm109, %v3831, %v3838
  %v3843 = vld [vmem:[%s1582] sm:$0xf]
  %v3844 = vperm.slane %v3843, 0
  %v3845 = vlaneseq
  %v3846 = vshrl.u32 %v3845, 7
  %3848 = vset.pattern.permute.xlu0 %v3846
  %3849 = vperm.xlu0 %3848, %v3844
  %v3850 = vpop.permute.xlu0 %3849
  %v3851 = vperm.slane %v3843, 1
  %v3852 = vlaneseq
  %v3853 = vshrl.u32 %v3852, 7
  %3855 = vset.pattern.permute.xlu0 %v3853
  %3856 = vperm.xlu0 %3855, %v3851
  %v3857 = vpop.permute.xlu0 %3856
  %v3858 = vperm.slane %v3843, 2
  %v3859 = vlaneseq
  %v3860 = vshrl.u32 %v3859, 7
  %3862 = vset.pattern.permute.xlu0 %v3860
  %3863 = vperm.xlu0 %3862, %v3858
  %v3864 = vpop.permute.xlu0 %3863
  %v3865 = vperm.slane %v3843, 3
  %v3866 = vlaneseq
  %v3867 = vshrl.u32 %v3866, 7
  %3869 = vset.pattern.permute.xlu0 %v3867
  %3870 = vperm.xlu0 %3869, %v3865
  %v3871 = vpop.permute.xlu0 %3870
  %v3872 = vmul.f32 %v3850, %v3839
  %v3873 = vmul.f32 %v3850, %v3840
  %v3874 = vmul.f32 %v3857, %v3839
  %v3875 = vmul.f32 %v3857, %v3840
  %v3876 = vmul.f32 %v3864, %v3839
  %v3877 = vmul.f32 %v3864, %v3840
  %v3878 = vmul.f32 %v3871, %v3839
  %v3879 = vmul.f32 %v3871, %v3840
  %v3880 = vsel %vm149, %v3872, 0.0
  %v3881 = vrot.slane %v3880, 4
  %v3882 = vadd.f32 %v3880, %v3881
  %v3883 = vrot.slane %v3882, 2
  %v3884 = vadd.f32 %v3882, %v3883
  %v3885 = vrot.slane %v3884, 1
  %v3886 = vadd.f32 %v3884, %v3885
  %v3887 = vsel %vm149, %v3873, 0.0
  %v3888 = vrot.slane %v3887, 4
  %v3889 = vadd.f32 %v3887, %v3888
  %v3890 = vrot.slane %v3889, 2
  %v3891 = vadd.f32 %v3889, %v3890
  %v3892 = vrot.slane %v3891, 1
  %v3893 = vadd.f32 %v3891, %v3892
  %v3894 = vsel %vm149, %v3874, 0.0
  %v3895 = vrot.slane %v3894, 4
  %v3896 = vadd.f32 %v3894, %v3895
  %v3897 = vrot.slane %v3896, 2
  %v3898 = vadd.f32 %v3896, %v3897
  %v3899 = vrot.slane %v3898, 1
  %v3900 = vadd.f32 %v3898, %v3899
  %v3901 = vsel %vm149, %v3875, 0.0
  %v3902 = vrot.slane %v3901, 4
  %v3903 = vadd.f32 %v3901, %v3902
  %v3904 = vrot.slane %v3903, 2
  %v3905 = vadd.f32 %v3903, %v3904
  %v3906 = vrot.slane %v3905, 1
  %v3907 = vadd.f32 %v3905, %v3906
  %v3908 = vsel %vm149, %v3876, 0.0
  %v3909 = vrot.slane %v3908, 4
  %v3910 = vadd.f32 %v3908, %v3909
  %v3911 = vrot.slane %v3910, 2
  %v3912 = vadd.f32 %v3910, %v3911
  %v3913 = vrot.slane %v3912, 1
  %v3914 = vadd.f32 %v3912, %v3913
  %v3915 = vsel %vm149, %v3877, 0.0
  %v3916 = vrot.slane %v3915, 4
  %v3917 = vadd.f32 %v3915, %v3916
  %v3918 = vrot.slane %v3917, 2
  %v3919 = vadd.f32 %v3917, %v3918
  %v3920 = vrot.slane %v3919, 1
  %v3921 = vadd.f32 %v3919, %v3920
  %v3922 = vsel %vm149, %v3878, 0.0
  %v3923 = vrot.slane %v3922, 4
  %v3924 = vadd.f32 %v3922, %v3923
  %v3925 = vrot.slane %v3924, 2
  %v3926 = vadd.f32 %v3924, %v3925
  %v3927 = vrot.slane %v3926, 1
  %v3928 = vadd.f32 %v3926, %v3927
  %v3929 = vsel %vm149, %v3879, 0.0
  %v3930 = vrot.slane %v3929, 4
  %v3931 = vadd.f32 %v3929, %v3930
  %v3932 = vrot.slane %v3931, 2
  %v3933 = vadd.f32 %v3931, %v3932
  %v3934 = vrot.slane %v3933, 1
  %v3935 = vadd.f32 %v3933, %v3934
  %v3936 = vadd.f32 %v3819, %v3886
  %v3937 = vadd.f32 %v3820, %v3893
  %v3938 = vadd.f32 %v3821, %v3900
  %v3939 = vadd.f32 %v3822, %v3907
  %v3940 = vadd.f32 %v3823, %v3914
  %v3941 = vadd.f32 %v3824, %v3921
  %v3942 = vadd.f32 %v3825, %v3928
  %v3943 = vadd.f32 %v3826, %v3935
  %v3944 = vld [vmem:[%s1684] sm:$0xf]
  %v3945 = vperm.slane %v3944, 0
  %v3946 = vlaneseq
  %v3947 = vshrl.u32 %v3946, 7
  %3949 = vset.pattern.permute.xlu0 %v3947
  %3950 = vperm.xlu0 %3949, %v3945
  %v3951 = vpop.permute.xlu0 %3950
  %v3952 = vperm.slane %v3944, 1
  %v3953 = vlaneseq
  %v3954 = vshrl.u32 %v3953, 7
  %3956 = vset.pattern.permute.xlu0 %v3954
  %3957 = vperm.xlu0 %3956, %v3952
  %v3958 = vpop.permute.xlu0 %3957
  %v3959 = vperm.slane %v3944, 2
  %v3960 = vlaneseq
  %v3961 = vshrl.u32 %v3960, 7
  %3963 = vset.pattern.permute.xlu0 %v3961
  %3964 = vperm.xlu0 %3963, %v3959
  %v3965 = vpop.permute.xlu0 %3964
  %v3966 = vperm.slane %v3944, 3
  %v3967 = vlaneseq
  %v3968 = vshrl.u32 %v3967, 7
  %3970 = vset.pattern.permute.xlu0 %v3968
  %3971 = vperm.xlu0 %3970, %v3966
  %v3972 = vpop.permute.xlu0 %3971
  %v3973 = vmul.f32 %v3951, %v3483
  %v3974 = vmul.f32 %v3951, %v3489
  %v3975 = vmul.f32 %v3958, %v3483
  %v3976 = vmul.f32 %v3958, %v3489
  %v3977 = vmul.f32 %v3965, %v3483
  %v3978 = vmul.f32 %v3965, %v3489
  %v3979 = vmul.f32 %v3972, %v3483
  %v3980 = vmul.f32 %v3972, %v3489
  %v3981 = vsel %vm149, %v3973, 0.0
  %v3982 = vrot.slane %v3981, 4
  %v3983 = vadd.f32 %v3981, %v3982
  %v3984 = vrot.slane %v3983, 2
  %v3985 = vadd.f32 %v3983, %v3984
  %v3986 = vrot.slane %v3985, 1
  %v3987 = vadd.f32 %v3985, %v3986
  %v3988 = vsel %vm149, %v3974, 0.0
  %v3989 = vrot.slane %v3988, 4
  %v3990 = vadd.f32 %v3988, %v3989
  %v3991 = vrot.slane %v3990, 2
  %v3992 = vadd.f32 %v3990, %v3991
  %v3993 = vrot.slane %v3992, 1
  %v3994 = vadd.f32 %v3992, %v3993
  %v3995 = vsel %vm149, %v3975, 0.0
  %v3996 = vrot.slane %v3995, 4
  %v3997 = vadd.f32 %v3995, %v3996
  %v3998 = vrot.slane %v3997, 2
  %v3999 = vadd.f32 %v3997, %v3998
  %v4000 = vrot.slane %v3999, 1
  %v4001 = vadd.f32 %v3999, %v4000
  %v4002 = vsel %vm149, %v3976, 0.0
  %v4003 = vrot.slane %v4002, 4
  %v4004 = vadd.f32 %v4002, %v4003
  %v4005 = vrot.slane %v4004, 2
  %v4006 = vadd.f32 %v4004, %v4005
  %v4007 = vrot.slane %v4006, 1
  %v4008 = vadd.f32 %v4006, %v4007
  %v4009 = vsel %vm149, %v3977, 0.0
  %v4010 = vrot.slane %v4009, 4
  %v4011 = vadd.f32 %v4009, %v4010
  %v4012 = vrot.slane %v4011, 2
  %v4013 = vadd.f32 %v4011, %v4012
  %v4014 = vrot.slane %v4013, 1
  %v4015 = vadd.f32 %v4013, %v4014
  %v4016 = vsel %vm149, %v3978, 0.0
  %v4017 = vrot.slane %v4016, 4
  %v4018 = vadd.f32 %v4016, %v4017
  %v4019 = vrot.slane %v4018, 2
  %v4020 = vadd.f32 %v4018, %v4019
  %v4021 = vrot.slane %v4020, 1
  %v4022 = vadd.f32 %v4020, %v4021
  %v4023 = vsel %vm149, %v3979, 0.0
  %v4024 = vrot.slane %v4023, 4
  %v4025 = vadd.f32 %v4023, %v4024
  %v4026 = vrot.slane %v4025, 2
  %v4027 = vadd.f32 %v4025, %v4026
  %v4028 = vrot.slane %v4027, 1
  %v4029 = vadd.f32 %v4027, %v4028
  %v4030 = vsel %vm149, %v3980, 0.0
  %v4031 = vrot.slane %v4030, 4
  %v4032 = vadd.f32 %v4030, %v4031
  %v4033 = vrot.slane %v4032, 2
  %v4034 = vadd.f32 %v4032, %v4033
  %v4035 = vrot.slane %v4034, 1
  %v4036 = vadd.f32 %v4034, %v4035
  %v4037 = vadd.f32 %v3936, %v3987
  %v4038 = vadd.f32 %v3937, %v3994
  %v4039 = vadd.f32 %v3938, %v4001
  %v4040 = vadd.f32 %v3939, %v4008
  %v4041 = vadd.f32 %v3940, %v4015
  %v4042 = vadd.f32 %v3941, %v4022
  %v4043 = vadd.f32 %v3942, %v4029
  %v4044 = vadd.f32 %v3943, %v4036
  %v4045 = vld [vmem:[%s1786] sm:$0xf]
  %v4046 = vperm.slane %v4045, 0
  %v4047 = vlaneseq
  %v4048 = vshrl.u32 %v4047, 7
  %4050 = vset.pattern.permute.xlu0 %v4048
  %4051 = vperm.xlu0 %4050, %v4046
  %v4052 = vpop.permute.xlu0 %4051
  %v4053 = vperm.slane %v4045, 1
  %v4054 = vlaneseq
  %v4055 = vshrl.u32 %v4054, 7
  %4057 = vset.pattern.permute.xlu0 %v4055
  %4058 = vperm.xlu0 %4057, %v4053
  %v4059 = vpop.permute.xlu0 %4058
  %v4060 = vperm.slane %v4045, 2
  %v4061 = vlaneseq
  %v4062 = vshrl.u32 %v4061, 7
  %4064 = vset.pattern.permute.xlu0 %v4062
  %4065 = vperm.xlu0 %4064, %v4060
  %v4066 = vpop.permute.xlu0 %4065
  %v4067 = vperm.slane %v4045, 3
  %v4068 = vlaneseq
  %v4069 = vshrl.u32 %v4068, 7
  %4071 = vset.pattern.permute.xlu0 %v4069
  %4072 = vperm.xlu0 %4071, %v4067
  %v4073 = vpop.permute.xlu0 %4072
  %v4074 = vmul.f32 %v4052, %v3841
  %v4075 = vmul.f32 %v4052, %v3842
  %v4076 = vmul.f32 %v4059, %v3841
  %v4077 = vmul.f32 %v4059, %v3842
  %v4078 = vmul.f32 %v4066, %v3841
  %v4079 = vmul.f32 %v4066, %v3842
  %v4080 = vmul.f32 %v4073, %v3841
  %v4081 = vmul.f32 %v4073, %v3842
  %v4082 = vsel %vm149, %v4074, 0.0
  %v4083 = vrot.slane %v4082, 4
  %v4084 = vadd.f32 %v4082, %v4083
  %v4085 = vrot.slane %v4084, 2
  %v4086 = vadd.f32 %v4084, %v4085
  %v4087 = vrot.slane %v4086, 1
  %v4088 = vadd.f32 %v4086, %v4087
  %v4089 = vsel %vm149, %v4075, 0.0
  %v4090 = vrot.slane %v4089, 4
  %v4091 = vadd.f32 %v4089, %v4090
  %v4092 = vrot.slane %v4091, 2
  %v4093 = vadd.f32 %v4091, %v4092
  %v4094 = vrot.slane %v4093, 1
  %v4095 = vadd.f32 %v4093, %v4094
  %v4096 = vsel %vm149, %v4076, 0.0
  %v4097 = vrot.slane %v4096, 4
  %v4098 = vadd.f32 %v4096, %v4097
  %v4099 = vrot.slane %v4098, 2
  %v4100 = vadd.f32 %v4098, %v4099
  %v4101 = vrot.slane %v4100, 1
  %v4102 = vadd.f32 %v4100, %v4101
  %v4103 = vsel %vm149, %v4077, 0.0
  %v4104 = vrot.slane %v4103, 4
  %v4105 = vadd.f32 %v4103, %v4104
  %v4106 = vrot.slane %v4105, 2
  %v4107 = vadd.f32 %v4105, %v4106
  %v4108 = vrot.slane %v4107, 1
  %v4109 = vadd.f32 %v4107, %v4108
  %v4110 = vsel %vm149, %v4078, 0.0
  %v4111 = vrot.slane %v4110, 4
  %v4112 = vadd.f32 %v4110, %v4111
  %v4113 = vrot.slane %v4112, 2
  %v4114 = vadd.f32 %v4112, %v4113
  %v4115 = vrot.slane %v4114, 1
  %v4116 = vadd.f32 %v4114, %v4115
  %v4117 = vsel %vm149, %v4079, 0.0
  %v4118 = vrot.slane %v4117, 4
  %v4119 = vadd.f32 %v4117, %v4118
  %v4120 = vrot.slane %v4119, 2
  %v4121 = vadd.f32 %v4119, %v4120
  %v4122 = vrot.slane %v4121, 1
  %v4123 = vadd.f32 %v4121, %v4122
  %v4124 = vsel %vm149, %v4080, 0.0
  %v4125 = vrot.slane %v4124, 4
  %v4126 = vadd.f32 %v4124, %v4125
  %v4127 = vrot.slane %v4126, 2
  %v4128 = vadd.f32 %v4126, %v4127
  %v4129 = vrot.slane %v4128, 1
  %v4130 = vadd.f32 %v4128, %v4129
  %v4131 = vsel %vm149, %v4081, 0.0
  %v4132 = vrot.slane %v4131, 4
  %v4133 = vadd.f32 %v4131, %v4132
  %v4134 = vrot.slane %v4133, 2
  %v4135 = vadd.f32 %v4133, %v4134
  %v4136 = vrot.slane %v4135, 1
  %v4137 = vadd.f32 %v4135, %v4136
  %v4138 = vadd.f32 %v4037, %v4088
  %v4139 = vadd.f32 %v4038, %v4095
  %v4140 = vadd.f32 %v4039, %v4102
  %v4141 = vadd.f32 %v4040, %v4109
  %v4142 = vadd.f32 %v4041, %v4116
  %v4143 = vadd.f32 %v4042, %v4123
  %v4144 = vadd.f32 %v4043, %v4130
  %v4145 = vadd.f32 %v4044, %v4137
  %4146 = vrot.lane.b32.xlu0 %v3506, 1
  %v4147 = vpop.permute.xlu0 %4146
  %4148 = vrot.lane.b32.xlu0 %v3507, 1
  %v4149 = vpop.permute.xlu0 %4148
  %v4150 = vsel %vm90, %v4147, %v4149
  %v4151 = vsel %vm90, %v4149, %v4147
  %4152 = vrot.lane.b32.xlu0 %v3506, 127
  %v4153 = vpop.permute.xlu0 %4152
  %4154 = vrot.lane.b32.xlu0 %v3507, 127
  %v4155 = vpop.permute.xlu0 %4154
  %v4156 = vsel %vm97, %v4153, %v4155
  %v4157 = vsel %vm97, %v4155, %v4153
  %v4158 = vsel %vm102, %v4156, %v4151
  %v4159 = vsel %vm103, %v4157, %v4150
  %v4160 = vsel %vm108, %v4151, %v4156
  %v4161 = vsel %vm109, %v4150, %v4157
  %v4162 = vld [vmem:[%s1904] sm:$0xf]
  %v4163 = vperm.slane %v4162, 0
  %v4164 = vlaneseq
  %v4165 = vshrl.u32 %v4164, 7
  %4167 = vset.pattern.permute.xlu0 %v4165
  %4168 = vperm.xlu0 %4167, %v4163
  %v4169 = vpop.permute.xlu0 %4168
  %v4170 = vperm.slane %v4162, 1
  %v4171 = vlaneseq
  %v4172 = vshrl.u32 %v4171, 7
  %4174 = vset.pattern.permute.xlu0 %v4172
  %4175 = vperm.xlu0 %4174, %v4170
  %v4176 = vpop.permute.xlu0 %4175
  %v4177 = vperm.slane %v4162, 2
  %v4178 = vlaneseq
  %v4179 = vshrl.u32 %v4178, 7
  %4181 = vset.pattern.permute.xlu0 %v4179
  %4182 = vperm.xlu0 %4181, %v4177
  %v4183 = vpop.permute.xlu0 %4182
  %v4184 = vperm.slane %v4162, 3
  %v4185 = vlaneseq
  %v4186 = vshrl.u32 %v4185, 7
  %4188 = vset.pattern.permute.xlu0 %v4186
  %4189 = vperm.xlu0 %4188, %v4184
  %v4190 = vpop.permute.xlu0 %4189
  %v4191 = vmul.f32 %v4169, %v4158
  %v4192 = vmul.f32 %v4169, %v4159
  %v4193 = vmul.f32 %v4176, %v4158
  %v4194 = vmul.f32 %v4176, %v4159
  %v4195 = vmul.f32 %v4183, %v4158
  %v4196 = vmul.f32 %v4183, %v4159
  %v4197 = vmul.f32 %v4190, %v4158
  %v4198 = vmul.f32 %v4190, %v4159
  %v4199 = vsel %vm149, %v4191, 0.0
  %v4200 = vrot.slane %v4199, 4
  %v4201 = vadd.f32 %v4199, %v4200
  %v4202 = vrot.slane %v4201, 2
  %v4203 = vadd.f32 %v4201, %v4202
  %v4204 = vrot.slane %v4203, 1
  %v4205 = vadd.f32 %v4203, %v4204
  %v4206 = vsel %vm149, %v4192, 0.0
  %v4207 = vrot.slane %v4206, 4
  %v4208 = vadd.f32 %v4206, %v4207
  %v4209 = vrot.slane %v4208, 2
  %v4210 = vadd.f32 %v4208, %v4209
  %v4211 = vrot.slane %v4210, 1
  %v4212 = vadd.f32 %v4210, %v4211
  %v4213 = vsel %vm149, %v4193, 0.0
  %v4214 = vrot.slane %v4213, 4
  %v4215 = vadd.f32 %v4213, %v4214
  %v4216 = vrot.slane %v4215, 2
  %v4217 = vadd.f32 %v4215, %v4216
  %v4218 = vrot.slane %v4217, 1
  %v4219 = vadd.f32 %v4217, %v4218
  %v4220 = vsel %vm149, %v4194, 0.0
  %v4221 = vrot.slane %v4220, 4
  %v4222 = vadd.f32 %v4220, %v4221
  %v4223 = vrot.slane %v4222, 2
  %v4224 = vadd.f32 %v4222, %v4223
  %v4225 = vrot.slane %v4224, 1
  %v4226 = vadd.f32 %v4224, %v4225
  %v4227 = vsel %vm149, %v4195, 0.0
  %v4228 = vrot.slane %v4227, 4
  %v4229 = vadd.f32 %v4227, %v4228
  %v4230 = vrot.slane %v4229, 2
  %v4231 = vadd.f32 %v4229, %v4230
  %v4232 = vrot.slane %v4231, 1
  %v4233 = vadd.f32 %v4231, %v4232
  %v4234 = vsel %vm149, %v4196, 0.0
  %v4235 = vrot.slane %v4234, 4
  %v4236 = vadd.f32 %v4234, %v4235
  %v4237 = vrot.slane %v4236, 2
  %v4238 = vadd.f32 %v4236, %v4237
  %v4239 = vrot.slane %v4238, 1
  %v4240 = vadd.f32 %v4238, %v4239
  %v4241 = vsel %vm149, %v4197, 0.0
  %v4242 = vrot.slane %v4241, 4
  %v4243 = vadd.f32 %v4241, %v4242
  %v4244 = vrot.slane %v4243, 2
  %v4245 = vadd.f32 %v4243, %v4244
  %v4246 = vrot.slane %v4245, 1
  %v4247 = vadd.f32 %v4245, %v4246
  %v4248 = vsel %vm149, %v4198, 0.0
  %v4249 = vrot.slane %v4248, 4
  %v4250 = vadd.f32 %v4248, %v4249
  %v4251 = vrot.slane %v4250, 2
  %v4252 = vadd.f32 %v4250, %v4251
  %v4253 = vrot.slane %v4252, 1
  %v4254 = vadd.f32 %v4252, %v4253
  %v4255 = vadd.f32 %v4138, %v4205
  %v4256 = vadd.f32 %v4139, %v4212
  %v4257 = vadd.f32 %v4140, %v4219
  %v4258 = vadd.f32 %v4141, %v4226
  %v4259 = vadd.f32 %v4142, %v4233
  %v4260 = vadd.f32 %v4143, %v4240
  %v4261 = vadd.f32 %v4144, %v4247
  %v4262 = vadd.f32 %v4145, %v4254
  %v4263 = vld [vmem:[%s2006] sm:$0xf]
  %v4264 = vperm.slane %v4263, 0
  %v4265 = vlaneseq
  %v4266 = vshrl.u32 %v4265, 7
  %4268 = vset.pattern.permute.xlu0 %v4266
  %4269 = vperm.xlu0 %4268, %v4264
  %v4270 = vpop.permute.xlu0 %4269
  %v4271 = vperm.slane %v4263, 1
  %v4272 = vlaneseq
  %v4273 = vshrl.u32 %v4272, 7
  %4275 = vset.pattern.permute.xlu0 %v4273
  %4276 = vperm.xlu0 %4275, %v4271
  %v4277 = vpop.permute.xlu0 %4276
  %v4278 = vperm.slane %v4263, 2
  %v4279 = vlaneseq
  %v4280 = vshrl.u32 %v4279, 7
  %4282 = vset.pattern.permute.xlu0 %v4280
  %4283 = vperm.xlu0 %4282, %v4278
  %v4284 = vpop.permute.xlu0 %4283
  %v4285 = vperm.slane %v4263, 3
  %v4286 = vlaneseq
  %v4287 = vshrl.u32 %v4286, 7
  %4289 = vset.pattern.permute.xlu0 %v4287
  %4290 = vperm.xlu0 %4289, %v4285
  %v4291 = vpop.permute.xlu0 %4290
  %v4292 = vmul.f32 %v4270, %v3506
  %v4293 = vmul.f32 %v4270, %v3507
  %v4294 = vmul.f32 %v4277, %v3506
  %v4295 = vmul.f32 %v4277, %v3507
  %v4296 = vmul.f32 %v4284, %v3506
  %v4297 = vmul.f32 %v4284, %v3507
  %v4298 = vmul.f32 %v4291, %v3506
  %v4299 = vmul.f32 %v4291, %v3507
  %v4300 = vsel %vm149, %v4292, 0.0
  %v4301 = vrot.slane %v4300, 4
  %v4302 = vadd.f32 %v4300, %v4301
  %v4303 = vrot.slane %v4302, 2
  %v4304 = vadd.f32 %v4302, %v4303
  %v4305 = vrot.slane %v4304, 1
  %v4306 = vadd.f32 %v4304, %v4305
  %v4307 = vsel %vm149, %v4293, 0.0
  %v4308 = vrot.slane %v4307, 4
  %v4309 = vadd.f32 %v4307, %v4308
  %v4310 = vrot.slane %v4309, 2
  %v4311 = vadd.f32 %v4309, %v4310
  %v4312 = vrot.slane %v4311, 1
  %v4313 = vadd.f32 %v4311, %v4312
  %v4314 = vsel %vm149, %v4294, 0.0
  %v4315 = vrot.slane %v4314, 4
  %v4316 = vadd.f32 %v4314, %v4315
  %v4317 = vrot.slane %v4316, 2
  %v4318 = vadd.f32 %v4316, %v4317
  %v4319 = vrot.slane %v4318, 1
  %v4320 = vadd.f32 %v4318, %v4319
  %v4321 = vsel %vm149, %v4295, 0.0
  %v4322 = vrot.slane %v4321, 4
  %v4323 = vadd.f32 %v4321, %v4322
  %v4324 = vrot.slane %v4323, 2
  %v4325 = vadd.f32 %v4323, %v4324
  %v4326 = vrot.slane %v4325, 1
  %v4327 = vadd.f32 %v4325, %v4326
  %v4328 = vsel %vm149, %v4296, 0.0
  %v4329 = vrot.slane %v4328, 4
  %v4330 = vadd.f32 %v4328, %v4329
  %v4331 = vrot.slane %v4330, 2
  %v4332 = vadd.f32 %v4330, %v4331
  %v4333 = vrot.slane %v4332, 1
  %v4334 = vadd.f32 %v4332, %v4333
  %v4335 = vsel %vm149, %v4297, 0.0
  %v4336 = vrot.slane %v4335, 4
  %v4337 = vadd.f32 %v4335, %v4336
  %v4338 = vrot.slane %v4337, 2
  %v4339 = vadd.f32 %v4337, %v4338
  %v4340 = vrot.slane %v4339, 1
  %v4341 = vadd.f32 %v4339, %v4340
  %v4342 = vsel %vm149, %v4298, 0.0
  %v4343 = vrot.slane %v4342, 4
  %v4344 = vadd.f32 %v4342, %v4343
  %v4345 = vrot.slane %v4344, 2
  %v4346 = vadd.f32 %v4344, %v4345
  %v4347 = vrot.slane %v4346, 1
  %v4348 = vadd.f32 %v4346, %v4347
  %v4349 = vsel %vm149, %v4299, 0.0
  %v4350 = vrot.slane %v4349, 4
  %v4351 = vadd.f32 %v4349, %v4350
  %v4352 = vrot.slane %v4351, 2
  %v4353 = vadd.f32 %v4351, %v4352
  %v4354 = vrot.slane %v4353, 1
  %v4355 = vadd.f32 %v4353, %v4354
  %v4356 = vadd.f32 %v4255, %v4306
  %v4357 = vadd.f32 %v4256, %v4313
  %v4358 = vadd.f32 %v4257, %v4320
  %v4359 = vadd.f32 %v4258, %v4327
  %v4360 = vadd.f32 %v4259, %v4334
  %v4361 = vadd.f32 %v4260, %v4341
  %v4362 = vadd.f32 %v4261, %v4348
  %v4363 = vadd.f32 %v4262, %v4355
  %v4364 = vld [vmem:[%s2108] sm:$0xf]
  %v4365 = vperm.slane %v4364, 0
  %v4366 = vlaneseq
  %v4367 = vshrl.u32 %v4366, 7
  %4369 = vset.pattern.permute.xlu0 %v4367
  %4370 = vperm.xlu0 %4369, %v4365
  %v4371 = vpop.permute.xlu0 %4370
  %v4372 = vperm.slane %v4364, 1
  %v4373 = vlaneseq
  %v4374 = vshrl.u32 %v4373, 7
  %4376 = vset.pattern.permute.xlu0 %v4374
  %4377 = vperm.xlu0 %4376, %v4372
  %v4378 = vpop.permute.xlu0 %4377
  %v4379 = vperm.slane %v4364, 2
  %v4380 = vlaneseq
  %v4381 = vshrl.u32 %v4380, 7
  %4383 = vset.pattern.permute.xlu0 %v4381
  %4384 = vperm.xlu0 %4383, %v4379
  %v4385 = vpop.permute.xlu0 %4384
  %v4386 = vperm.slane %v4364, 3
  %v4387 = vlaneseq
  %v4388 = vshrl.u32 %v4387, 7
  %4390 = vset.pattern.permute.xlu0 %v4388
  %4391 = vperm.xlu0 %4390, %v4386
  %v4392 = vpop.permute.xlu0 %4391
  %v4393 = vmul.f32 %v4371, %v4160
  %v4394 = vmul.f32 %v4371, %v4161
  %v4395 = vmul.f32 %v4378, %v4160
  %v4396 = vmul.f32 %v4378, %v4161
  %v4397 = vmul.f32 %v4385, %v4160
  %v4398 = vmul.f32 %v4385, %v4161
  %v4399 = vmul.f32 %v4392, %v4160
  %v4400 = vmul.f32 %v4392, %v4161
  %v4401 = vsel %vm149, %v4393, 0.0
  %v4402 = vrot.slane %v4401, 4
  %v4403 = vadd.f32 %v4401, %v4402
  %v4404 = vrot.slane %v4403, 2
  %v4405 = vadd.f32 %v4403, %v4404
  %v4406 = vrot.slane %v4405, 1
  %v4407 = vadd.f32 %v4405, %v4406
  %v4408 = vsel %vm149, %v4394, 0.0
  %v4409 = vrot.slane %v4408, 4
  %v4410 = vadd.f32 %v4408, %v4409
  %v4411 = vrot.slane %v4410, 2
  %v4412 = vadd.f32 %v4410, %v4411
  %v4413 = vrot.slane %v4412, 1
  %v4414 = vadd.f32 %v4412, %v4413
  %v4415 = vsel %vm149, %v4395, 0.0
  %v4416 = vrot.slane %v4415, 4
  %v4417 = vadd.f32 %v4415, %v4416
  %v4418 = vrot.slane %v4417, 2
  %v4419 = vadd.f32 %v4417, %v4418
  %v4420 = vrot.slane %v4419, 1
  %v4421 = vadd.f32 %v4419, %v4420
  %v4422 = vsel %vm149, %v4396, 0.0
  %v4423 = vrot.slane %v4422, 4
  %v4424 = vadd.f32 %v4422, %v4423
  %v4425 = vrot.slane %v4424, 2
  %v4426 = vadd.f32 %v4424, %v4425
  %v4427 = vrot.slane %v4426, 1
  %v4428 = vadd.f32 %v4426, %v4427
  %v4429 = vsel %vm149, %v4397, 0.0
  %v4430 = vrot.slane %v4429, 4
  %v4431 = vadd.f32 %v4429, %v4430
  %v4432 = vrot.slane %v4431, 2
  %v4433 = vadd.f32 %v4431, %v4432
  %v4434 = vrot.slane %v4433, 1
  %v4435 = vadd.f32 %v4433, %v4434
  %v4436 = vsel %vm149, %v4398, 0.0
  %v4437 = vrot.slane %v4436, 4
  %v4438 = vadd.f32 %v4436, %v4437
  %v4439 = vrot.slane %v4438, 2
  %v4440 = vadd.f32 %v4438, %v4439
  %v4441 = vrot.slane %v4440, 1
  %v4442 = vadd.f32 %v4440, %v4441
  %v4443 = vsel %vm149, %v4399, 0.0
  %v4444 = vrot.slane %v4443, 4
  %v4445 = vadd.f32 %v4443, %v4444
  %v4446 = vrot.slane %v4445, 2
  %v4447 = vadd.f32 %v4445, %v4446
  %v4448 = vrot.slane %v4447, 1
  %v4449 = vadd.f32 %v4447, %v4448
  %v4450 = vsel %vm149, %v4400, 0.0
  %v4451 = vrot.slane %v4450, 4
  %v4452 = vadd.f32 %v4450, %v4451
  %v4453 = vrot.slane %v4452, 2
  %v4454 = vadd.f32 %v4452, %v4453
  %v4455 = vrot.slane %v4454, 1
  %v4456 = vadd.f32 %v4454, %v4455
  %v4457 = vadd.f32 %v4356, %v4407
  %v4458 = vadd.f32 %v4357, %v4414
  %v4459 = vadd.f32 %v4358, %v4421
  %v4460 = vadd.f32 %v4359, %v4428
  %v4461 = vadd.f32 %v4360, %v4435
  %v4462 = vadd.f32 %v4361, %v4442
  %v4463 = vadd.f32 %v4362, %v4449
  %v4464 = vadd.f32 %v4363, %v4456
  %v4473 = vsel %vm1103, %v4459, %v4457
  %v4474 = vsel %vm1105, %v4461, %v4473
  %v4475 = vsel %vm1107, %v4463, %v4474
  %v4476 = vsel %vm1103, %v4460, %v4458
  %v4477 = vsel %vm1105, %v4462, %v4476
  %v4478 = vsel %vm1107, %v4464, %v4477
  %v4481 = vsel %vm149, %v4475, 0.0
  %v4482 = vsel %vm149, %v4478, 0.0
  %v4483 = vadd.f32 %v4481, %v4482
  %4484 = vadd.xlane.f32.xlu0 %v4483
  %v4485 = vpop.xlane.xlu0 %4484
  %v4486 = vmul.f32 %v4485, 0.00390625
  %v4488 = vrot.slane %v4486, 1
  %v4489 = vrot.slane %v4486, 2
  %v4490 = vrot.slane %v4486, 3
  %v4495 = vsub.f32 %v4457, %v4486
  %v4496 = vsub.f32 %v4458, %v4486
  %v4497 = vsub.f32 %v4459, %v4488
  %v4498 = vsub.f32 %v4460, %v4488
  %v4499 = vsub.f32 %v4461, %v4489
  %v4500 = vsub.f32 %v4462, %v4489
  %v4501 = vsub.f32 %v4463, %v4490
  %v4502 = vsub.f32 %v4464, %v4490
  %v4503 = vmul.f32 %v4495, %v4495
  %v4504 = vmul.f32 %v4496, %v4496
  %v4505 = vmul.f32 %v4497, %v4497
  %v4506 = vmul.f32 %v4498, %v4498
  %v4507 = vmul.f32 %v4499, %v4499
  %v4508 = vmul.f32 %v4500, %v4500
  %v4509 = vmul.f32 %v4501, %v4501
  %v4510 = vmul.f32 %v4502, %v4502
  %v4519 = vrot.slane %v4505, 7
  %v4520 = vsel %vm1103, %v4519, %v4503
  %v4521 = vrot.slane %v4507, 6
  %v4522 = vsel %vm1105, %v4521, %v4520
  %v4523 = vrot.slane %v4509, 5
  %v4524 = vsel %vm1107, %v4523, %v4522
  %v4525 = vrot.slane %v4506, 7
  %v4526 = vsel %vm1103, %v4525, %v4504
  %v4527 = vrot.slane %v4508, 6
  %v4528 = vsel %vm1105, %v4527, %v4526
  %v4529 = vrot.slane %v4510, 5
  %v4530 = vsel %vm1107, %v4529, %v4528
  %v4533 = vsel %vm149, %v4524, 0.0
  %v4534 = vsel %vm149, %v4530, 0.0
  %v4535 = vadd.f32 %v4533, %v4534
  %4536 = vadd.xlane.f32.xlu0 %v4535
  %v4537 = vpop.xlane.xlu0 %4536
  %v4538 = vmul.f32 %v4537, 0.00390625
  %v4539 = vadd.f32 %v4538, 1e-05
  %v4540 = vrsqrt.pop %v4539
  %v4541 = vmul.f32 %v4540, %v4539
  %v4542 = vmul.f32 %v4541, %v4540
  %v4543 = vmul.f32 0.5, %v4542
  %v4544 = vsub.f32 1.5, %v4543
  %v4545 = vmul.f32 %v4540, %v4544
  %vm4546 = vweird.f32 %v4539
  %vm4547 = vweird.f32 %v4540
  %vm4548 = vmor %vm4546, %vm4547
  %v4549 = vsel %vm4548, %v4540, %v4545
  %v4551 = vrot.slane %v4549, 1
  %v4552 = vrot.slane %v4549, 2
  %v4553 = vrot.slane %v4549, 3
  %v4558 = vmul.f32 %v4495, %v4549
  %v4559 = vmul.f32 %v4496, %v4549
  %v4560 = vmul.f32 %v4497, %v4551
  %v4561 = vmul.f32 %v4498, %v4551
  %v4562 = vmul.f32 %v4499, %v4552
  %v4563 = vmul.f32 %v4500, %v4552
  %v4564 = vmul.f32 %v4501, %v4553
  %v4565 = vmul.f32 %v4502, %v4553
  %v4574 = vrot.slane %v4559, 4
  %v4575 = vrot.slane %v4561, 4
  %v4576 = vrot.slane %v4563, 4
  %v4577 = vrot.slane %v4565, 4
  %v4578 = vsel %vm149, %v4558, %v4574
  %v4579 = vsel %vm149, %v4560, %v4575
  %v4580 = vsel %vm149, %v4562, %v4576
  %v4581 = vsel %vm149, %v4564, %v4577
  %v4582 = vrot.slane %v4579, 7
  %v4583 = vsel %vm1103, %v4582, %v4578
  %v4584 = vsel %vm2329, %v4582, %v4583
  %v4585 = vrot.slane %v4580, 6
  %v4586 = vsel %vm1105, %v4585, %v4584
  %v4587 = vsel %vm2333, %v4585, %v4586
  %v4588 = vrot.slane %v4581, 5
  %v4589 = vsel %vm1107, %v4588, %v4587
  %v4590 = vsel %vm2337, %v4588, %v4589
  %v4592 = vadd.f32 %v2343, %v4590
  %s4593 = scalar_lea.vmem %s3, 8
  %4594 = vst [vmem:[%s4593] sm:$0xff] %v4592
  // Predicated region
  $region14: #{residual_block.1} parent=0 // pred_check
    _
  $region15: #{residual_block.1} parent=0 // pred_check_branch
    %4596 = sbr.rel (0) target = $region17
  $region16: #{residual_block.1} parent=0 // pred_region
    _
  $region17: #{residual_block.1} parent=0 // pred_fallthru
    _
  // Predicated region
  $region18: #{residual_block.1} parent=0 // pred_check
    _
  $region19: #{residual_block.1} parent=0 // pred_check_branch
    %4598 = sbr.rel (0) target = $region21
  $region20: #{residual_block.1} parent=0 // pred_region
    _
  $region21: #{residual_block.1} parent=0 // pred_fallthru
    _

</llo_original>
